<compile_context>
chip_gen: v7x
topology: tpu7x:2x2x1
jax: 0.10.0
libtpu: 0.0.40
codegen_flags: <defaults>
</compile_context>

<pallas_src>
import functools

import jax
import jax.numpy as jnp
from jax.experimental import pallas as pl
from jax.experimental.pallas import tpu as pltpu


# -----------------------------------------------------------------------------
# Slab layouts (shared by the host-side packer and the kernel; all static).
# -----------------------------------------------------------------------------

_BIAS_NAMES = ("bqkv", "bo", "ln1w", "ln1b", "b1", "b2", "ln2w", "ln2b")


def _wslab_offsets(din, h, ff, n_layers):
    """Row offsets of every weight matrix inside the (rows, 3H) weight slab."""
    offs = {"w_emb": 0}
    r = din
    for li in range(n_layers):
        offs[f"wqkv{li}"] = r; r += h
        offs[f"wo{li}"] = r;   r += h
        offs[f"w1{li}"] = r;   r += h
        offs[f"w2{li}"] = r;   r += ff
    return offs, r


def _bslab_offsets(seq, n_layers):
    """Row offsets of pos-emb rows and every bias/LN row inside the (rows, 3H) slab."""
    offs = {"pos": 0}
    r = seq
    for li in range(n_layers):
        for nm in _BIAS_NAMES:
            offs[f"{nm}{li}"] = r
            r += 1
    return offs, r


# -----------------------------------------------------------------------------
# Kernel
# -----------------------------------------------------------------------------

def _layer_norm(x, w, b, eps=1e-5):
    # two-pass variance (matches PyTorch LayerNorm numerics better than E[x^2]-E[x]^2)
    m = jnp.mean(x, axis=-1, keepdims=True)
    d = x - m
    var = jnp.mean(d * d, axis=-1, keepdims=True)
    return d * jax.lax.rsqrt(var + eps) * w + b


def feature_extractor_kernel(x_ref, w_ref, b_ref, o_ref, ctx_ref, *,
                             batch, seq, input_dim, hidden, ff_dim,
                             num_heads, num_layers):
    B, S, Din, H, FF = batch, seq, input_dim, hidden, ff_dim
    hd = H // num_heads

    woffs, _ = _wslab_offsets(Din, H, FF, num_layers)
    boffs, _ = _bslab_offsets(S, num_layers)

    def wmat(name, nrows, ncols):
        return w_ref[pl.ds(woffs[name], nrows), pl.ds(0, ncols)]

    def brow(name, ncols):
        return b_ref[pl.ds(boffs[name], 1), pl.ds(0, ncols)]       # (1, ncols)

    # ---- embedding: (B*S, Din) @ (Din, H) then add (pos + b_emb) -------------
    x = jnp.dot(x_ref[...], wmat("w_emb", Din, H),
                preferred_element_type=jnp.float32)
    pos = b_ref[pl.ds(0, S), pl.ds(0, H)]                           # (S, H)
    x = (x.reshape(B, S, H) + pos).reshape(B * S, H)

    # ---- transformer encoder layers (post-norm, ReLU FFN) --------------------
    # TODO(synk): dropout layers are identity (eval-mode semantics).
    for li in range(num_layers):
        # fused QKV projection; 1/sqrt(hd) already folded into the Q columns.
        qkv = jnp.dot(x, wmat(f"wqkv{li}", H, 3 * H),
                      preferred_element_type=jnp.float32) + brow(f"bqkv{li}", 3 * H)
        q = qkv[:, 0:H].reshape(B, S, H)
        k = qkv[:, H:2 * H].reshape(B, S, H)
        v = qkv[:, 2 * H:3 * H].reshape(B, S, H)

        # per-head attention batched over B; each head's context goes to a
        # static column window of the VMEM scratch (no lane-insert concat).
        for hi in range(num_heads):
            c0 = hi * hd
            s = jnp.einsum('bsd,btd->bst', q[:, :, c0:c0 + hd], k[:, :, c0:c0 + hd],
                           preferred_element_type=jnp.float32)      # (B, S, S)
            s = s - jnp.max(s, axis=-1, keepdims=True)
            p = jnp.exp(s)
            p = p * pl.reciprocal(jnp.sum(p, axis=-1, keepdims=True), approx=True)
            ctx_h = jnp.einsum('bst,btd->bsd', p, v[:, :, c0:c0 + hd],
                               preferred_element_type=jnp.float32)  # (B, S, hd)
            ctx_ref[:, pl.ds(c0, hd)] = ctx_h.reshape(B * S, hd)

        attn = jnp.dot(ctx_ref[...], wmat(f"wo{li}", H, H),
                       preferred_element_type=jnp.float32) + brow(f"bo{li}", H)
        x = _layer_norm(x + attn, brow(f"ln1w{li}", H), brow(f"ln1b{li}", H))

        ffh = jnp.dot(x, wmat(f"w1{li}", H, FF),
                      preferred_element_type=jnp.float32) + brow(f"b1{li}", FF)
        ffh = jnp.maximum(ffh, 0.0)
        ff = jnp.dot(ffh, wmat(f"w2{li}", FF, H),
                     preferred_element_type=jnp.float32) + brow(f"b2{li}", H)
        x = _layer_norm(x + ff, brow(f"ln2w{li}", H), brow(f"ln2b{li}", H))

    # ---- only the last token per sequence is needed: static row reads/stores -
    for bi in range(B):
        r = bi * S + S - 1
        o_ref[pl.ds(bi, 1), :] = x[r:r + 1, :].astype(o_ref.dtype)


# -----------------------------------------------------------------------------
# Host-side packing (done once, outside the hot path) and wrapper
# -----------------------------------------------------------------------------

def pack_params(params, seq, num_heads):
    """Pack all weights into two slabs: weight-matrix slab and row-vector slab."""
    din, h = params["w_emb"].shape
    ff = params["layers"][0]["w1"].shape[1]
    nl = len(params["layers"])
    assert ff <= 3 * h and h % num_heads == 0
    hd = h // num_heads
    scale = 1.0 / float(hd) ** 0.5

    woffs, wrows = _wslab_offsets(din, h, ff, nl)
    boffs, brows = _bslab_offsets(seq, nl)
    wslab = jnp.zeros((wrows, 3 * h), jnp.float32)
    bslab = jnp.zeros((brows, 3 * h), jnp.float32)

    wslab = wslab.at[0:din, 0:h].set(params["w_emb"])
    # fold the embedding bias into the positional rows
    bslab = bslab.at[0:seq, 0:h].set(params["pos_emb"][:seq] + params["b_emb"])

    for li, lp in enumerate(params["layers"]):
        # fold the 1/sqrt(head_dim) attention scale into the Q block
        wqkv = lp["wqkv"].at[:, 0:h].multiply(scale)
        bqkv = lp["bqkv"].at[:, 0:h].multiply(scale)

        r = woffs[f"wqkv{li}"]; wslab = wslab.at[r:r + h, 0:3 * h].set(wqkv)
        r = woffs[f"wo{li}"];   wslab = wslab.at[r:r + h, 0:h].set(lp["wo"])
        r = woffs[f"w1{li}"];   wslab = wslab.at[r:r + h, 0:ff].set(lp["w1"])
        r = woffs[f"w2{li}"];   wslab = wslab.at[r:r + ff, 0:h].set(lp["w2"])

        rowvals = {"bqkv": (bqkv, 3 * h), "bo": (lp["bo"], h),
                   "ln1w": (lp["ln1w"], h), "ln1b": (lp["ln1b"], h),
                   "b1": (lp["b1"], ff), "b2": (lp["b2"], h),
                   "ln2w": (lp["ln2w"], h), "ln2b": (lp["ln2b"], h)}
        for nm in _BIAS_NAMES:
            val, width = rowvals[nm]
            r = boffs[f"{nm}{li}"]
            bslab = bslab.at[r:r + 1, 0:width].set(val.reshape(1, width))

    return {"wslab": wslab, "bslab": bslab, "input_dim": din, "hidden": h,
            "ff": ff, "num_layers": nl, "seq": seq}


def feature_extractor(x, packed, num_heads):
    B, S, Din = x.shape
    assert S == packed["seq"] and Din == packed["input_dim"]
    H = packed["hidden"]

    kernel = functools.partial(
        feature_extractor_kernel, batch=B, seq=S, input_dim=Din, hidden=H,
        ff_dim=packed["ff"], num_heads=num_heads, num_layers=packed["num_layers"])

    # Whole problem (2 slabs + activations) is tens of KiB -> single launch,
    # no grid; every operand is a full-array VMEM block by default.
    return pl.pallas_call(
        kernel,
        out_shape=jax.ShapeDtypeStruct((B, H), jnp.float32),
        scratch_shapes=[pltpu.VMEM((B * S, H), jnp.float32)],
    )(x.reshape(B * S, Din), packed["wslab"], packed["bslab"])


# ------------------------------- params --------------------------------------

def init_params(key, input_dim, hidden_dim, num_layers, ff_dim, max_pos=179):
    def nrm(k, shape, scale=0.02):
        return (scale * jax.random.normal(k, shape)).astype(jnp.float32)

    keys = jax.random.split(key, 2 + num_layers)
    params = {
        "w_emb": nrm(keys[0], (input_dim, hidden_dim)),       # x @ W orientation
        "b_emb": jnp.zeros((1, hidden_dim), jnp.float32),
        "pos_emb": nrm(keys[1], (max_pos, hidden_dim)),
        "layers": [],
    }
    for li in range(num_layers):
        lk = jax.random.split(keys[2 + li], 4)
        params["layers"].append({
            "wqkv": nrm(lk[0], (hidden_dim, 3 * hidden_dim)),  # fused [Q|K|V]
            "bqkv": jnp.zeros((1, 3 * hidden_dim), jnp.float32),
            "wo": nrm(lk[1], (hidden_dim, hidden_dim)),
            "bo": jnp.zeros((1, hidden_dim), jnp.float32),
            "ln1w": jnp.ones((1, hidden_dim), jnp.float32),
            "ln1b": jnp.zeros((1, hidden_dim), jnp.float32),
            "w1": nrm(lk[2], (hidden_dim, ff_dim)),
            "b1": jnp.zeros((1, ff_dim), jnp.float32),
            "w2": nrm(lk[3], (ff_dim, hidden_dim)),
            "b2": jnp.zeros((1, hidden_dim), jnp.float32),
            "ln2w": jnp.ones((1, hidden_dim), jnp.float32),
            "ln2b": jnp.zeros((1, hidden_dim), jnp.float32),
        })
    return params


# ------------------------------- main -----------------------------------------

if __name__ == "__main__":
    B, S, INPUT_DIM = 2, 8, 16
    HIDDEN, HEADS, LAYERS = 32, 4, 2
    FF_DIM = HIDDEN          # TransformerEncoderLayer(hidden, heads, hidden, ...)

    key = jax.random.PRNGKey(0)
    kx, kp = jax.random.split(key)
    x = jax.random.normal(kx, (B, S, INPUT_DIM), dtype=jnp.float32)
    params = init_params(kp, INPUT_DIM, HIDDEN, LAYERS, FF_DIM)
    packed = pack_params(params, seq=S, num_heads=HEADS)   # one-time host packing

    out = feature_extractor(x, packed, HEADS)
    out = jax.block_until_ready(out)
    assert out.shape == (B, HIDDEN), out.shape
    assert jnp.all(jnp.isfinite(out))
    print("KERNEL_OK")
</pallas_src>

<mosaic_0001>
module attributes {stable_mosaic.version = 11 : i64} {
  func.func @feature_extractor_kernel(%arg0: memref<16x16xf32, #tpu.memory_space<vmem>>, %arg1: memref<272x96xf32, #tpu.memory_space<vmem>>, %arg2: memref<24x96xf32, #tpu.memory_space<vmem>>, %arg3: memref<2x32xf32, #tpu.memory_space<vmem>>, %arg4: memref<16x32xf32, #tpu.memory_space<vmem>>) attributes {dimension_semantics = [], scalar_prefetch = 0 : i64, scratch_operands = 1 : i64, tpu.core_type = #tpu.core_type<tc>} {
    %c0 = arith.constant 0 : index
    %c0_0 = arith.constant 0 : index
    %0 = vector.load %arg0[%c0, %c0_0] : memref<16x16xf32, #tpu.memory_space<vmem>>, vector<16x16xf32>
    %c0_1 = arith.constant 0 : index
    %c0_2 = arith.constant 0 : index
    %1 = vector.load %arg1[%c0_1, %c0_2] : memref<272x96xf32, #tpu.memory_space<vmem>>, vector<16x32xf32>
    %cst = arith.constant dense<0.000000e+00> : vector<16x32xf32>
    %2 = tpu.matmul %0, %1, %cst {dimension_numbers = #tpu.dot_dimension_numbers<[1], [0], [0], [1], [0, 0, 1, 1], [], []>} : vector<16x16xf32>, vector<16x32xf32>, vector<16x32xf32> -> vector<16x32xf32>
    %c0_3 = arith.constant 0 : index
    %c0_4 = arith.constant 0 : index
    %3 = vector.load %arg2[%c0_3, %c0_4] : memref<24x96xf32, #tpu.memory_space<vmem>>, vector<8x32xf32>
    %4 = vector.shape_cast %2 : vector<16x32xf32> to vector<2x8x32xf32>
    %5 = vector.shape_cast %3 : vector<8x32xf32> to vector<1x8x32xf32>
    %6 = vector.broadcast %5 : vector<1x8x32xf32> to vector<2x8x32xf32>
    %7 = arith.addf %4, %6 : vector<2x8x32xf32>
    %8 = vector.shape_cast %7 : vector<2x8x32xf32> to vector<16x32xf32>
    %c16 = arith.constant 16 : index
    %c0_5 = arith.constant 0 : index
    %9 = vector.load %arg1[%c16, %c0_5] : memref<272x96xf32, #tpu.memory_space<vmem>>, vector<32x96xf32>
    %cst_6 = arith.constant dense<0.000000e+00> : vector<16x96xf32>
    %10 = tpu.matmul %8, %9, %cst_6 {dimension_numbers = #tpu.dot_dimension_numbers<[1], [0], [0], [1], [0, 0, 1, 1], [], []>} : vector<16x32xf32>, vector<32x96xf32>, vector<16x96xf32> -> vector<16x96xf32>
    %c8 = arith.constant 8 : index
    %c0_7 = arith.constant 0 : index
    %11 = vector.load %arg2[%c8, %c0_7] : memref<24x96xf32, #tpu.memory_space<vmem>>, vector<1x96xf32>
    %12 = vector.broadcast %11 : vector<1x96xf32> to vector<16x96xf32>
    %13 = arith.addf %10, %12 : vector<16x96xf32>
    %14 = vector.extract_strided_slice %13 {offsets = [0, 0], sizes = [16, 32], strides = [1, 1]} : vector<16x96xf32> to vector<16x32xf32>
    %15 = vector.shape_cast %14 : vector<16x32xf32> to vector<2x8x32xf32>
    %16 = vector.extract_strided_slice %13 {offsets = [0, 32], sizes = [16, 32], strides = [1, 1]} : vector<16x96xf32> to vector<16x32xf32>
    %17 = vector.shape_cast %16 : vector<16x32xf32> to vector<2x8x32xf32>
    %18 = vector.extract_strided_slice %13 {offsets = [0, 64], sizes = [16, 32], strides = [1, 1]} : vector<16x96xf32> to vector<16x32xf32>
    %19 = vector.shape_cast %18 : vector<16x32xf32> to vector<2x8x32xf32>
    %20 = vector.extract_strided_slice %15 {offsets = [0, 0, 0], sizes = [2, 8, 8], strides = [1, 1, 1]} : vector<2x8x32xf32> to vector<2x8x8xf32>
    %21 = vector.extract_strided_slice %17 {offsets = [0, 0, 0], sizes = [2, 8, 8], strides = [1, 1, 1]} : vector<2x8x32xf32> to vector<2x8x8xf32>
    "tpu.trace_start"() <{level = 10 : i32, message = "bsd,btd->bst"}> : () -> ()
    %cst_8 = arith.constant dense<0.000000e+00> : vector<2x8x8xf32>
    %22 = tpu.matmul %20, %21, %cst_8 {dimension_numbers = #tpu.dot_dimension_numbers<[2], [2], [1], [1], [0, 0, 0, 1, 1, 1], [0], [0]>} : vector<2x8x8xf32>, vector<2x8x8xf32>, vector<2x8x8xf32> -> vector<2x8x8xf32>
    "tpu.trace_stop"() : () -> ()
    %cst_9 = arith.constant dense<0xFF800000> : vector<2x8xf32>
    %23 = vector.multi_reduction <maximumf>, %22, %cst_9 [2] : vector<2x8x8xf32> to vector<2x8xf32>
    %24 = vector.shape_cast %23 : vector<2x8xf32> to vector<2x8x1xf32>
    %25 = vector.broadcast %24 : vector<2x8x1xf32> to vector<2x8x8xf32>
    %26 = arith.subf %22, %25 : vector<2x8x8xf32>
    %27 = math.exp %26 : vector<2x8x8xf32>
    %cst_10 = arith.constant dense<0.000000e+00> : vector<2x8xf32>
    %28 = vector.multi_reduction <add>, %27, %cst_10 [2] : vector<2x8x8xf32> to vector<2x8xf32>
    %29 = vector.shape_cast %28 : vector<2x8xf32> to vector<2x8x1xf32>
    %30 = tpu.reciprocal %29 {approx = true} : vector<2x8x1xf32> -> vector<2x8x1xf32>
    %31 = vector.broadcast %30 : vector<2x8x1xf32> to vector<2x8x8xf32>
    %32 = arith.mulf %27, %31 : vector<2x8x8xf32>
    %33 = vector.extract_strided_slice %19 {offsets = [0, 0, 0], sizes = [2, 8, 8], strides = [1, 1, 1]} : vector<2x8x32xf32> to vector<2x8x8xf32>
    "tpu.trace_start"() <{level = 10 : i32, message = "bst,btd->bsd"}> : () -> ()
    %cst_11 = arith.constant dense<0.000000e+00> : vector<2x8x8xf32>
    %34 = tpu.matmul %32, %33, %cst_11 {dimension_numbers = #tpu.dot_dimension_numbers<[2], [1], [1], [2], [0, 0, 0, 1, 1, 2], [0], [0]>} : vector<2x8x8xf32>, vector<2x8x8xf32>, vector<2x8x8xf32> -> vector<2x8x8xf32>
    "tpu.trace_stop"() : () -> ()
    %35 = vector.shape_cast %34 : vector<2x8x8xf32> to vector<16x8xf32>
    %c0_12 = arith.constant 0 : index
    %c0_13 = arith.constant 0 : index
    %36 = vector.load %arg4[%c0_12, %c0_13] : memref<16x32xf32, #tpu.memory_space<vmem>>, vector<16x8xf32>
    tpu.vector_store %arg4[%c0_12, %c0_13], %35 {strides = array<i32>} : memref<16x32xf32, #tpu.memory_space<vmem>>, vector<16x8xf32>,
    %37 = vector.extract_strided_slice %15 {offsets = [0, 0, 8], sizes = [2, 8, 8], strides = [1, 1, 1]} : vector<2x8x32xf32> to vector<2x8x8xf32>
    %38 = vector.extract_strided_slice %17 {offsets = [0, 0, 8], sizes = [2, 8, 8], strides = [1, 1, 1]} : vector<2x8x32xf32> to vector<2x8x8xf32>
    "tpu.trace_start"() <{level = 10 : i32, message = "bsd,btd->bst"}> : () -> ()
    %cst_14 = arith.constant dense<0.000000e+00> : vector<2x8x8xf32>
    %39 = tpu.matmul %37, %38, %cst_14 {dimension_numbers = #tpu.dot_dimension_numbers<[2], [2], [1], [1], [0, 0, 0, 1, 1, 1], [0], [0]>} : vector<2x8x8xf32>, vector<2x8x8xf32>, vector<2x8x8xf32> -> vector<2x8x8xf32>
    "tpu.trace_stop"() : () -> ()
    %cst_15 = arith.constant dense<0xFF800000> : vector<2x8xf32>
    %40 = vector.multi_reduction <maximumf>, %39, %cst_15 [2] : vector<2x8x8xf32> to vector<2x8xf32>
    %41 = vector.shape_cast %40 : vector<2x8xf32> to vector<2x8x1xf32>
    %42 = vector.broadcast %41 : vector<2x8x1xf32> to vector<2x8x8xf32>
    %43 = arith.subf %39, %42 : vector<2x8x8xf32>
    %44 = math.exp %43 : vector<2x8x8xf32>
    %cst_16 = arith.constant dense<0.000000e+00> : vector<2x8xf32>
    %45 = vector.multi_reduction <add>, %44, %cst_16 [2] : vector<2x8x8xf32> to vector<2x8xf32>
    %46 = vector.shape_cast %45 : vector<2x8xf32> to vector<2x8x1xf32>
    %47 = tpu.reciprocal %46 {approx = true} : vector<2x8x1xf32> -> vector<2x8x1xf32>
    %48 = vector.broadcast %47 : vector<2x8x1xf32> to vector<2x8x8xf32>
    %49 = arith.mulf %44, %48 : vector<2x8x8xf32>
    %50 = vector.extract_strided_slice %19 {offsets = [0, 0, 8], sizes = [2, 8, 8], strides = [1, 1, 1]} : vector<2x8x32xf32> to vector<2x8x8xf32>
    "tpu.trace_start"() <{level = 10 : i32, message = "bst,btd->bsd"}> : () -> ()
    %cst_17 = arith.constant dense<0.000000e+00> : vector<2x8x8xf32>
    %51 = tpu.matmul %49, %50, %cst_17 {dimension_numbers = #tpu.dot_dimension_numbers<[2], [1], [1], [2], [0, 0, 0, 1, 1, 2], [0], [0]>} : vector<2x8x8xf32>, vector<2x8x8xf32>, vector<2x8x8xf32> -> vector<2x8x8xf32>
    "tpu.trace_stop"() : () -> ()
    %52 = vector.shape_cast %51 : vector<2x8x8xf32> to vector<16x8xf32>
    %c0_18 = arith.constant 0 : index
    %c8_19 = arith.constant 8 : index
    %53 = vector.load %arg4[%c0_18, %c8_19] : memref<16x32xf32, #tpu.memory_space<vmem>>, vector<16x8xf32>
    tpu.vector_store %arg4[%c0_18, %c8_19], %52 {strides = array<i32>} : memref<16x32xf32, #tpu.memory_space<vmem>>, vector<16x8xf32>,
    %54 = vector.extract_strided_slice %15 {offsets = [0, 0, 16], sizes = [2, 8, 8], strides = [1, 1, 1]} : vector<2x8x32xf32> to vector<2x8x8xf32>
    %55 = vector.extract_strided_slice %17 {offsets = [0, 0, 16], sizes = [2, 8, 8], strides = [1, 1, 1]} : vector<2x8x32xf32> to vector<2x8x8xf32>
    "tpu.trace_start"() <{level = 10 : i32, message = "bsd,btd->bst"}> : () -> ()
    %cst_20 = arith.constant dense<0.000000e+00> : vector<2x8x8xf32>
    %56 = tpu.matmul %54, %55, %cst_20 {dimension_numbers = #tpu.dot_dimension_numbers<[2], [2], [1], [1], [0, 0, 0, 1, 1, 1], [0], [0]>} : vector<2x8x8xf32>, vector<2x8x8xf32>, vector<2x8x8xf32> -> vector<2x8x8xf32>
    "tpu.trace_stop"() : () -> ()
    %cst_21 = arith.constant dense<0xFF800000> : vector<2x8xf32>
    %57 = vector.multi_reduction <maximumf>, %56, %cst_21 [2] : vector<2x8x8xf32> to vector<2x8xf32>
    %58 = vector.shape_cast %57 : vector<2x8xf32> to vector<2x8x1xf32>
    %59 = vector.broadcast %58 : vector<2x8x1xf32> to vector<2x8x8xf32>
    %60 = arith.subf %56, %59 : vector<2x8x8xf32>
    %61 = math.exp %60 : vector<2x8x8xf32>
    %cst_22 = arith.constant dense<0.000000e+00> : vector<2x8xf32>
    %62 = vector.multi_reduction <add>, %61, %cst_22 [2] : vector<2x8x8xf32> to vector<2x8xf32>
    %63 = vector.shape_cast %62 : vector<2x8xf32> to vector<2x8x1xf32>
    %64 = tpu.reciprocal %63 {approx = true} : vector<2x8x1xf32> -> vector<2x8x1xf32>
    %65 = vector.broadcast %64 : vector<2x8x1xf32> to vector<2x8x8xf32>
    %66 = arith.mulf %61, %65 : vector<2x8x8xf32>
    %67 = vector.extract_strided_slice %19 {offsets = [0, 0, 16], sizes = [2, 8, 8], strides = [1, 1, 1]} : vector<2x8x32xf32> to vector<2x8x8xf32>
    "tpu.trace_start"() <{level = 10 : i32, message = "bst,btd->bsd"}> : () -> ()
    %cst_23 = arith.constant dense<0.000000e+00> : vector<2x8x8xf32>
    %68 = tpu.matmul %66, %67, %cst_23 {dimension_numbers = #tpu.dot_dimension_numbers<[2], [1], [1], [2], [0, 0, 0, 1, 1, 2], [0], [0]>} : vector<2x8x8xf32>, vector<2x8x8xf32>, vector<2x8x8xf32> -> vector<2x8x8xf32>
    "tpu.trace_stop"() : () -> ()
    %69 = vector.shape_cast %68 : vector<2x8x8xf32> to vector<16x8xf32>
    %c0_24 = arith.constant 0 : index
    %c16_25 = arith.constant 16 : index
    %70 = vector.load %arg4[%c0_24, %c16_25] : memref<16x32xf32, #tpu.memory_space<vmem>>, vector<16x8xf32>
    tpu.vector_store %arg4[%c0_24, %c16_25], %69 {strides = array<i32>} : memref<16x32xf32, #tpu.memory_space<vmem>>, vector<16x8xf32>,
    %71 = vector.extract_strided_slice %15 {offsets = [0, 0, 24], sizes = [2, 8, 8], strides = [1, 1, 1]} : vector<2x8x32xf32> to vector<2x8x8xf32>
    %72 = vector.extract_strided_slice %17 {offsets = [0, 0, 24], sizes = [2, 8, 8], strides = [1, 1, 1]} : vector<2x8x32xf32> to vector<2x8x8xf32>
    "tpu.trace_start"() <{level = 10 : i32, message = "bsd,btd->bst"}> : () -> ()
    %cst_26 = arith.constant dense<0.000000e+00> : vector<2x8x8xf32>
    %73 = tpu.matmul %71, %72, %cst_26 {dimension_numbers = #tpu.dot_dimension_numbers<[2], [2], [1], [1], [0, 0, 0, 1, 1, 1], [0], [0]>} : vector<2x8x8xf32>, vector<2x8x8xf32>, vector<2x8x8xf32> -> vector<2x8x8xf32>
    "tpu.trace_stop"() : () -> ()
    %cst_27 = arith.constant dense<0xFF800000> : vector<2x8xf32>
    %74 = vector.multi_reduction <maximumf>, %73, %cst_27 [2] : vector<2x8x8xf32> to vector<2x8xf32>
    %75 = vector.shape_cast %74 : vector<2x8xf32> to vector<2x8x1xf32>
    %76 = vector.broadcast %75 : vector<2x8x1xf32> to vector<2x8x8xf32>
    %77 = arith.subf %73, %76 : vector<2x8x8xf32>
    %78 = math.exp %77 : vector<2x8x8xf32>
    %cst_28 = arith.constant dense<0.000000e+00> : vector<2x8xf32>
    %79 = vector.multi_reduction <add>, %78, %cst_28 [2] : vector<2x8x8xf32> to vector<2x8xf32>
    %80 = vector.shape_cast %79 : vector<2x8xf32> to vector<2x8x1xf32>
    %81 = tpu.reciprocal %80 {approx = true} : vector<2x8x1xf32> -> vector<2x8x1xf32>
    %82 = vector.broadcast %81 : vector<2x8x1xf32> to vector<2x8x8xf32>
    %83 = arith.mulf %78, %82 : vector<2x8x8xf32>
    %84 = vector.extract_strided_slice %19 {offsets = [0, 0, 24], sizes = [2, 8, 8], strides = [1, 1, 1]} : vector<2x8x32xf32> to vector<2x8x8xf32>
    "tpu.trace_start"() <{level = 10 : i32, message = "bst,btd->bsd"}> : () -> ()
    %cst_29 = arith.constant dense<0.000000e+00> : vector<2x8x8xf32>
    %85 = tpu.matmul %83, %84, %cst_29 {dimension_numbers = #tpu.dot_dimension_numbers<[2], [1], [1], [2], [0, 0, 0, 1, 1, 2], [0], [0]>} : vector<2x8x8xf32>, vector<2x8x8xf32>, vector<2x8x8xf32> -> vector<2x8x8xf32>
    "tpu.trace_stop"() : () -> ()
    %86 = vector.shape_cast %85 : vector<2x8x8xf32> to vector<16x8xf32>
    %c0_30 = arith.constant 0 : index
    %c24 = arith.constant 24 : index
    %87 = vector.load %arg4[%c0_30, %c24] : memref<16x32xf32, #tpu.memory_space<vmem>>, vector<16x8xf32>
    tpu.vector_store %arg4[%c0_30, %c24], %86 {strides = array<i32>} : memref<16x32xf32, #tpu.memory_space<vmem>>, vector<16x8xf32>,
    %c0_31 = arith.constant 0 : index
    %c0_32 = arith.constant 0 : index
    %88 = vector.load %arg4[%c0_31, %c0_32] : memref<16x32xf32, #tpu.memory_space<vmem>>, vector<16x32xf32>
    %c48 = arith.constant 48 : index
    %c0_33 = arith.constant 0 : index
    %89 = vector.load %arg1[%c48, %c0_33] : memref<272x96xf32, #tpu.memory_space<vmem>>, vector<32x32xf32>
    %cst_34 = arith.constant dense<0.000000e+00> : vector<16x32xf32>
    %90 = tpu.matmul %88, %89, %cst_34 {dimension_numbers = #tpu.dot_dimension_numbers<[1], [0], [0], [1], [0, 0, 1, 1], [], []>} : vector<16x32xf32>, vector<32x32xf32>, vector<16x32xf32> -> vector<16x32xf32>
    %c9 = arith.constant 9 : index
    %c0_35 = arith.constant 0 : index
    %91 = vector.load %arg2[%c9, %c0_35] : memref<24x96xf32, #tpu.memory_space<vmem>>, vector<1x32xf32>
    %92 = vector.broadcast %91 : vector<1x32xf32> to vector<16x32xf32>
    %93 = arith.addf %90, %92 : vector<16x32xf32>
    %94 = arith.addf %8, %93 : vector<16x32xf32>
    %c10 = arith.constant 10 : index
    %c0_36 = arith.constant 0 : index
    %95 = vector.load %arg2[%c10, %c0_36] : memref<24x96xf32, #tpu.memory_space<vmem>>, vector<1x32xf32>
    %c11 = arith.constant 11 : index
    %c0_37 = arith.constant 0 : index
    %96 = vector.load %arg2[%c11, %c0_37] : memref<24x96xf32, #tpu.memory_space<vmem>>, vector<1x32xf32>
    %cst_38 = arith.constant dense<0.000000e+00> : vector<16xf32>
    %97 = vector.multi_reduction <add>, %94, %cst_38 [1] : vector<16x32xf32> to vector<16xf32>
    %98 = vector.shape_cast %97 : vector<16xf32> to vector<16x1xf32>
    %cst_39 = arith.constant 3.200000e+01 : f32
    %99 = vector.broadcast %cst_39 : f32 to vector<16x1xf32>
    %100 = arith.divf %98, %99 : vector<16x1xf32>
    %101 = vector.broadcast %100 : vector<16x1xf32> to vector<16x32xf32>
    %102 = arith.subf %94, %101 : vector<16x32xf32>
    %103 = arith.mulf %102, %102 : vector<16x32xf32>
    %cst_40 = arith.constant dense<0.000000e+00> : vector<16xf32>
    %104 = vector.multi_reduction <add>, %103, %cst_40 [1] : vector<16x32xf32> to vector<16xf32>
    %105 = vector.shape_cast %104 : vector<16xf32> to vector<16x1xf32>
    %cst_41 = arith.constant 3.200000e+01 : f32
    %106 = vector.broadcast %cst_41 : f32 to vector<16x1xf32>
    %107 = arith.divf %105, %106 : vector<16x1xf32>
    %cst_42 = arith.constant 9.99999974E-6 : f32
    %108 = vector.broadcast %cst_42 : f32 to vector<16x1xf32>
    %109 = arith.addf %107, %108 : vector<16x1xf32>
    %110 = math.rsqrt %109 : vector<16x1xf32>
    %111 = vector.broadcast %110 : vector<16x1xf32> to vector<16x32xf32>
    %112 = arith.mulf %102, %111 : vector<16x32xf32>
    %113 = vector.broadcast %95 : vector<1x32xf32> to vector<16x32xf32>
    %114 = arith.mulf %112, %113 : vector<16x32xf32>
    %115 = vector.broadcast %96 : vector<1x32xf32> to vector<16x32xf32>
    %116 = arith.addf %114, %115 : vector<16x32xf32>
    %c80 = arith.constant 80 : index
    %c0_43 = arith.constant 0 : index
    %117 = vector.load %arg1[%c80, %c0_43] : memref<272x96xf32, #tpu.memory_space<vmem>>, vector<32x32xf32>
    %cst_44 = arith.constant dense<0.000000e+00> : vector<16x32xf32>
    %118 = tpu.matmul %116, %117, %cst_44 {dimension_numbers = #tpu.dot_dimension_numbers<[1], [0], [0], [1], [0, 0, 1, 1], [], []>} : vector<16x32xf32>, vector<32x32xf32>, vector<16x32xf32> -> vector<16x32xf32>
    %c12 = arith.constant 12 : index
    %c0_45 = arith.constant 0 : index
    %119 = vector.load %arg2[%c12, %c0_45] : memref<24x96xf32, #tpu.memory_space<vmem>>, vector<1x32xf32>
    %120 = vector.broadcast %119 : vector<1x32xf32> to vector<16x32xf32>
    %121 = arith.addf %118, %120 : vector<16x32xf32>
    %cst_46 = arith.constant 0.000000e+00 : f32
    %122 = vector.broadcast %cst_46 : f32 to vector<16x32xf32>
    %123 = arith.maximumf %121, %122 : vector<16x32xf32>
    %c112 = arith.constant 112 : index
    %c0_47 = arith.constant 0 : index
    %124 = vector.load %arg1[%c112, %c0_47] : memref<272x96xf32, #tpu.memory_space<vmem>>, vector<32x32xf32>
    %cst_48 = arith.constant dense<0.000000e+00> : vector<16x32xf32>
    %125 = tpu.matmul %123, %124, %cst_48 {dimension_numbers = #tpu.dot_dimension_numbers<[1], [0], [0], [1], [0, 0, 1, 1], [], []>} : vector<16x32xf32>, vector<32x32xf32>, vector<16x32xf32> -> vector<16x32xf32>
    %c13 = arith.constant 13 : index
    %c0_49 = arith.constant 0 : index
    %126 = vector.load %arg2[%c13, %c0_49] : memref<24x96xf32, #tpu.memory_space<vmem>>, vector<1x32xf32>
    %127 = vector.broadcast %126 : vector<1x32xf32> to vector<16x32xf32>
    %128 = arith.addf %125, %127 : vector<16x32xf32>
    %129 = arith.addf %116, %128 : vector<16x32xf32>
    %c14 = arith.constant 14 : index
    %c0_50 = arith.constant 0 : index
    %130 = vector.load %arg2[%c14, %c0_50] : memref<24x96xf32, #tpu.memory_space<vmem>>, vector<1x32xf32>
    %c15 = arith.constant 15 : index
    %c0_51 = arith.constant 0 : index
    %131 = vector.load %arg2[%c15, %c0_51] : memref<24x96xf32, #tpu.memory_space<vmem>>, vector<1x32xf32>
    %cst_52 = arith.constant dense<0.000000e+00> : vector<16xf32>
    %132 = vector.multi_reduction <add>, %129, %cst_52 [1] : vector<16x32xf32> to vector<16xf32>
    %133 = vector.shape_cast %132 : vector<16xf32> to vector<16x1xf32>
    %cst_53 = arith.constant 3.200000e+01 : f32
    %134 = vector.broadcast %cst_53 : f32 to vector<16x1xf32>
    %135 = arith.divf %133, %134 : vector<16x1xf32>
    %136 = vector.broadcast %135 : vector<16x1xf32> to vector<16x32xf32>
    %137 = arith.subf %129, %136 : vector<16x32xf32>
    %138 = arith.mulf %137, %137 : vector<16x32xf32>
    %cst_54 = arith.constant dense<0.000000e+00> : vector<16xf32>
    %139 = vector.multi_reduction <add>, %138, %cst_54 [1] : vector<16x32xf32> to vector<16xf32>
    %140 = vector.shape_cast %139 : vector<16xf32> to vector<16x1xf32>
    %cst_55 = arith.constant 3.200000e+01 : f32
    %141 = vector.broadcast %cst_55 : f32 to vector<16x1xf32>
    %142 = arith.divf %140, %141 : vector<16x1xf32>
    %cst_56 = arith.constant 9.99999974E-6 : f32
    %143 = vector.broadcast %cst_56 : f32 to vector<16x1xf32>
    %144 = arith.addf %142, %143 : vector<16x1xf32>
    %145 = math.rsqrt %144 : vector<16x1xf32>
    %146 = vector.broadcast %145 : vector<16x1xf32> to vector<16x32xf32>
    %147 = arith.mulf %137, %146 : vector<16x32xf32>
    %148 = vector.broadcast %130 : vector<1x32xf32> to vector<16x32xf32>
    %149 = arith.mulf %147, %148 : vector<16x32xf32>
    %150 = vector.broadcast %131 : vector<1x32xf32> to vector<16x32xf32>
    %151 = arith.addf %149, %150 : vector<16x32xf32>
    %c144 = arith.constant 144 : index
    %c0_57 = arith.constant 0 : index
    %152 = vector.load %arg1[%c144, %c0_57] : memref<272x96xf32, #tpu.memory_space<vmem>>, vector<32x96xf32>
    %cst_58 = arith.constant dense<0.000000e+00> : vector<16x96xf32>
    %153 = tpu.matmul %151, %152, %cst_58 {dimension_numbers = #tpu.dot_dimension_numbers<[1], [0], [0], [1], [0, 0, 1, 1], [], []>} : vector<16x32xf32>, vector<32x96xf32>, vector<16x96xf32> -> vector<16x96xf32>
    %c16_59 = arith.constant 16 : index
    %c0_60 = arith.constant 0 : index
    %154 = vector.load %arg2[%c16_59, %c0_60] : memref<24x96xf32, #tpu.memory_space<vmem>>, vector<1x96xf32>
    %155 = vector.broadcast %154 : vector<1x96xf32> to vector<16x96xf32>
    %156 = arith.addf %153, %155 : vector<16x96xf32>
    %157 = vector.extract_strided_slice %156 {offsets = [0, 0], sizes = [16, 32], strides = [1, 1]} : vector<16x96xf32> to vector<16x32xf32>
    %158 = vector.shape_cast %157 : vector<16x32xf32> to vector<2x8x32xf32>
    %159 = vector.extract_strided_slice %156 {offsets = [0, 32], sizes = [16, 32], strides = [1, 1]} : vector<16x96xf32> to vector<16x32xf32>
    %160 = vector.shape_cast %159 : vector<16x32xf32> to vector<2x8x32xf32>
    %161 = vector.extract_strided_slice %156 {offsets = [0, 64], sizes = [16, 32], strides = [1, 1]} : vector<16x96xf32> to vector<16x32xf32>
    %162 = vector.shape_cast %161 : vector<16x32xf32> to vector<2x8x32xf32>
    %163 = vector.extract_strided_slice %158 {offsets = [0, 0, 0], sizes = [2, 8, 8], strides = [1, 1, 1]} : vector<2x8x32xf32> to vector<2x8x8xf32>
    %164 = vector.extract_strided_slice %160 {offsets = [0, 0, 0], sizes = [2, 8, 8], strides = [1, 1, 1]} : vector<2x8x32xf32> to vector<2x8x8xf32>
    "tpu.trace_start"() <{level = 10 : i32, message = "bsd,btd->bst"}> : () -> ()
    %cst_61 = arith.constant dense<0.000000e+00> : vector<2x8x8xf32>
    %165 = tpu.matmul %163, %164, %cst_61 {dimension_numbers = #tpu.dot_dimension_numbers<[2], [2], [1], [1], [0, 0, 0, 1, 1, 1], [0], [0]>} : vector<2x8x8xf32>, vector<2x8x8xf32>, vector<2x8x8xf32> -> vector<2x8x8xf32>
    "tpu.trace_stop"() : () -> ()
    %cst_62 = arith.constant dense<0xFF800000> : vector<2x8xf32>
    %166 = vector.multi_reduction <maximumf>, %165, %cst_62 [2] : vector<2x8x8xf32> to vector<2x8xf32>
    %167 = vector.shape_cast %166 : vector<2x8xf32> to vector<2x8x1xf32>
    %168 = vector.broadcast %167 : vector<2x8x1xf32> to vector<2x8x8xf32>
    %169 = arith.subf %165, %168 : vector<2x8x8xf32>
    %170 = math.exp %169 : vector<2x8x8xf32>
    %cst_63 = arith.constant dense<0.000000e+00> : vector<2x8xf32>
    %171 = vector.multi_reduction <add>, %170, %cst_63 [2] : vector<2x8x8xf32> to vector<2x8xf32>
    %172 = vector.shape_cast %171 : vector<2x8xf32> to vector<2x8x1xf32>
    %173 = tpu.reciprocal %172 {approx = true} : vector<2x8x1xf32> -> vector<2x8x1xf32>
    %174 = vector.broadcast %173 : vector<2x8x1xf32> to vector<2x8x8xf32>
    %175 = arith.mulf %170, %174 : vector<2x8x8xf32>
    %176 = vector.extract_strided_slice %162 {offsets = [0, 0, 0], sizes = [2, 8, 8], strides = [1, 1, 1]} : vector<2x8x32xf32> to vector<2x8x8xf32>
    "tpu.trace_start"() <{level = 10 : i32, message = "bst,btd->bsd"}> : () -> ()
    %cst_64 = arith.constant dense<0.000000e+00> : vector<2x8x8xf32>
    %177 = tpu.matmul %175, %176, %cst_64 {dimension_numbers = #tpu.dot_dimension_numbers<[2], [1], [1], [2], [0, 0, 0, 1, 1, 2], [0], [0]>} : vector<2x8x8xf32>, vector<2x8x8xf32>, vector<2x8x8xf32> -> vector<2x8x8xf32>
    "tpu.trace_stop"() : () -> ()
    %178 = vector.shape_cast %177 : vector<2x8x8xf32> to vector<16x8xf32>
    %c0_65 = arith.constant 0 : index
    %c0_66 = arith.constant 0 : index
    %179 = vector.load %arg4[%c0_65, %c0_66] : memref<16x32xf32, #tpu.memory_space<vmem>>, vector<16x8xf32>
    tpu.vector_store %arg4[%c0_65, %c0_66], %178 {strides = array<i32>} : memref<16x32xf32, #tpu.memory_space<vmem>>, vector<16x8xf32>,
    %180 = vector.extract_strided_slice %158 {offsets = [0, 0, 8], sizes = [2, 8, 8], strides = [1, 1, 1]} : vector<2x8x32xf32> to vector<2x8x8xf32>
    %181 = vector.extract_strided_slice %160 {offsets = [0, 0, 8], sizes = [2, 8, 8], strides = [1, 1, 1]} : vector<2x8x32xf32> to vector<2x8x8xf32>
    "tpu.trace_start"() <{level = 10 : i32, message = "bsd,btd->bst"}> : () -> ()
    %cst_67 = arith.constant dense<0.000000e+00> : vector<2x8x8xf32>
    %182 = tpu.matmul %180, %181, %cst_67 {dimension_numbers = #tpu.dot_dimension_numbers<[2], [2], [1], [1], [0, 0, 0, 1, 1, 1], [0], [0]>} : vector<2x8x8xf32>, vector<2x8x8xf32>, vector<2x8x8xf32> -> vector<2x8x8xf32>
    "tpu.trace_stop"() : () -> ()
    %cst_68 = arith.constant dense<0xFF800000> : vector<2x8xf32>
    %183 = vector.multi_reduction <maximumf>, %182, %cst_68 [2] : vector<2x8x8xf32> to vector<2x8xf32>
    %184 = vector.shape_cast %183 : vector<2x8xf32> to vector<2x8x1xf32>
    %185 = vector.broadcast %184 : vector<2x8x1xf32> to vector<2x8x8xf32>
    %186 = arith.subf %182, %185 : vector<2x8x8xf32>
    %187 = math.exp %186 : vector<2x8x8xf32>
    %cst_69 = arith.constant dense<0.000000e+00> : vector<2x8xf32>
    %188 = vector.multi_reduction <add>, %187, %cst_69 [2] : vector<2x8x8xf32> to vector<2x8xf32>
    %189 = vector.shape_cast %188 : vector<2x8xf32> to vector<2x8x1xf32>
    %190 = tpu.reciprocal %189 {approx = true} : vector<2x8x1xf32> -> vector<2x8x1xf32>
    %191 = vector.broadcast %190 : vector<2x8x1xf32> to vector<2x8x8xf32>
    %192 = arith.mulf %187, %191 : vector<2x8x8xf32>
    %193 = vector.extract_strided_slice %162 {offsets = [0, 0, 8], sizes = [2, 8, 8], strides = [1, 1, 1]} : vector<2x8x32xf32> to vector<2x8x8xf32>
    "tpu.trace_start"() <{level = 10 : i32, message = "bst,btd->bsd"}> : () -> ()
    %cst_70 = arith.constant dense<0.000000e+00> : vector<2x8x8xf32>
    %194 = tpu.matmul %192, %193, %cst_70 {dimension_numbers = #tpu.dot_dimension_numbers<[2], [1], [1], [2], [0, 0, 0, 1, 1, 2], [0], [0]>} : vector<2x8x8xf32>, vector<2x8x8xf32>, vector<2x8x8xf32> -> vector<2x8x8xf32>
    "tpu.trace_stop"() : () -> ()
    %195 = vector.shape_cast %194 : vector<2x8x8xf32> to vector<16x8xf32>
    %c0_71 = arith.constant 0 : index
    %c8_72 = arith.constant 8 : index
    %196 = vector.load %arg4[%c0_71, %c8_72] : memref<16x32xf32, #tpu.memory_space<vmem>>, vector<16x8xf32>
    tpu.vector_store %arg4[%c0_71, %c8_72], %195 {strides = array<i32>} : memref<16x32xf32, #tpu.memory_space<vmem>>, vector<16x8xf32>,
    %197 = vector.extract_strided_slice %158 {offsets = [0, 0, 16], sizes = [2, 8, 8], strides = [1, 1, 1]} : vector<2x8x32xf32> to vector<2x8x8xf32>
    %198 = vector.extract_strided_slice %160 {offsets = [0, 0, 16], sizes = [2, 8, 8], strides = [1, 1, 1]} : vector<2x8x32xf32> to vector<2x8x8xf32>
    "tpu.trace_start"() <{level = 10 : i32, message = "bsd,btd->bst"}> : () -> ()
    %cst_73 = arith.constant dense<0.000000e+00> : vector<2x8x8xf32>
    %199 = tpu.matmul %197, %198, %cst_73 {dimension_numbers = #tpu.dot_dimension_numbers<[2], [2], [1], [1], [0, 0, 0, 1, 1, 1], [0], [0]>} : vector<2x8x8xf32>, vector<2x8x8xf32>, vector<2x8x8xf32> -> vector<2x8x8xf32>
    "tpu.trace_stop"() : () -> ()
    %cst_74 = arith.constant dense<0xFF800000> : vector<2x8xf32>
    %200 = vector.multi_reduction <maximumf>, %199, %cst_74 [2] : vector<2x8x8xf32> to vector<2x8xf32>
    %201 = vector.shape_cast %200 : vector<2x8xf32> to vector<2x8x1xf32>
    %202 = vector.broadcast %201 : vector<2x8x1xf32> to vector<2x8x8xf32>
    %203 = arith.subf %199, %202 : vector<2x8x8xf32>
    %204 = math.exp %203 : vector<2x8x8xf32>
    %cst_75 = arith.constant dense<0.000000e+00> : vector<2x8xf32>
    %205 = vector.multi_reduction <add>, %204, %cst_75 [2] : vector<2x8x8xf32> to vector<2x8xf32>
    %206 = vector.shape_cast %205 : vector<2x8xf32> to vector<2x8x1xf32>
    %207 = tpu.reciprocal %206 {approx = true} : vector<2x8x1xf32> -> vector<2x8x1xf32>
    %208 = vector.broadcast %207 : vector<2x8x1xf32> to vector<2x8x8xf32>
    %209 = arith.mulf %204, %208 : vector<2x8x8xf32>
    %210 = vector.extract_strided_slice %162 {offsets = [0, 0, 16], sizes = [2, 8, 8], strides = [1, 1, 1]} : vector<2x8x32xf32> to vector<2x8x8xf32>
    "tpu.trace_start"() <{level = 10 : i32, message = "bst,btd->bsd"}> : () -> ()
    %cst_76 = arith.constant dense<0.000000e+00> : vector<2x8x8xf32>
    %211 = tpu.matmul %209, %210, %cst_76 {dimension_numbers = #tpu.dot_dimension_numbers<[2], [1], [1], [2], [0, 0, 0, 1, 1, 2], [0], [0]>} : vector<2x8x8xf32>, vector<2x8x8xf32>, vector<2x8x8xf32> -> vector<2x8x8xf32>
    "tpu.trace_stop"() : () -> ()
    %212 = vector.shape_cast %211 : vector<2x8x8xf32> to vector<16x8xf32>
    %c0_77 = arith.constant 0 : index
    %c16_78 = arith.constant 16 : index
    %213 = vector.load %arg4[%c0_77, %c16_78] : memref<16x32xf32, #tpu.memory_space<vmem>>, vector<16x8xf32>
    tpu.vector_store %arg4[%c0_77, %c16_78], %212 {strides = array<i32>} : memref<16x32xf32, #tpu.memory_space<vmem>>, vector<16x8xf32>,
    %214 = vector.extract_strided_slice %158 {offsets = [0, 0, 24], sizes = [2, 8, 8], strides = [1, 1, 1]} : vector<2x8x32xf32> to vector<2x8x8xf32>
    %215 = vector.extract_strided_slice %160 {offsets = [0, 0, 24], sizes = [2, 8, 8], strides = [1, 1, 1]} : vector<2x8x32xf32> to vector<2x8x8xf32>
    "tpu.trace_start"() <{level = 10 : i32, message = "bsd,btd->bst"}> : () -> ()
    %cst_79 = arith.constant dense<0.000000e+00> : vector<2x8x8xf32>
    %216 = tpu.matmul %214, %215, %cst_79 {dimension_numbers = #tpu.dot_dimension_numbers<[2], [2], [1], [1], [0, 0, 0, 1, 1, 1], [0], [0]>} : vector<2x8x8xf32>, vector<2x8x8xf32>, vector<2x8x8xf32> -> vector<2x8x8xf32>
    "tpu.trace_stop"() : () -> ()
    %cst_80 = arith.constant dense<0xFF800000> : vector<2x8xf32>
    %217 = vector.multi_reduction <maximumf>, %216, %cst_80 [2] : vector<2x8x8xf32> to vector<2x8xf32>
    %218 = vector.shape_cast %217 : vector<2x8xf32> to vector<2x8x1xf32>
    %219 = vector.broadcast %218 : vector<2x8x1xf32> to vector<2x8x8xf32>
    %220 = arith.subf %216, %219 : vector<2x8x8xf32>
    %221 = math.exp %220 : vector<2x8x8xf32>
    %cst_81 = arith.constant dense<0.000000e+00> : vector<2x8xf32>
    %222 = vector.multi_reduction <add>, %221, %cst_81 [2] : vector<2x8x8xf32> to vector<2x8xf32>
    %223 = vector.shape_cast %222 : vector<2x8xf32> to vector<2x8x1xf32>
    %224 = tpu.reciprocal %223 {approx = true} : vector<2x8x1xf32> -> vector<2x8x1xf32>
    %225 = vector.broadcast %224 : vector<2x8x1xf32> to vector<2x8x8xf32>
    %226 = arith.mulf %221, %225 : vector<2x8x8xf32>
    %227 = vector.extract_strided_slice %162 {offsets = [0, 0, 24], sizes = [2, 8, 8], strides = [1, 1, 1]} : vector<2x8x32xf32> to vector<2x8x8xf32>
    "tpu.trace_start"() <{level = 10 : i32, message = "bst,btd->bsd"}> : () -> ()
    %cst_82 = arith.constant dense<0.000000e+00> : vector<2x8x8xf32>
    %228 = tpu.matmul %226, %227, %cst_82 {dimension_numbers = #tpu.dot_dimension_numbers<[2], [1], [1], [2], [0, 0, 0, 1, 1, 2], [0], [0]>} : vector<2x8x8xf32>, vector<2x8x8xf32>, vector<2x8x8xf32> -> vector<2x8x8xf32>
    "tpu.trace_stop"() : () -> ()
    %229 = vector.shape_cast %228 : vector<2x8x8xf32> to vector<16x8xf32>
    %c0_83 = arith.constant 0 : index
    %c24_84 = arith.constant 24 : index
    %230 = vector.load %arg4[%c0_83, %c24_84] : memref<16x32xf32, #tpu.memory_space<vmem>>, vector<16x8xf32>
    tpu.vector_store %arg4[%c0_83, %c24_84], %229 {strides = array<i32>} : memref<16x32xf32, #tpu.memory_space<vmem>>, vector<16x8xf32>,
    %c0_85 = arith.constant 0 : index
    %c0_86 = arith.constant 0 : index
    %231 = vector.load %arg4[%c0_85, %c0_86] : memref<16x32xf32, #tpu.memory_space<vmem>>, vector<16x32xf32>
    %c176 = arith.constant 176 : index
    %c0_87 = arith.constant 0 : index
    %232 = vector.load %arg1[%c176, %c0_87] : memref<272x96xf32, #tpu.memory_space<vmem>>, vector<32x32xf32>
    %cst_88 = arith.constant dense<0.000000e+00> : vector<16x32xf32>
    %233 = tpu.matmul %231, %232, %cst_88 {dimension_numbers = #tpu.dot_dimension_numbers<[1], [0], [0], [1], [0, 0, 1, 1], [], []>} : vector<16x32xf32>, vector<32x32xf32>, vector<16x32xf32> -> vector<16x32xf32>
    %c17 = arith.constant 17 : index
    %c0_89 = arith.constant 0 : index
    %234 = vector.load %arg2[%c17, %c0_89] : memref<24x96xf32, #tpu.memory_space<vmem>>, vector<1x32xf32>
    %235 = vector.broadcast %234 : vector<1x32xf32> to vector<16x32xf32>
    %236 = arith.addf %233, %235 : vector<16x32xf32>
    %237 = arith.addf %151, %236 : vector<16x32xf32>
    %c18 = arith.constant 18 : index
    %c0_90 = arith.constant 0 : index
    %238 = vector.load %arg2[%c18, %c0_90] : memref<24x96xf32, #tpu.memory_space<vmem>>, vector<1x32xf32>
    %c19 = arith.constant 19 : index
    %c0_91 = arith.constant 0 : index
    %239 = vector.load %arg2[%c19, %c0_91] : memref<24x96xf32, #tpu.memory_space<vmem>>, vector<1x32xf32>
    %cst_92 = arith.constant dense<0.000000e+00> : vector<16xf32>
    %240 = vector.multi_reduction <add>, %237, %cst_92 [1] : vector<16x32xf32> to vector<16xf32>
    %241 = vector.shape_cast %240 : vector<16xf32> to vector<16x1xf32>
    %cst_93 = arith.constant 3.200000e+01 : f32
    %242 = vector.broadcast %cst_93 : f32 to vector<16x1xf32>
    %243 = arith.divf %241, %242 : vector<16x1xf32>
    %244 = vector.broadcast %243 : vector<16x1xf32> to vector<16x32xf32>
    %245 = arith.subf %237, %244 : vector<16x32xf32>
    %246 = arith.mulf %245, %245 : vector<16x32xf32>
    %cst_94 = arith.constant dense<0.000000e+00> : vector<16xf32>
    %247 = vector.multi_reduction <add>, %246, %cst_94 [1] : vector<16x32xf32> to vector<16xf32>
    %248 = vector.shape_cast %247 : vector<16xf32> to vector<16x1xf32>
    %cst_95 = arith.constant 3.200000e+01 : f32
    %249 = vector.broadcast %cst_95 : f32 to vector<16x1xf32>
    %250 = arith.divf %248, %249 : vector<16x1xf32>
    %cst_96 = arith.constant 9.99999974E-6 : f32
    %251 = vector.broadcast %cst_96 : f32 to vector<16x1xf32>
    %252 = arith.addf %250, %251 : vector<16x1xf32>
    %253 = math.rsqrt %252 : vector<16x1xf32>
    %254 = vector.broadcast %253 : vector<16x1xf32> to vector<16x32xf32>
    %255 = arith.mulf %245, %254 : vector<16x32xf32>
    %256 = vector.broadcast %238 : vector<1x32xf32> to vector<16x32xf32>
    %257 = arith.mulf %255, %256 : vector<16x32xf32>
    %258 = vector.broadcast %239 : vector<1x32xf32> to vector<16x32xf32>
    %259 = arith.addf %257, %258 : vector<16x32xf32>
    %c208 = arith.constant 208 : index
    %c0_97 = arith.constant 0 : index
    %260 = vector.load %arg1[%c208, %c0_97] : memref<272x96xf32, #tpu.memory_space<vmem>>, vector<32x32xf32>
    %cst_98 = arith.constant dense<0.000000e+00> : vector<16x32xf32>
    %261 = tpu.matmul %259, %260, %cst_98 {dimension_numbers = #tpu.dot_dimension_numbers<[1], [0], [0], [1], [0, 0, 1, 1], [], []>} : vector<16x32xf32>, vector<32x32xf32>, vector<16x32xf32> -> vector<16x32xf32>
    %c20 = arith.constant 20 : index
    %c0_99 = arith.constant 0 : index
    %262 = vector.load %arg2[%c20, %c0_99] : memref<24x96xf32, #tpu.memory_space<vmem>>, vector<1x32xf32>
    %263 = vector.broadcast %262 : vector<1x32xf32> to vector<16x32xf32>
    %264 = arith.addf %261, %263 : vector<16x32xf32>
    %cst_100 = arith.constant 0.000000e+00 : f32
    %265 = vector.broadcast %cst_100 : f32 to vector<16x32xf32>
    %266 = arith.maximumf %264, %265 : vector<16x32xf32>
    %c240 = arith.constant 240 : index
    %c0_101 = arith.constant 0 : index
    %267 = vector.load %arg1[%c240, %c0_101] : memref<272x96xf32, #tpu.memory_space<vmem>>, vector<32x32xf32>
    %cst_102 = arith.constant dense<0.000000e+00> : vector<16x32xf32>
    %268 = tpu.matmul %266, %267, %cst_102 {dimension_numbers = #tpu.dot_dimension_numbers<[1], [0], [0], [1], [0, 0, 1, 1], [], []>} : vector<16x32xf32>, vector<32x32xf32>, vector<16x32xf32> -> vector<16x32xf32>
    %c21 = arith.constant 21 : index
    %c0_103 = arith.constant 0 : index
    %269 = vector.load %arg2[%c21, %c0_103] : memref<24x96xf32, #tpu.memory_space<vmem>>, vector<1x32xf32>
    %270 = vector.broadcast %269 : vector<1x32xf32> to vector<16x32xf32>
    %271 = arith.addf %268, %270 : vector<16x32xf32>
    %272 = arith.addf %259, %271 : vector<16x32xf32>
    %c22 = arith.constant 22 : index
    %c0_104 = arith.constant 0 : index
    %273 = vector.load %arg2[%c22, %c0_104] : memref<24x96xf32, #tpu.memory_space<vmem>>, vector<1x32xf32>
    %c23 = arith.constant 23 : index
    %c0_105 = arith.constant 0 : index
    %274 = vector.load %arg2[%c23, %c0_105] : memref<24x96xf32, #tpu.memory_space<vmem>>, vector<1x32xf32>
    %cst_106 = arith.constant dense<0.000000e+00> : vector<16xf32>
    %275 = vector.multi_reduction <add>, %272, %cst_106 [1] : vector<16x32xf32> to vector<16xf32>
    %276 = vector.shape_cast %275 : vector<16xf32> to vector<16x1xf32>
    %cst_107 = arith.constant 3.200000e+01 : f32
    %277 = vector.broadcast %cst_107 : f32 to vector<16x1xf32>
    %278 = arith.divf %276, %277 : vector<16x1xf32>
    %279 = vector.broadcast %278 : vector<16x1xf32> to vector<16x32xf32>
    %280 = arith.subf %272, %279 : vector<16x32xf32>
    %281 = arith.mulf %280, %280 : vector<16x32xf32>
    %cst_108 = arith.constant dense<0.000000e+00> : vector<16xf32>
    %282 = vector.multi_reduction <add>, %281, %cst_108 [1] : vector<16x32xf32> to vector<16xf32>
    %283 = vector.shape_cast %282 : vector<16xf32> to vector<16x1xf32>
    %cst_109 = arith.constant 3.200000e+01 : f32
    %284 = vector.broadcast %cst_109 : f32 to vector<16x1xf32>
    %285 = arith.divf %283, %284 : vector<16x1xf32>
    %cst_110 = arith.constant 9.99999974E-6 : f32
    %286 = vector.broadcast %cst_110 : f32 to vector<16x1xf32>
    %287 = arith.addf %285, %286 : vector<16x1xf32>
    %288 = math.rsqrt %287 : vector<16x1xf32>
    %289 = vector.broadcast %288 : vector<16x1xf32> to vector<16x32xf32>
    %290 = arith.mulf %280, %289 : vector<16x32xf32>
    %291 = vector.broadcast %273 : vector<1x32xf32> to vector<16x32xf32>
    %292 = arith.mulf %290, %291 : vector<16x32xf32>
    %293 = vector.broadcast %274 : vector<1x32xf32> to vector<16x32xf32>
    %294 = arith.addf %292, %293 : vector<16x32xf32>
    %295 = vector.extract_strided_slice %294 {offsets = [7, 0], sizes = [1, 32], strides = [1, 1]} : vector<16x32xf32> to vector<1x32xf32>
    %c0_111 = arith.constant 0 : index
    %c0_112 = arith.constant 0 : index
    %296 = vector.load %arg3[%c0_111, %c0_112] : memref<2x32xf32, #tpu.memory_space<vmem>>, vector<1x32xf32>
    tpu.vector_store %arg3[%c0_111, %c0_112], %295 {strides = array<i32>} : memref<2x32xf32, #tpu.memory_space<vmem>>, vector<1x32xf32>,
    %297 = vector.extract_strided_slice %294 {offsets = [15, 0], sizes = [1, 32], strides = [1, 1]} : vector<16x32xf32> to vector<1x32xf32>
    %c1 = arith.constant 1 : index
    %c0_113 = arith.constant 0 : index
    %298 = vector.load %arg3[%c1, %c0_113] : memref<2x32xf32, #tpu.memory_space<vmem>>, vector<1x32xf32>
    tpu.vector_store %arg3[%c1, %c0_113], %297 {strides = array<i32>} : memref<2x32xf32, #tpu.memory_space<vmem>>, vector<1x32xf32>,
    return
  }
}

</mosaic_0001>

<llo_original>
// kernel: tpu_custom_call.1
$region0: #{tpu_custom_call.1}
  #allocation0 [shape = 'u32[]', space=smem, size = 0x4, offset = 0x4, fixed_abs, tag = 'smem constant byte address 0x4 - core index']
  #allocation1 [shape = 'u32[144,128]{1,0:T(1,128)}', space=vmem, size = 0x12000, scoped, tag = 'internal scratch']
  #allocation2 [shape = 'f32[16,32]{1,0:T(8,128)}', space=vmem, size = 0x2000, scoped, tag = 'scratch operand']
  %s0 = inlined_call_operand.hbm [shape: f32[16,16], index: 0, kind: input, shape index: {}]
  %s1 = inlined_call_operand.hbm [shape: f32[272,96], index: 1, kind: input, shape index: {}]
  %s2 = inlined_call_operand.hbm [shape: f32[24,96], index: 2, kind: input, shape index: {}]
  %s3 = inlined_call_operand.hbm [shape: f32[2,32], index: 3, kind: output, shape index: {}]
  %s4 = sld [smem:[#allocation0]]
  $region34: #{tpu_custom_call.1} parent=0
    _
  %s6 = ssub.s32 1, %s4
  %s7 = scalar_select 0, %s6, %s4
  $region1: #{tpu_custom_call.1} parent=0
    #allocation3 [shape = 'u8[8192]{0}', space=vmem, size = 0x2000, scoped, tag = 'input window, operand 0, single buffered']
    #allocation4 [shape = 's32[1]{0}', space=sflag, size = 0x4, scoped, tag = 'scoped memory for tpu_custom_call.1']
    #allocation5 [shape = 's32[1]{0}', space=sflag, size = 0x4, scoped, tag = 'scoped memory for tpu_custom_call.1']
    #allocation6 [shape = 'u8[139264]{0}', space=vmem, size = 0x22000, scoped, tag = 'input window, operand 1, single buffered']
    #allocation7 [shape = 's32[1]{0}', space=sflag, size = 0x4, scoped, tag = 'scoped memory for tpu_custom_call.1']
    #allocation8 [shape = 'u8[12288]{0}', space=vmem, size = 0x3000, scoped, tag = 'input window, operand 2, single buffered']
    #allocation9 [shape = 'u8[1024]{0}', space=vmem, size = 0x400, scoped, tag = 'output window, operand 0, single buffered']
    %8 = vsyncpa [#allocation4], 0
    %9 = vsyncpa [#allocation7], 0
    %10 = vsyncpa [#allocation5], 0
    // Predicated region
    $region2: #{tpu_custom_call.1} parent=1 // pred_check
      _
    $region3: #{tpu_custom_call.1} parent=1 // pred_check_branch
      %12 = sbr.rel (0) target = $region5
    $region4: #{tpu_custom_call.1} parent=1 // pred_region
      %s14 = ssub.s32 256, 256
      %15 = vsyncadd [#allocation4], %s14
      %s16 = sshll.u32 [#allocation3], 4
      %s17 = int_to_ptr.vmem [resolvable:$true] %s16
      %22 = dma.hbm_to_vmem [thread:$0]  %s0, 256, %s17, [#allocation4], 128, 128, 8
    $region5: #{tpu_custom_call.1} parent=1 // pred_fallthru
      _
    // Predicated region
    $region6: #{tpu_custom_call.1} parent=1 // pred_check
      _
    $region7: #{tpu_custom_call.1} parent=1 // pred_check_branch
      %24 = sbr.rel (0) target = $region9
    $region8: #{tpu_custom_call.1} parent=1 // pred_region
      %s26 = ssub.s32 4352, 4352
      %27 = vsyncadd [#allocation7], %s26
      %s28 = sshll.u32 [#allocation6], 4
      %s29 = int_to_ptr.vmem [resolvable:$true] %s28
      %34 = dma.hbm_to_vmem [thread:$0]  %s1, 4352, %s29, [#allocation7], 128, 128, 8
    $region9: #{tpu_custom_call.1} parent=1 // pred_fallthru
      _
    // Predicated region
    $region10: #{tpu_custom_call.1} parent=1 // pred_check
      _
    $region11: #{tpu_custom_call.1} parent=1 // pred_check_branch
      %36 = sbr.rel (0) target = $region13
    $region12: #{tpu_custom_call.1} parent=1 // pred_region
      %s38 = ssub.s32 384, 384
      %39 = vsyncadd [#allocation7], %s38
      %s40 = sshll.u32 [#allocation8], 4
      %s41 = int_to_ptr.vmem [resolvable:$true] %s40
      %46 = dma.hbm_to_vmem [thread:$0]  %s2, 384, %s41, [#allocation7], 128, 128, 8
    $region13: #{tpu_custom_call.1} parent=1 // pred_fallthru
      _
    // Predicated region
    $region14: #{tpu_custom_call.1} parent=1 // pred_check
      _
    $region15: #{tpu_custom_call.1} parent=1 // pred_check_branch
      %48 = sbr.rel (0) target = $region17
    $region16: #{tpu_custom_call.1} parent=1 // pred_region
      %49 = dma.done [#allocation4], 256
    $region17: #{tpu_custom_call.1} parent=1 // pred_fallthru
      _
    // Predicated region
    $region18: #{tpu_custom_call.1} parent=1 // pred_check
      _
    $region19: #{tpu_custom_call.1} parent=1 // pred_check_branch
      %51 = sbr.rel (0) target = $region21
    $region20: #{tpu_custom_call.1} parent=1 // pred_region
      %52 = dma.done [#allocation7], 4352
    $region21: #{tpu_custom_call.1} parent=1 // pred_fallthru
      _
    // Predicated region
    $region22: #{tpu_custom_call.1} parent=1 // pred_check
      _
    $region23: #{tpu_custom_call.1} parent=1 // pred_check_branch
      %54 = sbr.rel (0) target = $region25
    $region24: #{tpu_custom_call.1} parent=1 // pred_region
      %55 = dma.done [#allocation7], 384
    $region25: #{tpu_custom_call.1} parent=1 // pred_fallthru
      _
    %v56 = vld [vmem:[#allocation3] sm:$0xff]
    %v57 = vld [vmem:[#allocation3 + $0x8] sm:$0xff]
    %v58 = vld [vmem:[#allocation6] sm:$0xff]
    %v59 = vld [vmem:[#allocation6 + $0x8] sm:$0xff]
    %vm60 = vcmask 130048
    %v62 = vsel %vm60, %v56, 0
    %v65 = vsel %vm60, %v57, 0
    %67 = vmatprep.subr.mxu0 0.0
    %68 = vmatpush1.msra.mxu0 %v58
    %69 = vmatprep.subr.mxu0 0.0
    %70 = vmatpush1.msra.mxu0 %v59
    %71 = vmatprep.subr.mxu0 0.0
    %72 = vmatpush1.msra.mxu0 0.0
    %73 = vmatprep.subr.mxu0 0.0
    %74 = vmatpush1.msra.mxu0 0.0
    %75 = vmatprep.subr.mxu0 0.0
    %76 = vmatpush1.msra.mxu0 0.0
    %77 = vmatprep.subr.mxu0 0.0
    %78 = vmatpush1.msra.mxu0 0.0
    %79 = vmatprep.subr.mxu0 0.0
    %80 = vmatpush1.msra.mxu0 0.0
    %81 = vmatprep.subr.mxu0 0.0
    %82 = vmatpush1.msra.mxu0 0.0
    %83 = vmatprep.subr.mxu0 0.0
    %84 = vmatpush1.msra.mxu0 0.0
    %85 = vmatprep.subr.mxu0 0.0
    %86 = vmatpush1.msra.mxu0 0.0
    %87 = vmatprep.subr.mxu0 0.0
    %88 = vmatpush1.msra.mxu0 0.0
    %89 = vmatprep.subr.mxu0 0.0
    %90 = vmatpush1.msra.mxu0 0.0
    %91 = vmatprep.subr.mxu0 0.0
    %92 = vmatpush1.msra.mxu0 0.0
    %93 = vmatprep.subr.mxu0 0.0
    %94 = vmatpush1.msra.mxu0 0.0
    %95 = vmatprep.subr.mxu0 0.0
    %96 = vmatpush1.msra.mxu0 0.0
    %97 = vmatprep.subr.mxu0 0.0
    %98 = vmatpush1.msra.mxu0 0.0
    %99 = vmatprep.subr.mxu0 0.0
    %100 = vmatpush1.msra.mxu0 0.0
    %101 = vmatprep.subr.mxu0 0.0
    %102 = vmatpush1.msra.mxu0 0.0
    %103 = vmatprep.subr.mxu0 0.0
    %104 = vmatpush1.msra.mxu0 0.0
    %105 = vmatprep.subr.mxu0 0.0
    %106 = vmatpush1.msra.mxu0 0.0
    %107 = vmatprep.subr.mxu0 0.0
    %108 = vmatpush1.msra.mxu0 0.0
    %109 = vmatprep.subr.mxu0 0.0
    %110 = vmatpush1.msra.mxu0 0.0
    %111 = vmatprep.subr.mxu0 0.0
    %112 = vmatpush1.msra.mxu0 0.0
    %113 = vmatprep.subr.mxu0 0.0
    %114 = vmatpush1.msra.mxu0 0.0
    %115 = vmatprep.subr.mxu0 0.0
    %116 = vmatpush1.msra.mxu0 0.0
    %117 = vmatprep.subr.mxu0 0.0
    %118 = vmatpush1.msra.mxu0 0.0
    %119 = vmatprep.subr.mxu0 0.0
    %120 = vmatpush1.msra.mxu0 0.0
    %121 = vmatprep.subr.mxu0 0.0
    %122 = vmatpush1.msra.mxu0 0.0
    %123 = vmatprep.subr.mxu0 0.0
    %124 = vmatpush1.msra.mxu0 0.0
    %125 = vmatprep.subr.mxu0 0.0
    %126 = vmatpush1.msra.mxu0 0.0
    %127 = vmatprep.subr.mxu0 0.0
    %128 = vmatpush1.msra.mxu0 0.0
    %129 = vmatprep.subr.mxu0 0.0
    %130 = vmatpush1.msra.mxu0 0.0
    %131 = vmatprep.mubr.f32.mxu0 0.0
    %132 = vmatmul.mubr.f32.gmra.mrb[0].mxu0 %v62
    %v133 = vpop.f32.mrb[0].mxu0
    %v134 = vadd.f32 0.0, %v133
    %v135 = vpop.f32.mrb[0].mxu0
    %136 = vmatprep.mubr.f32.mxu0 0.0
    %137 = vmatmul.mubr.f32.gmra.mrb[0].mxu0 %v65
    %v138 = vpop.f32.mrb[0].mxu0
    %v139 = vadd.f32 0.0, %v138
    %v140 = vpop.f32.mrb[0].mxu0
    %141 = vdwg.mxu0
    %v142 = vld [vmem:[#allocation8] sm:$0xff]
    %v143 = vadd.f32 %v134, %v142
    %v144 = vadd.f32 %v139, %v142
    %v145 = vld [vmem:[#allocation6 + $0x10] sm:$0xff]
    %v146 = vld [vmem:[#allocation6 + $0x18] sm:$0xff]
    %v147 = vld [vmem:[#allocation6 + $0x20] sm:$0xff]
    %v148 = vld [vmem:[#allocation6 + $0x28] sm:$0xff]
    %v149 = vld [vmem:[#allocation8 + $0x8] sm:$0x1]
    %v150 = vlaneseq
    %v151 = vshrl.u32 %v150, 7
    %v152 = vsub.s32 0, %v151
    %v153 = vrot.slane %v149, %v152
    %vm154 = vcmask 261120
    %v156 = vsel %vm154, %v143, 0
    %v159 = vsel %vm154, %v144, 0
    %161 = vmatprep.subr.mxu0 0.0
    %162 = vmatpush1.msra.mxu0 %v145
    %163 = vmatprep.subr.mxu0 0.0
    %164 = vmatpush1.msra.mxu0 %v146
    %165 = vmatprep.subr.mxu0 0.0
    %166 = vmatpush1.msra.mxu0 %v147
    %167 = vmatprep.subr.mxu0 0.0
    %168 = vmatpush1.msra.mxu0 %v148
    %169 = vmatprep.subr.mxu0 0.0
    %170 = vmatpush1.msra.mxu0 0.0
    %171 = vmatprep.subr.mxu0 0.0
    %172 = vmatpush1.msra.mxu0 0.0
    %173 = vmatprep.subr.mxu0 0.0
    %174 = vmatpush1.msra.mxu0 0.0
    %175 = vmatprep.subr.mxu0 0.0
    %176 = vmatpush1.msra.mxu0 0.0
    %177 = vmatprep.subr.mxu0 0.0
    %178 = vmatpush1.msra.mxu0 0.0
    %179 = vmatprep.subr.mxu0 0.0
    %180 = vmatpush1.msra.mxu0 0.0
    %181 = vmatprep.subr.mxu0 0.0
    %182 = vmatpush1.msra.mxu0 0.0
    %183 = vmatprep.subr.mxu0 0.0
    %184 = vmatpush1.msra.mxu0 0.0
    %185 = vmatprep.subr.mxu0 0.0
    %186 = vmatpush1.msra.mxu0 0.0
    %187 = vmatprep.subr.mxu0 0.0
    %188 = vmatpush1.msra.mxu0 0.0
    %189 = vmatprep.subr.mxu0 0.0
    %190 = vmatpush1.msra.mxu0 0.0
    %191 = vmatprep.subr.mxu0 0.0
    %192 = vmatpush1.msra.mxu0 0.0
    %193 = vmatprep.subr.mxu0 0.0
    %194 = vmatpush1.msra.mxu0 0.0
    %195 = vmatprep.subr.mxu0 0.0
    %196 = vmatpush1.msra.mxu0 0.0
    %197 = vmatprep.subr.mxu0 0.0
    %198 = vmatpush1.msra.mxu0 0.0
    %199 = vmatprep.subr.mxu0 0.0
    %200 = vmatpush1.msra.mxu0 0.0
    %201 = vmatprep.subr.mxu0 0.0
    %202 = vmatpush1.msra.mxu0 0.0
    %203 = vmatprep.subr.mxu0 0.0
    %204 = vmatpush1.msra.mxu0 0.0
    %205 = vmatprep.subr.mxu0 0.0
    %206 = vmatpush1.msra.mxu0 0.0
    %207 = vmatprep.subr.mxu0 0.0
    %208 = vmatpush1.msra.mxu0 0.0
    %209 = vmatprep.subr.mxu0 0.0
    %210 = vmatpush1.msra.mxu0 0.0
    %211 = vmatprep.subr.mxu0 0.0
    %212 = vmatpush1.msra.mxu0 0.0
    %213 = vmatprep.subr.mxu0 0.0
    %214 = vmatpush1.msra.mxu0 0.0
    %215 = vmatprep.subr.mxu0 0.0
    %216 = vmatpush1.msra.mxu0 0.0
    %217 = vmatprep.subr.mxu0 0.0
    %218 = vmatpush1.msra.mxu0 0.0
    %219 = vmatprep.subr.mxu0 0.0
    %220 = vmatpush1.msra.mxu0 0.0
    %221 = vmatprep.subr.mxu0 0.0
    %222 = vmatpush1.msra.mxu0 0.0
    %223 = vmatprep.subr.mxu0 0.0
    %224 = vmatpush1.msra.mxu0 0.0
    %225 = vmatprep.mubr.f32.mxu0 0.0
    %226 = vmatmul.mubr.f32.gmra.mrb[0].mxu0 %v156
    %v227 = vpop.f32.mrb[0].mxu0
    %v228 = vadd.f32 %v153, %v227
    %v229 = vpop.f32.mrb[0].mxu0
    %230 = vmatprep.mubr.f32.mxu0 0.0
    %231 = vmatmul.mubr.f32.gmra.mrb[0].mxu0 %v159
    %v232 = vpop.f32.mrb[0].mxu0
    %v233 = vadd.f32 %v153, %v232
    %v234 = vpop.f32.mrb[0].mxu0
    %235 = vdwg.mxu0
    %237 = vrot.lane.b32.xlu0 %v228, 96
    %v238 = vpop.permute.xlu0 %237
    %vm239 = vcmask 64512
    %v240 = vsel %vm239, %v228, 0
    %v242 = vsel %vm239, %v238, 0
    %244 = vmatprep.subr.mxu0 0.0
    %245 = vmatpush1.xpose.msra.mxu0 %v242
    %246 = vmatprep.subr.mxu0 0.0
    %247 = vmatpush1.xpose.msra.mxu0 0.0
    %248 = vmatprep.subr.mxu0 0.0
    %249 = vmatpush1.xpose.msra.mxu0 0.0
    %250 = vmatprep.subr.mxu0 0.0
    %251 = vmatpush1.xpose.msra.mxu0 0.0
    %252 = vmatprep.subr.mxu0 0.0
    %253 = vmatpush1.xpose.msra.mxu0 0.0
    %254 = vmatprep.subr.mxu0 0.0
    %255 = vmatpush1.xpose.msra.mxu0 0.0
    %256 = vmatprep.subr.mxu0 0.0
    %257 = vmatpush1.xpose.msra.mxu0 0.0
    %258 = vmatprep.subr.mxu0 0.0
    %259 = vmatpush1.xpose.msra.mxu0 0.0
    %260 = vmatprep.subr.mxu0 0.0
    %261 = vmatpush1.xpose.msra.mxu0 0.0
    %262 = vmatprep.subr.mxu0 0.0
    %263 = vmatpush1.xpose.msra.mxu0 0.0
    %264 = vmatprep.subr.mxu0 0.0
    %265 = vmatpush1.xpose.msra.mxu0 0.0
    %266 = vmatprep.subr.mxu0 0.0
    %267 = vmatpush1.xpose.msra.mxu0 0.0
    %268 = vmatprep.subr.mxu0 0.0
    %269 = vmatpush1.xpose.msra.mxu0 0.0
    %270 = vmatprep.subr.mxu0 0.0
    %271 = vmatpush1.xpose.msra.mxu0 0.0
    %272 = vmatprep.subr.mxu0 0.0
    %273 = vmatpush1.xpose.msra.mxu0 0.0
    %274 = vmatprep.subr.mxu0 0.0
    %275 = vmatpush1.xpose.msra.mxu0 0.0
    %276 = vmatprep.subr.mxu0 0.0
    %277 = vmatpush1.xpose.msra.mxu0 0.0
    %278 = vmatprep.subr.mxu0 0.0
    %279 = vmatpush1.xpose.msra.mxu0 0.0
    %280 = vmatprep.subr.mxu0 0.0
    %281 = vmatpush1.xpose.msra.mxu0 0.0
    %282 = vmatprep.subr.mxu0 0.0
    %283 = vmatpush1.xpose.msra.mxu0 0.0
    %284 = vmatprep.subr.mxu0 0.0
    %285 = vmatpush1.xpose.msra.mxu0 0.0
    %286 = vmatprep.subr.mxu0 0.0
    %287 = vmatpush1.xpose.msra.mxu0 0.0
    %288 = vmatprep.subr.mxu0 0.0
    %289 = vmatpush1.xpose.msra.mxu0 0.0
    %290 = vmatprep.subr.mxu0 0.0
    %291 = vmatpush1.xpose.msra.mxu0 0.0
    %292 = vmatprep.subr.mxu0 0.0
    %293 = vmatpush1.xpose.msra.mxu0 0.0
    %294 = vmatprep.subr.mxu0 0.0
    %295 = vmatpush1.xpose.msra.mxu0 0.0
    %296 = vmatprep.subr.mxu0 0.0
    %297 = vmatpush1.xpose.msra.mxu0 0.0
    %298 = vmatprep.subr.mxu0 0.0
    %299 = vmatpush1.xpose.msra.mxu0 0.0
    %300 = vmatprep.subr.mxu0 0.0
    %301 = vmatpush1.xpose.msra.mxu0 0.0
    %302 = vmatprep.subr.mxu0 0.0
    %303 = vmatpush1.xpose.msra.mxu0 0.0
    %304 = vmatprep.subr.mxu0 0.0
    %305 = vmatpush1.xpose.msra.mxu0 0.0
    %306 = vmatprep.subr.mxu0 0.0
    %307 = vmatpush1.xpose.msra.mxu0 0.0
    %308 = vmatprep.mubr.f32.mxu0 0.0
    %309 = vmatmul.mubr.f32.gmra.mrb[0].mxu0 %v240
    %v310 = vpop.f32.mrb[0].mxu0
    %v311 = vadd.f32 0.0, %v310
    %v312 = vpop.f32.mrb[0].mxu0
    %313 = vdwg.mxu0
    %315 = vrot.lane.b32.xlu0 %v233, 96
    %v316 = vpop.permute.xlu0 %315
    %v317 = vsel %vm239, %v233, 0
    %v319 = vsel %vm239, %v316, 0
    %321 = vmatprep.subr.mxu0 0.0
    %322 = vmatpush1.xpose.msra.mxu0 %v319
    %323 = vmatprep.subr.mxu0 0.0
    %324 = vmatpush1.xpose.msra.mxu0 0.0
    %325 = vmatprep.subr.mxu0 0.0
    %326 = vmatpush1.xpose.msra.mxu0 0.0
    %327 = vmatprep.subr.mxu0 0.0
    %328 = vmatpush1.xpose.msra.mxu0 0.0
    %329 = vmatprep.subr.mxu0 0.0
    %330 = vmatpush1.xpose.msra.mxu0 0.0
    %331 = vmatprep.subr.mxu0 0.0
    %332 = vmatpush1.xpose.msra.mxu0 0.0
    %333 = vmatprep.subr.mxu0 0.0
    %334 = vmatpush1.xpose.msra.mxu0 0.0
    %335 = vmatprep.subr.mxu0 0.0
    %336 = vmatpush1.xpose.msra.mxu0 0.0
    %337 = vmatprep.subr.mxu0 0.0
    %338 = vmatpush1.xpose.msra.mxu0 0.0
    %339 = vmatprep.subr.mxu0 0.0
    %340 = vmatpush1.xpose.msra.mxu0 0.0
    %341 = vmatprep.subr.mxu0 0.0
    %342 = vmatpush1.xpose.msra.mxu0 0.0
    %343 = vmatprep.subr.mxu0 0.0
    %344 = vmatpush1.xpose.msra.mxu0 0.0
    %345 = vmatprep.subr.mxu0 0.0
    %346 = vmatpush1.xpose.msra.mxu0 0.0
    %347 = vmatprep.subr.mxu0 0.0
    %348 = vmatpush1.xpose.msra.mxu0 0.0
    %349 = vmatprep.subr.mxu0 0.0
    %350 = vmatpush1.xpose.msra.mxu0 0.0
    %351 = vmatprep.subr.mxu0 0.0
    %352 = vmatpush1.xpose.msra.mxu0 0.0
    %353 = vmatprep.subr.mxu0 0.0
    %354 = vmatpush1.xpose.msra.mxu0 0.0
    %355 = vmatprep.subr.mxu0 0.0
    %356 = vmatpush1.xpose.msra.mxu0 0.0
    %357 = vmatprep.subr.mxu0 0.0
    %358 = vmatpush1.xpose.msra.mxu0 0.0
    %359 = vmatprep.subr.mxu0 0.0
    %360 = vmatpush1.xpose.msra.mxu0 0.0
    %361 = vmatprep.subr.mxu0 0.0
    %362 = vmatpush1.xpose.msra.mxu0 0.0
    %363 = vmatprep.subr.mxu0 0.0
    %364 = vmatpush1.xpose.msra.mxu0 0.0
    %365 = vmatprep.subr.mxu0 0.0
    %366 = vmatpush1.xpose.msra.mxu0 0.0
    %367 = vmatprep.subr.mxu0 0.0
    %368 = vmatpush1.xpose.msra.mxu0 0.0
    %369 = vmatprep.subr.mxu0 0.0
    %370 = vmatpush1.xpose.msra.mxu0 0.0
    %371 = vmatprep.subr.mxu0 0.0
    %372 = vmatpush1.xpose.msra.mxu0 0.0
    %373 = vmatprep.subr.mxu0 0.0
    %374 = vmatpush1.xpose.msra.mxu0 0.0
    %375 = vmatprep.subr.mxu0 0.0
    %376 = vmatpush1.xpose.msra.mxu0 0.0
    %377 = vmatprep.subr.mxu0 0.0
    %378 = vmatpush1.xpose.msra.mxu0 0.0
    %379 = vmatprep.subr.mxu0 0.0
    %380 = vmatpush1.xpose.msra.mxu0 0.0
    %381 = vmatprep.subr.mxu0 0.0
    %382 = vmatpush1.xpose.msra.mxu0 0.0
    %383 = vmatprep.subr.mxu0 0.0
    %384 = vmatpush1.xpose.msra.mxu0 0.0
    %385 = vmatprep.mubr.f32.mxu0 0.0
    %386 = vmatmul.mubr.f32.gmra.mrb[0].mxu0 %v317
    %v387 = vpop.f32.mrb[0].mxu0
    %v388 = vadd.f32 0.0, %v387
    %v389 = vpop.f32.mrb[0].mxu0
    %390 = vdwg.mxu0
    %v391 = vsel %vm239, %v311, -inf
    %392 = vmax.xlane.f32.xlu0 %v391
    %v393 = vpop.xlane.xlu0 %392
    %v394 = vsel %vm239, %v388, -inf
    %395 = vmax.xlane.f32.xlu0 %v394
    %v396 = vpop.xlane.xlu0 %395
    %v397 = vsub.f32 %v311, %v393
    %v398 = vsub.f32 %v388, %v396
    %v399 = vmul.f32 %v397, 1.442695
    %v400 = vpow.pop %v399
    %v401 = vmul.f32 %v398, 1.442695
    %v402 = vpow.pop %v401
    %v403 = vsel %vm239, %v400, 0.0
    %404 = vadd.xlane.f32.xlu0 %v403
    %v405 = vpop.xlane.xlu0 %404
    %v406 = vsel %vm239, %v402, 0.0
    %407 = vadd.xlane.f32.xlu0 %v406
    %v408 = vpop.xlane.xlu0 %407
    %v409 = vrcp.pop %v405
    %v410 = vrcp.pop %v408
    %v411 = vmul.f32 %v400, %v409
    %v412 = vmul.f32 %v402, %v410
    %413 = vrot.lane.b32.xlu0 %v228, 64
    %v414 = vpop.permute.xlu0 %413
    %v417 = vsel %vm239, %v411, 0
    %419 = vmatprep.subr.mxu0 0.0
    %420 = vmatpush1.msra.mxu0 %v414
    %421 = vmatprep.subr.mxu0 0.0
    %422 = vmatpush1.msra.mxu0 0.0
    %423 = vmatprep.subr.mxu0 0.0
    %424 = vmatpush1.msra.mxu0 0.0
    %425 = vmatprep.subr.mxu0 0.0
    %426 = vmatpush1.msra.mxu0 0.0
    %427 = vmatprep.subr.mxu0 0.0
    %428 = vmatpush1.msra.mxu0 0.0
    %429 = vmatprep.subr.mxu0 0.0
    %430 = vmatpush1.msra.mxu0 0.0
    %431 = vmatprep.subr.mxu0 0.0
    %432 = vmatpush1.msra.mxu0 0.0
    %433 = vmatprep.subr.mxu0 0.0
    %434 = vmatpush1.msra.mxu0 0.0
    %435 = vmatprep.subr.mxu0 0.0
    %436 = vmatpush1.msra.mxu0 0.0
    %437 = vmatprep.subr.mxu0 0.0
    %438 = vmatpush1.msra.mxu0 0.0
    %439 = vmatprep.subr.mxu0 0.0
    %440 = vmatpush1.msra.mxu0 0.0
    %441 = vmatprep.subr.mxu0 0.0
    %442 = vmatpush1.msra.mxu0 0.0
    %443 = vmatprep.subr.mxu0 0.0
    %444 = vmatpush1.msra.mxu0 0.0
    %445 = vmatprep.subr.mxu0 0.0
    %446 = vmatpush1.msra.mxu0 0.0
    %447 = vmatprep.subr.mxu0 0.0
    %448 = vmatpush1.msra.mxu0 0.0
    %449 = vmatprep.subr.mxu0 0.0
    %450 = vmatpush1.msra.mxu0 0.0
    %451 = vmatprep.subr.mxu0 0.0
    %452 = vmatpush1.msra.mxu0 0.0
    %453 = vmatprep.subr.mxu0 0.0
    %454 = vmatpush1.msra.mxu0 0.0
    %455 = vmatprep.subr.mxu0 0.0
    %456 = vmatpush1.msra.mxu0 0.0
    %457 = vmatprep.subr.mxu0 0.0
    %458 = vmatpush1.msra.mxu0 0.0
    %459 = vmatprep.subr.mxu0 0.0
    %460 = vmatpush1.msra.mxu0 0.0
    %461 = vmatprep.subr.mxu0 0.0
    %462 = vmatpush1.msra.mxu0 0.0
    %463 = vmatprep.subr.mxu0 0.0
    %464 = vmatpush1.msra.mxu0 0.0
    %465 = vmatprep.subr.mxu0 0.0
    %466 = vmatpush1.msra.mxu0 0.0
    %467 = vmatprep.subr.mxu0 0.0
    %468 = vmatpush1.msra.mxu0 0.0
    %469 = vmatprep.subr.mxu0 0.0
    %470 = vmatpush1.msra.mxu0 0.0
    %471 = vmatprep.subr.mxu0 0.0
    %472 = vmatpush1.msra.mxu0 0.0
    %473 = vmatprep.subr.mxu0 0.0
    %474 = vmatpush1.msra.mxu0 0.0
    %475 = vmatprep.subr.mxu0 0.0
    %476 = vmatpush1.msra.mxu0 0.0
    %477 = vmatprep.subr.mxu0 0.0
    %478 = vmatpush1.msra.mxu0 0.0
    %479 = vmatprep.subr.mxu0 0.0
    %480 = vmatpush1.msra.mxu0 0.0
    %481 = vmatprep.subr.mxu0 0.0
    %482 = vmatpush1.msra.mxu0 0.0
    %483 = vmatprep.mubr.f32.mxu0 0.0
    %484 = vmatmul.mubr.f32.gmra.mrb[0].mxu0 %v417
    %v485 = vpop.f32.mrb[0].mxu0
    %v486 = vadd.f32 0.0, %v485
    %v487 = vpop.f32.mrb[0].mxu0
    %488 = vdwg.mxu0
    %489 = vrot.lane.b32.xlu0 %v233, 64
    %v490 = vpop.permute.xlu0 %489
    %v493 = vsel %vm239, %v412, 0
    %495 = vmatprep.subr.mxu0 0.0
    %496 = vmatpush1.msra.mxu0 %v490
    %497 = vmatprep.subr.mxu0 0.0
    %498 = vmatpush1.msra.mxu0 0.0
    %499 = vmatprep.subr.mxu0 0.0
    %500 = vmatpush1.msra.mxu0 0.0
    %501 = vmatprep.subr.mxu0 0.0
    %502 = vmatpush1.msra.mxu0 0.0
    %503 = vmatprep.subr.mxu0 0.0
    %504 = vmatpush1.msra.mxu0 0.0
    %505 = vmatprep.subr.mxu0 0.0
    %506 = vmatpush1.msra.mxu0 0.0
    %507 = vmatprep.subr.mxu0 0.0
    %508 = vmatpush1.msra.mxu0 0.0
    %509 = vmatprep.subr.mxu0 0.0
    %510 = vmatpush1.msra.mxu0 0.0
    %511 = vmatprep.subr.mxu0 0.0
    %512 = vmatpush1.msra.mxu0 0.0
    %513 = vmatprep.subr.mxu0 0.0
    %514 = vmatpush1.msra.mxu0 0.0
    %515 = vmatprep.subr.mxu0 0.0
    %516 = vmatpush1.msra.mxu0 0.0
    %517 = vmatprep.subr.mxu0 0.0
    %518 = vmatpush1.msra.mxu0 0.0
    %519 = vmatprep.subr.mxu0 0.0
    %520 = vmatpush1.msra.mxu0 0.0
    %521 = vmatprep.subr.mxu0 0.0
    %522 = vmatpush1.msra.mxu0 0.0
    %523 = vmatprep.subr.mxu0 0.0
    %524 = vmatpush1.msra.mxu0 0.0
    %525 = vmatprep.subr.mxu0 0.0
    %526 = vmatpush1.msra.mxu0 0.0
    %527 = vmatprep.subr.mxu0 0.0
    %528 = vmatpush1.msra.mxu0 0.0
    %529 = vmatprep.subr.mxu0 0.0
    %530 = vmatpush1.msra.mxu0 0.0
    %531 = vmatprep.subr.mxu0 0.0
    %532 = vmatpush1.msra.mxu0 0.0
    %533 = vmatprep.subr.mxu0 0.0
    %534 = vmatpush1.msra.mxu0 0.0
    %535 = vmatprep.subr.mxu0 0.0
    %536 = vmatpush1.msra.mxu0 0.0
    %537 = vmatprep.subr.mxu0 0.0
    %538 = vmatpush1.msra.mxu0 0.0
    %539 = vmatprep.subr.mxu0 0.0
    %540 = vmatpush1.msra.mxu0 0.0
    %541 = vmatprep.subr.mxu0 0.0
    %542 = vmatpush1.msra.mxu0 0.0
    %543 = vmatprep.subr.mxu0 0.0
    %544 = vmatpush1.msra.mxu0 0.0
    %545 = vmatprep.subr.mxu0 0.0
    %546 = vmatpush1.msra.mxu0 0.0
    %547 = vmatprep.subr.mxu0 0.0
    %548 = vmatpush1.msra.mxu0 0.0
    %549 = vmatprep.subr.mxu0 0.0
    %550 = vmatpush1.msra.mxu0 0.0
    %551 = vmatprep.subr.mxu0 0.0
    %552 = vmatpush1.msra.mxu0 0.0
    %553 = vmatprep.subr.mxu0 0.0
    %554 = vmatpush1.msra.mxu0 0.0
    %555 = vmatprep.subr.mxu0 0.0
    %556 = vmatpush1.msra.mxu0 0.0
    %557 = vmatprep.subr.mxu0 0.0
    %558 = vmatpush1.msra.mxu0 0.0
    %559 = vmatprep.mubr.f32.mxu0 0.0
    %560 = vmatmul.mubr.f32.gmra.mrb[0].mxu0 %v493
    %v561 = vpop.f32.mrb[0].mxu0
    %v562 = vadd.f32 0.0, %v561
    %v563 = vpop.f32.mrb[0].mxu0
    %564 = vdwg.mxu0
    %565 = vst.msk [vmem:[#allocation2] sm:$0xff] %vm239, %v486
    %566 = vst.msk [vmem:[#allocation2 + $0x8] sm:$0xff] %vm239, %v562
    %567 = vrot.lane.b32.xlu0 %v228, 120
    %v568 = vpop.permute.xlu0 %567
    %569 = vrot.lane.b32.xlu0 %v228, 88
    %v570 = vpop.permute.xlu0 %569
    %v571 = vsel %vm239, %v568, 0
    %v573 = vsel %vm239, %v570, 0
    %575 = vmatprep.subr.mxu0 0.0
    %576 = vmatpush1.xpose.msra.mxu0 %v573
    %577 = vmatprep.subr.mxu0 0.0
    %578 = vmatpush1.xpose.msra.mxu0 0.0
    %579 = vmatprep.subr.mxu0 0.0
    %580 = vmatpush1.xpose.msra.mxu0 0.0
    %581 = vmatprep.subr.mxu0 0.0
    %582 = vmatpush1.xpose.msra.mxu0 0.0
    %583 = vmatprep.subr.mxu0 0.0
    %584 = vmatpush1.xpose.msra.mxu0 0.0
    %585 = vmatprep.subr.mxu0 0.0
    %586 = vmatpush1.xpose.msra.mxu0 0.0
    %587 = vmatprep.subr.mxu0 0.0
    %588 = vmatpush1.xpose.msra.mxu0 0.0
    %589 = vmatprep.subr.mxu0 0.0
    %590 = vmatpush1.xpose.msra.mxu0 0.0
    %591 = vmatprep.subr.mxu0 0.0
    %592 = vmatpush1.xpose.msra.mxu0 0.0
    %593 = vmatprep.subr.mxu0 0.0
    %594 = vmatpush1.xpose.msra.mxu0 0.0
    %595 = vmatprep.subr.mxu0 0.0
    %596 = vmatpush1.xpose.msra.mxu0 0.0
    %597 = vmatprep.subr.mxu0 0.0
    %598 = vmatpush1.xpose.msra.mxu0 0.0
    %599 = vmatprep.subr.mxu0 0.0
    %600 = vmatpush1.xpose.msra.mxu0 0.0
    %601 = vmatprep.subr.mxu0 0.0
    %602 = vmatpush1.xpose.msra.mxu0 0.0
    %603 = vmatprep.subr.mxu0 0.0
    %604 = vmatpush1.xpose.msra.mxu0 0.0
    %605 = vmatprep.subr.mxu0 0.0
    %606 = vmatpush1.xpose.msra.mxu0 0.0
    %607 = vmatprep.subr.mxu0 0.0
    %608 = vmatpush1.xpose.msra.mxu0 0.0
    %609 = vmatprep.subr.mxu0 0.0
    %610 = vmatpush1.xpose.msra.mxu0 0.0
    %611 = vmatprep.subr.mxu0 0.0
    %612 = vmatpush1.xpose.msra.mxu0 0.0
    %613 = vmatprep.subr.mxu0 0.0
    %614 = vmatpush1.xpose.msra.mxu0 0.0
    %615 = vmatprep.subr.mxu0 0.0
    %616 = vmatpush1.xpose.msra.mxu0 0.0
    %617 = vmatprep.subr.mxu0 0.0
    %618 = vmatpush1.xpose.msra.mxu0 0.0
    %619 = vmatprep.subr.mxu0 0.0
    %620 = vmatpush1.xpose.msra.mxu0 0.0
    %621 = vmatprep.subr.mxu0 0.0
    %622 = vmatpush1.xpose.msra.mxu0 0.0
    %623 = vmatprep.subr.mxu0 0.0
    %624 = vmatpush1.xpose.msra.mxu0 0.0
    %625 = vmatprep.subr.mxu0 0.0
    %626 = vmatpush1.xpose.msra.mxu0 0.0
    %627 = vmatprep.subr.mxu0 0.0
    %628 = vmatpush1.xpose.msra.mxu0 0.0
    %629 = vmatprep.subr.mxu0 0.0
    %630 = vmatpush1.xpose.msra.mxu0 0.0
    %631 = vmatprep.subr.mxu0 0.0
    %632 = vmatpush1.xpose.msra.mxu0 0.0
    %633 = vmatprep.subr.mxu0 0.0
    %634 = vmatpush1.xpose.msra.mxu0 0.0
    %635 = vmatprep.subr.mxu0 0.0
    %636 = vmatpush1.xpose.msra.mxu0 0.0
    %637 = vmatprep.subr.mxu0 0.0
    %638 = vmatpush1.xpose.msra.mxu0 0.0
    %639 = vmatprep.mubr.f32.mxu0 0.0
    %640 = vmatmul.mubr.f32.gmra.mrb[0].mxu0 %v571
    %v641 = vpop.f32.mrb[0].mxu0
    %v642 = vadd.f32 0.0, %v641
    %v643 = vpop.f32.mrb[0].mxu0
    %644 = vdwg.mxu0
    %645 = vrot.lane.b32.xlu0 %v233, 120
    %v646 = vpop.permute.xlu0 %645
    %647 = vrot.lane.b32.xlu0 %v233, 88
    %v648 = vpop.permute.xlu0 %647
    %v649 = vsel %vm239, %v646, 0
    %v651 = vsel %vm239, %v648, 0
    %653 = vmatprep.subr.mxu0 0.0
    %654 = vmatpush1.xpose.msra.mxu0 %v651
    %655 = vmatprep.subr.mxu0 0.0
    %656 = vmatpush1.xpose.msra.mxu0 0.0
    %657 = vmatprep.subr.mxu0 0.0
    %658 = vmatpush1.xpose.msra.mxu0 0.0
    %659 = vmatprep.subr.mxu0 0.0
    %660 = vmatpush1.xpose.msra.mxu0 0.0
    %661 = vmatprep.subr.mxu0 0.0
    %662 = vmatpush1.xpose.msra.mxu0 0.0
    %663 = vmatprep.subr.mxu0 0.0
    %664 = vmatpush1.xpose.msra.mxu0 0.0
    %665 = vmatprep.subr.mxu0 0.0
    %666 = vmatpush1.xpose.msra.mxu0 0.0
    %667 = vmatprep.subr.mxu0 0.0
    %668 = vmatpush1.xpose.msra.mxu0 0.0
    %669 = vmatprep.subr.mxu0 0.0
    %670 = vmatpush1.xpose.msra.mxu0 0.0
    %671 = vmatprep.subr.mxu0 0.0
    %672 = vmatpush1.xpose.msra.mxu0 0.0
    %673 = vmatprep.subr.mxu0 0.0
    %674 = vmatpush1.xpose.msra.mxu0 0.0
    %675 = vmatprep.subr.mxu0 0.0
    %676 = vmatpush1.xpose.msra.mxu0 0.0
    %677 = vmatprep.subr.mxu0 0.0
    %678 = vmatpush1.xpose.msra.mxu0 0.0
    %679 = vmatprep.subr.mxu0 0.0
    %680 = vmatpush1.xpose.msra.mxu0 0.0
    %681 = vmatprep.subr.mxu0 0.0
    %682 = vmatpush1.xpose.msra.mxu0 0.0
    %683 = vmatprep.subr.mxu0 0.0
    %684 = vmatpush1.xpose.msra.mxu0 0.0
    %685 = vmatprep.subr.mxu0 0.0
    %686 = vmatpush1.xpose.msra.mxu0 0.0
    %687 = vmatprep.subr.mxu0 0.0
    %688 = vmatpush1.xpose.msra.mxu0 0.0
    %689 = vmatprep.subr.mxu0 0.0
    %690 = vmatpush1.xpose.msra.mxu0 0.0
    %691 = vmatprep.subr.mxu0 0.0
    %692 = vmatpush1.xpose.msra.mxu0 0.0
    %693 = vmatprep.subr.mxu0 0.0
    %694 = vmatpush1.xpose.msra.mxu0 0.0
    %695 = vmatprep.subr.mxu0 0.0
    %696 = vmatpush1.xpose.msra.mxu0 0.0
    %697 = vmatprep.subr.mxu0 0.0
    %698 = vmatpush1.xpose.msra.mxu0 0.0
    %699 = vmatprep.subr.mxu0 0.0
    %700 = vmatpush1.xpose.msra.mxu0 0.0
    %701 = vmatprep.subr.mxu0 0.0
    %702 = vmatpush1.xpose.msra.mxu0 0.0
    %703 = vmatprep.subr.mxu0 0.0
    %704 = vmatpush1.xpose.msra.mxu0 0.0
    %705 = vmatprep.subr.mxu0 0.0
    %706 = vmatpush1.xpose.msra.mxu0 0.0
    %707 = vmatprep.subr.mxu0 0.0
    %708 = vmatpush1.xpose.msra.mxu0 0.0
    %709 = vmatprep.subr.mxu0 0.0
    %710 = vmatpush1.xpose.msra.mxu0 0.0
    %711 = vmatprep.subr.mxu0 0.0
    %712 = vmatpush1.xpose.msra.mxu0 0.0
    %713 = vmatprep.subr.mxu0 0.0
    %714 = vmatpush1.xpose.msra.mxu0 0.0
    %715 = vmatprep.subr.mxu0 0.0
    %716 = vmatpush1.xpose.msra.mxu0 0.0
    %717 = vmatprep.mubr.f32.mxu0 0.0
    %718 = vmatmul.mubr.f32.gmra.mrb[0].mxu0 %v649
    %v719 = vpop.f32.mrb[0].mxu0
    %v720 = vadd.f32 0.0, %v719
    %v721 = vpop.f32.mrb[0].mxu0
    %722 = vdwg.mxu0
    %v723 = vsel %vm239, %v642, -inf
    %724 = vmax.xlane.f32.xlu0 %v723
    %v725 = vpop.xlane.xlu0 %724
    %v726 = vsel %vm239, %v720, -inf
    %727 = vmax.xlane.f32.xlu0 %v726
    %v728 = vpop.xlane.xlu0 %727
    %v729 = vsub.f32 %v642, %v725
    %v730 = vsub.f32 %v720, %v728
    %v731 = vmul.f32 %v729, 1.442695
    %v732 = vpow.pop %v731
    %v733 = vmul.f32 %v730, 1.442695
    %v734 = vpow.pop %v733
    %v735 = vsel %vm239, %v732, 0.0
    %736 = vadd.xlane.f32.xlu0 %v735
    %v737 = vpop.xlane.xlu0 %736
    %v738 = vsel %vm239, %v734, 0.0
    %739 = vadd.xlane.f32.xlu0 %v738
    %v740 = vpop.xlane.xlu0 %739
    %v741 = vrcp.pop %v737
    %v742 = vrcp.pop %v740
    %v743 = vmul.f32 %v732, %v741
    %v744 = vmul.f32 %v734, %v742
    %745 = vrot.lane.b32.xlu0 %v228, 56
    %v746 = vpop.permute.xlu0 %745
    %v749 = vsel %vm239, %v743, 0
    %751 = vmatprep.subr.mxu0 0.0
    %752 = vmatpush1.msra.mxu0 %v746
    %753 = vmatprep.subr.mxu0 0.0
    %754 = vmatpush1.msra.mxu0 0.0
    %755 = vmatprep.subr.mxu0 0.0
    %756 = vmatpush1.msra.mxu0 0.0
    %757 = vmatprep.subr.mxu0 0.0
    %758 = vmatpush1.msra.mxu0 0.0
    %759 = vmatprep.subr.mxu0 0.0
    %760 = vmatpush1.msra.mxu0 0.0
    %761 = vmatprep.subr.mxu0 0.0
    %762 = vmatpush1.msra.mxu0 0.0
    %763 = vmatprep.subr.mxu0 0.0
    %764 = vmatpush1.msra.mxu0 0.0
    %765 = vmatprep.subr.mxu0 0.0
    %766 = vmatpush1.msra.mxu0 0.0
    %767 = vmatprep.subr.mxu0 0.0
    %768 = vmatpush1.msra.mxu0 0.0
    %769 = vmatprep.subr.mxu0 0.0
    %770 = vmatpush1.msra.mxu0 0.0
    %771 = vmatprep.subr.mxu0 0.0
    %772 = vmatpush1.msra.mxu0 0.0
    %773 = vmatprep.subr.mxu0 0.0
    %774 = vmatpush1.msra.mxu0 0.0
    %775 = vmatprep.subr.mxu0 0.0
    %776 = vmatpush1.msra.mxu0 0.0
    %777 = vmatprep.subr.mxu0 0.0
    %778 = vmatpush1.msra.mxu0 0.0
    %779 = vmatprep.subr.mxu0 0.0
    %780 = vmatpush1.msra.mxu0 0.0
    %781 = vmatprep.subr.mxu0 0.0
    %782 = vmatpush1.msra.mxu0 0.0
    %783 = vmatprep.subr.mxu0 0.0
    %784 = vmatpush1.msra.mxu0 0.0
    %785 = vmatprep.subr.mxu0 0.0
    %786 = vmatpush1.msra.mxu0 0.0
    %787 = vmatprep.subr.mxu0 0.0
    %788 = vmatpush1.msra.mxu0 0.0
    %789 = vmatprep.subr.mxu0 0.0
    %790 = vmatpush1.msra.mxu0 0.0
    %791 = vmatprep.subr.mxu0 0.0
    %792 = vmatpush1.msra.mxu0 0.0
    %793 = vmatprep.subr.mxu0 0.0
    %794 = vmatpush1.msra.mxu0 0.0
    %795 = vmatprep.subr.mxu0 0.0
    %796 = vmatpush1.msra.mxu0 0.0
    %797 = vmatprep.subr.mxu0 0.0
    %798 = vmatpush1.msra.mxu0 0.0
    %799 = vmatprep.subr.mxu0 0.0
    %800 = vmatpush1.msra.mxu0 0.0
    %801 = vmatprep.subr.mxu0 0.0
    %802 = vmatpush1.msra.mxu0 0.0
    %803 = vmatprep.subr.mxu0 0.0
    %804 = vmatpush1.msra.mxu0 0.0
    %805 = vmatprep.subr.mxu0 0.0
    %806 = vmatpush1.msra.mxu0 0.0
    %807 = vmatprep.subr.mxu0 0.0
    %808 = vmatpush1.msra.mxu0 0.0
    %809 = vmatprep.subr.mxu0 0.0
    %810 = vmatpush1.msra.mxu0 0.0
    %811 = vmatprep.subr.mxu0 0.0
    %812 = vmatpush1.msra.mxu0 0.0
    %813 = vmatprep.subr.mxu0 0.0
    %814 = vmatpush1.msra.mxu0 0.0
    %815 = vmatprep.mubr.f32.mxu0 0.0
    %816 = vmatmul.mubr.f32.gmra.mrb[0].mxu0 %v749
    %v817 = vpop.f32.mrb[0].mxu0
    %v818 = vadd.f32 0.0, %v817
    %v819 = vpop.f32.mrb[0].mxu0
    %820 = vdwg.mxu0
    %821 = vrot.lane.b32.xlu0 %v233, 56
    %v822 = vpop.permute.xlu0 %821
    %v825 = vsel %vm239, %v744, 0
    %827 = vmatprep.subr.mxu0 0.0
    %828 = vmatpush1.msra.mxu0 %v822
    %829 = vmatprep.subr.mxu0 0.0
    %830 = vmatpush1.msra.mxu0 0.0
    %831 = vmatprep.subr.mxu0 0.0
    %832 = vmatpush1.msra.mxu0 0.0
    %833 = vmatprep.subr.mxu0 0.0
    %834 = vmatpush1.msra.mxu0 0.0
    %835 = vmatprep.subr.mxu0 0.0
    %836 = vmatpush1.msra.mxu0 0.0
    %837 = vmatprep.subr.mxu0 0.0
    %838 = vmatpush1.msra.mxu0 0.0
    %839 = vmatprep.subr.mxu0 0.0
    %840 = vmatpush1.msra.mxu0 0.0
    %841 = vmatprep.subr.mxu0 0.0
    %842 = vmatpush1.msra.mxu0 0.0
    %843 = vmatprep.subr.mxu0 0.0
    %844 = vmatpush1.msra.mxu0 0.0
    %845 = vmatprep.subr.mxu0 0.0
    %846 = vmatpush1.msra.mxu0 0.0
    %847 = vmatprep.subr.mxu0 0.0
    %848 = vmatpush1.msra.mxu0 0.0
    %849 = vmatprep.subr.mxu0 0.0
    %850 = vmatpush1.msra.mxu0 0.0
    %851 = vmatprep.subr.mxu0 0.0
    %852 = vmatpush1.msra.mxu0 0.0
    %853 = vmatprep.subr.mxu0 0.0
    %854 = vmatpush1.msra.mxu0 0.0
    %855 = vmatprep.subr.mxu0 0.0
    %856 = vmatpush1.msra.mxu0 0.0
    %857 = vmatprep.subr.mxu0 0.0
    %858 = vmatpush1.msra.mxu0 0.0
    %859 = vmatprep.subr.mxu0 0.0
    %860 = vmatpush1.msra.mxu0 0.0
    %861 = vmatprep.subr.mxu0 0.0
    %862 = vmatpush1.msra.mxu0 0.0
    %863 = vmatprep.subr.mxu0 0.0
    %864 = vmatpush1.msra.mxu0 0.0
    %865 = vmatprep.subr.mxu0 0.0
    %866 = vmatpush1.msra.mxu0 0.0
    %867 = vmatprep.subr.mxu0 0.0
    %868 = vmatpush1.msra.mxu0 0.0
    %869 = vmatprep.subr.mxu0 0.0
    %870 = vmatpush1.msra.mxu0 0.0
    %871 = vmatprep.subr.mxu0 0.0
    %872 = vmatpush1.msra.mxu0 0.0
    %873 = vmatprep.subr.mxu0 0.0
    %874 = vmatpush1.msra.mxu0 0.0
    %875 = vmatprep.subr.mxu0 0.0
    %876 = vmatpush1.msra.mxu0 0.0
    %877 = vmatprep.subr.mxu0 0.0
    %878 = vmatpush1.msra.mxu0 0.0
    %879 = vmatprep.subr.mxu0 0.0
    %880 = vmatpush1.msra.mxu0 0.0
    %881 = vmatprep.subr.mxu0 0.0
    %882 = vmatpush1.msra.mxu0 0.0
    %883 = vmatprep.subr.mxu0 0.0
    %884 = vmatpush1.msra.mxu0 0.0
    %885 = vmatprep.subr.mxu0 0.0
    %886 = vmatpush1.msra.mxu0 0.0
    %887 = vmatprep.subr.mxu0 0.0
    %888 = vmatpush1.msra.mxu0 0.0
    %889 = vmatprep.subr.mxu0 0.0
    %890 = vmatpush1.msra.mxu0 0.0
    %891 = vmatprep.mubr.f32.mxu0 0.0
    %892 = vmatmul.mubr.f32.gmra.mrb[0].mxu0 %v825
    %v893 = vpop.f32.mrb[0].mxu0
    %v894 = vadd.f32 0.0, %v893
    %v895 = vpop.f32.mrb[0].mxu0
    %896 = vdwg.mxu0
    %899 = vrot.lane.b32.xlu0 %v818, 8
    %v900 = vpop.permute.xlu0 %899
    %901 = vrot.lane.b32.xlu0 %v894, 8
    %v902 = vpop.permute.xlu0 %901
    %vm905 = vcmask 130112
    %906 = vst.msk [vmem:[#allocation2] sm:$0xff] %vm905, %v900
    %907 = vst.msk [vmem:[#allocation2 + $0x8] sm:$0xff] %vm905, %v902
    %908 = vrot.lane.b32.xlu0 %v228, 112
    %v909 = vpop.permute.xlu0 %908
    %910 = vrot.lane.b32.xlu0 %v228, 80
    %v911 = vpop.permute.xlu0 %910
    %v912 = vsel %vm239, %v909, 0
    %v914 = vsel %vm239, %v911, 0
    %916 = vmatprep.subr.mxu0 0.0
    %917 = vmatpush1.xpose.msra.mxu0 %v914
    %918 = vmatprep.subr.mxu0 0.0
    %919 = vmatpush1.xpose.msra.mxu0 0.0
    %920 = vmatprep.subr.mxu0 0.0
    %921 = vmatpush1.xpose.msra.mxu0 0.0
    %922 = vmatprep.subr.mxu0 0.0
    %923 = vmatpush1.xpose.msra.mxu0 0.0
    %924 = vmatprep.subr.mxu0 0.0
    %925 = vmatpush1.xpose.msra.mxu0 0.0
    %926 = vmatprep.subr.mxu0 0.0
    %927 = vmatpush1.xpose.msra.mxu0 0.0
    %928 = vmatprep.subr.mxu0 0.0
    %929 = vmatpush1.xpose.msra.mxu0 0.0
    %930 = vmatprep.subr.mxu0 0.0
    %931 = vmatpush1.xpose.msra.mxu0 0.0
    %932 = vmatprep.subr.mxu0 0.0
    %933 = vmatpush1.xpose.msra.mxu0 0.0
    %934 = vmatprep.subr.mxu0 0.0
    %935 = vmatpush1.xpose.msra.mxu0 0.0
    %936 = vmatprep.subr.mxu0 0.0
    %937 = vmatpush1.xpose.msra.mxu0 0.0
    %938 = vmatprep.subr.mxu0 0.0
    %939 = vmatpush1.xpose.msra.mxu0 0.0
    %940 = vmatprep.subr.mxu0 0.0
    %941 = vmatpush1.xpose.msra.mxu0 0.0
    %942 = vmatprep.subr.mxu0 0.0
    %943 = vmatpush1.xpose.msra.mxu0 0.0
    %944 = vmatprep.subr.mxu0 0.0
    %945 = vmatpush1.xpose.msra.mxu0 0.0
    %946 = vmatprep.subr.mxu0 0.0
    %947 = vmatpush1.xpose.msra.mxu0 0.0
    %948 = vmatprep.subr.mxu0 0.0
    %949 = vmatpush1.xpose.msra.mxu0 0.0
    %950 = vmatprep.subr.mxu0 0.0
    %951 = vmatpush1.xpose.msra.mxu0 0.0
    %952 = vmatprep.subr.mxu0 0.0
    %953 = vmatpush1.xpose.msra.mxu0 0.0
    %954 = vmatprep.subr.mxu0 0.0
    %955 = vmatpush1.xpose.msra.mxu0 0.0
    %956 = vmatprep.subr.mxu0 0.0
    %957 = vmatpush1.xpose.msra.mxu0 0.0
    %958 = vmatprep.subr.mxu0 0.0
    %959 = vmatpush1.xpose.msra.mxu0 0.0
    %960 = vmatprep.subr.mxu0 0.0
    %961 = vmatpush1.xpose.msra.mxu0 0.0
    %962 = vmatprep.subr.mxu0 0.0
    %963 = vmatpush1.xpose.msra.mxu0 0.0
    %964 = vmatprep.subr.mxu0 0.0
    %965 = vmatpush1.xpose.msra.mxu0 0.0
    %966 = vmatprep.subr.mxu0 0.0
    %967 = vmatpush1.xpose.msra.mxu0 0.0
    %968 = vmatprep.subr.mxu0 0.0
    %969 = vmatpush1.xpose.msra.mxu0 0.0
    %970 = vmatprep.subr.mxu0 0.0
    %971 = vmatpush1.xpose.msra.mxu0 0.0
    %972 = vmatprep.subr.mxu0 0.0
    %973 = vmatpush1.xpose.msra.mxu0 0.0
    %974 = vmatprep.subr.mxu0 0.0
    %975 = vmatpush1.xpose.msra.mxu0 0.0
    %976 = vmatprep.subr.mxu0 0.0
    %977 = vmatpush1.xpose.msra.mxu0 0.0
    %978 = vmatprep.subr.mxu0 0.0
    %979 = vmatpush1.xpose.msra.mxu0 0.0
    %980 = vmatprep.mubr.f32.mxu0 0.0
    %981 = vmatmul.mubr.f32.gmra.mrb[0].mxu0 %v912
    %v982 = vpop.f32.mrb[0].mxu0
    %v983 = vadd.f32 0.0, %v982
    %v984 = vpop.f32.mrb[0].mxu0
    %985 = vdwg.mxu0
    %986 = vrot.lane.b32.xlu0 %v233, 112
    %v987 = vpop.permute.xlu0 %986
    %988 = vrot.lane.b32.xlu0 %v233, 80
    %v989 = vpop.permute.xlu0 %988
    %v990 = vsel %vm239, %v987, 0
    %v992 = vsel %vm239, %v989, 0
    %994 = vmatprep.subr.mxu0 0.0
    %995 = vmatpush1.xpose.msra.mxu0 %v992
    %996 = vmatprep.subr.mxu0 0.0
    %997 = vmatpush1.xpose.msra.mxu0 0.0
    %998 = vmatprep.subr.mxu0 0.0
    %999 = vmatpush1.xpose.msra.mxu0 0.0
    %1000 = vmatprep.subr.mxu0 0.0
    %1001 = vmatpush1.xpose.msra.mxu0 0.0
    %1002 = vmatprep.subr.mxu0 0.0
    %1003 = vmatpush1.xpose.msra.mxu0 0.0
    %1004 = vmatprep.subr.mxu0 0.0
    %1005 = vmatpush1.xpose.msra.mxu0 0.0
    %1006 = vmatprep.subr.mxu0 0.0
    %1007 = vmatpush1.xpose.msra.mxu0 0.0
    %1008 = vmatprep.subr.mxu0 0.0
    %1009 = vmatpush1.xpose.msra.mxu0 0.0
    %1010 = vmatprep.subr.mxu0 0.0
    %1011 = vmatpush1.xpose.msra.mxu0 0.0
    %1012 = vmatprep.subr.mxu0 0.0
    %1013 = vmatpush1.xpose.msra.mxu0 0.0
    %1014 = vmatprep.subr.mxu0 0.0
    %1015 = vmatpush1.xpose.msra.mxu0 0.0
    %1016 = vmatprep.subr.mxu0 0.0
    %1017 = vmatpush1.xpose.msra.mxu0 0.0
    %1018 = vmatprep.subr.mxu0 0.0
    %1019 = vmatpush1.xpose.msra.mxu0 0.0
    %1020 = vmatprep.subr.mxu0 0.0
    %1021 = vmatpush1.xpose.msra.mxu0 0.0
    %1022 = vmatprep.subr.mxu0 0.0
    %1023 = vmatpush1.xpose.msra.mxu0 0.0
    %1024 = vmatprep.subr.mxu0 0.0
    %1025 = vmatpush1.xpose.msra.mxu0 0.0
    %1026 = vmatprep.subr.mxu0 0.0
    %1027 = vmatpush1.xpose.msra.mxu0 0.0
    %1028 = vmatprep.subr.mxu0 0.0
    %1029 = vmatpush1.xpose.msra.mxu0 0.0
    %1030 = vmatprep.subr.mxu0 0.0
    %1031 = vmatpush1.xpose.msra.mxu0 0.0
    %1032 = vmatprep.subr.mxu0 0.0
    %1033 = vmatpush1.xpose.msra.mxu0 0.0
    %1034 = vmatprep.subr.mxu0 0.0
    %1035 = vmatpush1.xpose.msra.mxu0 0.0
    %1036 = vmatprep.subr.mxu0 0.0
    %1037 = vmatpush1.xpose.msra.mxu0 0.0
    %1038 = vmatprep.subr.mxu0 0.0
    %1039 = vmatpush1.xpose.msra.mxu0 0.0
    %1040 = vmatprep.subr.mxu0 0.0
    %1041 = vmatpush1.xpose.msra.mxu0 0.0
    %1042 = vmatprep.subr.mxu0 0.0
    %1043 = vmatpush1.xpose.msra.mxu0 0.0
    %1044 = vmatprep.subr.mxu0 0.0
    %1045 = vmatpush1.xpose.msra.mxu0 0.0
    %1046 = vmatprep.subr.mxu0 0.0
    %1047 = vmatpush1.xpose.msra.mxu0 0.0
    %1048 = vmatprep.subr.mxu0 0.0
    %1049 = vmatpush1.xpose.msra.mxu0 0.0
    %1050 = vmatprep.subr.mxu0 0.0
    %1051 = vmatpush1.xpose.msra.mxu0 0.0
    %1052 = vmatprep.subr.mxu0 0.0
    %1053 = vmatpush1.xpose.msra.mxu0 0.0
    %1054 = vmatprep.subr.mxu0 0.0
    %1055 = vmatpush1.xpose.msra.mxu0 0.0
    %1056 = vmatprep.subr.mxu0 0.0
    %1057 = vmatpush1.xpose.msra.mxu0 0.0
    %1058 = vmatprep.mubr.f32.mxu0 0.0
    %1059 = vmatmul.mubr.f32.gmra.mrb[0].mxu0 %v990
    %v1060 = vpop.f32.mrb[0].mxu0
    %v1061 = vadd.f32 0.0, %v1060
    %v1062 = vpop.f32.mrb[0].mxu0
    %1063 = vdwg.mxu0
    %v1064 = vsel %vm239, %v983, -inf
    %1065 = vmax.xlane.f32.xlu0 %v1064
    %v1066 = vpop.xlane.xlu0 %1065
    %v1067 = vsel %vm239, %v1061, -inf
    %1068 = vmax.xlane.f32.xlu0 %v1067
    %v1069 = vpop.xlane.xlu0 %1068
    %v1070 = vsub.f32 %v983, %v1066
    %v1071 = vsub.f32 %v1061, %v1069
    %v1072 = vmul.f32 %v1070, 1.442695
    %v1073 = vpow.pop %v1072
    %v1074 = vmul.f32 %v1071, 1.442695
    %v1075 = vpow.pop %v1074
    %v1076 = vsel %vm239, %v1073, 0.0
    %1077 = vadd.xlane.f32.xlu0 %v1076
    %v1078 = vpop.xlane.xlu0 %1077
    %v1079 = vsel %vm239, %v1075, 0.0
    %1080 = vadd.xlane.f32.xlu0 %v1079
    %v1081 = vpop.xlane.xlu0 %1080
    %v1082 = vrcp.pop %v1078
    %v1083 = vrcp.pop %v1081
    %v1084 = vmul.f32 %v1073, %v1082
    %v1085 = vmul.f32 %v1075, %v1083
    %1086 = vrot.lane.b32.xlu0 %v228, 48
    %v1087 = vpop.permute.xlu0 %1086
    %v1090 = vsel %vm239, %v1084, 0
    %1092 = vmatprep.subr.mxu0 0.0
    %1093 = vmatpush1.msra.mxu0 %v1087
    %1094 = vmatprep.subr.mxu0 0.0
    %1095 = vmatpush1.msra.mxu0 0.0
    %1096 = vmatprep.subr.mxu0 0.0
    %1097 = vmatpush1.msra.mxu0 0.0
    %1098 = vmatprep.subr.mxu0 0.0
    %1099 = vmatpush1.msra.mxu0 0.0
    %1100 = vmatprep.subr.mxu0 0.0
    %1101 = vmatpush1.msra.mxu0 0.0
    %1102 = vmatprep.subr.mxu0 0.0
    %1103 = vmatpush1.msra.mxu0 0.0
    %1104 = vmatprep.subr.mxu0 0.0
    %1105 = vmatpush1.msra.mxu0 0.0
    %1106 = vmatprep.subr.mxu0 0.0
    %1107 = vmatpush1.msra.mxu0 0.0
    %1108 = vmatprep.subr.mxu0 0.0
    %1109 = vmatpush1.msra.mxu0 0.0
    %1110 = vmatprep.subr.mxu0 0.0
    %1111 = vmatpush1.msra.mxu0 0.0
    %1112 = vmatprep.subr.mxu0 0.0
    %1113 = vmatpush1.msra.mxu0 0.0
    %1114 = vmatprep.subr.mxu0 0.0
    %1115 = vmatpush1.msra.mxu0 0.0
    %1116 = vmatprep.subr.mxu0 0.0
    %1117 = vmatpush1.msra.mxu0 0.0
    %1118 = vmatprep.subr.mxu0 0.0
    %1119 = vmatpush1.msra.mxu0 0.0
    %1120 = vmatprep.subr.mxu0 0.0
    %1121 = vmatpush1.msra.mxu0 0.0
    %1122 = vmatprep.subr.mxu0 0.0
    %1123 = vmatpush1.msra.mxu0 0.0
    %1124 = vmatprep.subr.mxu0 0.0
    %1125 = vmatpush1.msra.mxu0 0.0
    %1126 = vmatprep.subr.mxu0 0.0
    %1127 = vmatpush1.msra.mxu0 0.0
    %1128 = vmatprep.subr.mxu0 0.0
    %1129 = vmatpush1.msra.mxu0 0.0
    %1130 = vmatprep.subr.mxu0 0.0
    %1131 = vmatpush1.msra.mxu0 0.0
    %1132 = vmatprep.subr.mxu0 0.0
    %1133 = vmatpush1.msra.mxu0 0.0
    %1134 = vmatprep.subr.mxu0 0.0
    %1135 = vmatpush1.msra.mxu0 0.0
    %1136 = vmatprep.subr.mxu0 0.0
    %1137 = vmatpush1.msra.mxu0 0.0
    %1138 = vmatprep.subr.mxu0 0.0
    %1139 = vmatpush1.msra.mxu0 0.0
    %1140 = vmatprep.subr.mxu0 0.0
    %1141 = vmatpush1.msra.mxu0 0.0
    %1142 = vmatprep.subr.mxu0 0.0
    %1143 = vmatpush1.msra.mxu0 0.0
    %1144 = vmatprep.subr.mxu0 0.0
    %1145 = vmatpush1.msra.mxu0 0.0
    %1146 = vmatprep.subr.mxu0 0.0
    %1147 = vmatpush1.msra.mxu0 0.0
    %1148 = vmatprep.subr.mxu0 0.0
    %1149 = vmatpush1.msra.mxu0 0.0
    %1150 = vmatprep.subr.mxu0 0.0
    %1151 = vmatpush1.msra.mxu0 0.0
    %1152 = vmatprep.subr.mxu0 0.0
    %1153 = vmatpush1.msra.mxu0 0.0
    %1154 = vmatprep.subr.mxu0 0.0
    %1155 = vmatpush1.msra.mxu0 0.0
    %1156 = vmatprep.mubr.f32.mxu0 0.0
    %1157 = vmatmul.mubr.f32.gmra.mrb[0].mxu0 %v1090
    %v1158 = vpop.f32.mrb[0].mxu0
    %v1159 = vadd.f32 0.0, %v1158
    %v1160 = vpop.f32.mrb[0].mxu0
    %1161 = vdwg.mxu0
    %1162 = vrot.lane.b32.xlu0 %v233, 48
    %v1163 = vpop.permute.xlu0 %1162
    %v1166 = vsel %vm239, %v1085, 0
    %1168 = vmatprep.subr.mxu0 0.0
    %1169 = vmatpush1.msra.mxu0 %v1163
    %1170 = vmatprep.subr.mxu0 0.0
    %1171 = vmatpush1.msra.mxu0 0.0
    %1172 = vmatprep.subr.mxu0 0.0
    %1173 = vmatpush1.msra.mxu0 0.0
    %1174 = vmatprep.subr.mxu0 0.0
    %1175 = vmatpush1.msra.mxu0 0.0
    %1176 = vmatprep.subr.mxu0 0.0
    %1177 = vmatpush1.msra.mxu0 0.0
    %1178 = vmatprep.subr.mxu0 0.0
    %1179 = vmatpush1.msra.mxu0 0.0
    %1180 = vmatprep.subr.mxu0 0.0
    %1181 = vmatpush1.msra.mxu0 0.0
    %1182 = vmatprep.subr.mxu0 0.0
    %1183 = vmatpush1.msra.mxu0 0.0
    %1184 = vmatprep.subr.mxu0 0.0
    %1185 = vmatpush1.msra.mxu0 0.0
    %1186 = vmatprep.subr.mxu0 0.0
    %1187 = vmatpush1.msra.mxu0 0.0
    %1188 = vmatprep.subr.mxu0 0.0
    %1189 = vmatpush1.msra.mxu0 0.0
    %1190 = vmatprep.subr.mxu0 0.0
    %1191 = vmatpush1.msra.mxu0 0.0
    %1192 = vmatprep.subr.mxu0 0.0
    %1193 = vmatpush1.msra.mxu0 0.0
    %1194 = vmatprep.subr.mxu0 0.0
    %1195 = vmatpush1.msra.mxu0 0.0
    %1196 = vmatprep.subr.mxu0 0.0
    %1197 = vmatpush1.msra.mxu0 0.0
    %1198 = vmatprep.subr.mxu0 0.0
    %1199 = vmatpush1.msra.mxu0 0.0
    %1200 = vmatprep.subr.mxu0 0.0
    %1201 = vmatpush1.msra.mxu0 0.0
    %1202 = vmatprep.subr.mxu0 0.0
    %1203 = vmatpush1.msra.mxu0 0.0
    %1204 = vmatprep.subr.mxu0 0.0
    %1205 = vmatpush1.msra.mxu0 0.0
    %1206 = vmatprep.subr.mxu0 0.0
    %1207 = vmatpush1.msra.mxu0 0.0
    %1208 = vmatprep.subr.mxu0 0.0
    %1209 = vmatpush1.msra.mxu0 0.0
    %1210 = vmatprep.subr.mxu0 0.0
    %1211 = vmatpush1.msra.mxu0 0.0
    %1212 = vmatprep.subr.mxu0 0.0
    %1213 = vmatpush1.msra.mxu0 0.0
    %1214 = vmatprep.subr.mxu0 0.0
    %1215 = vmatpush1.msra.mxu0 0.0
    %1216 = vmatprep.subr.mxu0 0.0
    %1217 = vmatpush1.msra.mxu0 0.0
    %1218 = vmatprep.subr.mxu0 0.0
    %1219 = vmatpush1.msra.mxu0 0.0
    %1220 = vmatprep.subr.mxu0 0.0
    %1221 = vmatpush1.msra.mxu0 0.0
    %1222 = vmatprep.subr.mxu0 0.0
    %1223 = vmatpush1.msra.mxu0 0.0
    %1224 = vmatprep.subr.mxu0 0.0
    %1225 = vmatpush1.msra.mxu0 0.0
    %1226 = vmatprep.subr.mxu0 0.0
    %1227 = vmatpush1.msra.mxu0 0.0
    %1228 = vmatprep.subr.mxu0 0.0
    %1229 = vmatpush1.msra.mxu0 0.0
    %1230 = vmatprep.subr.mxu0 0.0
    %1231 = vmatpush1.msra.mxu0 0.0
    %1232 = vmatprep.mubr.f32.mxu0 0.0
    %1233 = vmatmul.mubr.f32.gmra.mrb[0].mxu0 %v1166
    %v1234 = vpop.f32.mrb[0].mxu0
    %v1235 = vadd.f32 0.0, %v1234
    %v1236 = vpop.f32.mrb[0].mxu0
    %1237 = vdwg.mxu0
    %1240 = vrot.lane.b32.xlu0 %v1159, 16
    %v1241 = vpop.permute.xlu0 %1240
    %1242 = vrot.lane.b32.xlu0 %v1235, 16
    %v1243 = vpop.permute.xlu0 %1242
    %vm1246 = vcmask 195712
    %1247 = vst.msk [vmem:[#allocation2] sm:$0xff] %vm1246, %v1241
    %1248 = vst.msk [vmem:[#allocation2 + $0x8] sm:$0xff] %vm1246, %v1243
    %1249 = vrot.lane.b32.xlu0 %v228, 104
    %v1250 = vpop.permute.xlu0 %1249
    %1251 = vrot.lane.b32.xlu0 %v228, 72
    %v1252 = vpop.permute.xlu0 %1251
    %v1253 = vsel %vm239, %v1250, 0
    %v1255 = vsel %vm239, %v1252, 0
    %1257 = vmatprep.subr.mxu0 0.0
    %1258 = vmatpush1.xpose.msra.mxu0 %v1255
    %1259 = vmatprep.subr.mxu0 0.0
    %1260 = vmatpush1.xpose.msra.mxu0 0.0
    %1261 = vmatprep.subr.mxu0 0.0
    %1262 = vmatpush1.xpose.msra.mxu0 0.0
    %1263 = vmatprep.subr.mxu0 0.0
    %1264 = vmatpush1.xpose.msra.mxu0 0.0
    %1265 = vmatprep.subr.mxu0 0.0
    %1266 = vmatpush1.xpose.msra.mxu0 0.0
    %1267 = vmatprep.subr.mxu0 0.0
    %1268 = vmatpush1.xpose.msra.mxu0 0.0
    %1269 = vmatprep.subr.mxu0 0.0
    %1270 = vmatpush1.xpose.msra.mxu0 0.0
    %1271 = vmatprep.subr.mxu0 0.0
    %1272 = vmatpush1.xpose.msra.mxu0 0.0
    %1273 = vmatprep.subr.mxu0 0.0
    %1274 = vmatpush1.xpose.msra.mxu0 0.0
    %1275 = vmatprep.subr.mxu0 0.0
    %1276 = vmatpush1.xpose.msra.mxu0 0.0
    %1277 = vmatprep.subr.mxu0 0.0
    %1278 = vmatpush1.xpose.msra.mxu0 0.0
    %1279 = vmatprep.subr.mxu0 0.0
    %1280 = vmatpush1.xpose.msra.mxu0 0.0
    %1281 = vmatprep.subr.mxu0 0.0
    %1282 = vmatpush1.xpose.msra.mxu0 0.0
    %1283 = vmatprep.subr.mxu0 0.0
    %1284 = vmatpush1.xpose.msra.mxu0 0.0
    %1285 = vmatprep.subr.mxu0 0.0
    %1286 = vmatpush1.xpose.msra.mxu0 0.0
    %1287 = vmatprep.subr.mxu0 0.0
    %1288 = vmatpush1.xpose.msra.mxu0 0.0
    %1289 = vmatprep.subr.mxu0 0.0
    %1290 = vmatpush1.xpose.msra.mxu0 0.0
    %1291 = vmatprep.subr.mxu0 0.0
    %1292 = vmatpush1.xpose.msra.mxu0 0.0
    %1293 = vmatprep.subr.mxu0 0.0
    %1294 = vmatpush1.xpose.msra.mxu0 0.0
    %1295 = vmatprep.subr.mxu0 0.0
    %1296 = vmatpush1.xpose.msra.mxu0 0.0
    %1297 = vmatprep.subr.mxu0 0.0
    %1298 = vmatpush1.xpose.msra.mxu0 0.0
    %1299 = vmatprep.subr.mxu0 0.0
    %1300 = vmatpush1.xpose.msra.mxu0 0.0
    %1301 = vmatprep.subr.mxu0 0.0
    %1302 = vmatpush1.xpose.msra.mxu0 0.0
    %1303 = vmatprep.subr.mxu0 0.0
    %1304 = vmatpush1.xpose.msra.mxu0 0.0
    %1305 = vmatprep.subr.mxu0 0.0
    %1306 = vmatpush1.xpose.msra.mxu0 0.0
    %1307 = vmatprep.subr.mxu0 0.0
    %1308 = vmatpush1.xpose.msra.mxu0 0.0
    %1309 = vmatprep.subr.mxu0 0.0
    %1310 = vmatpush1.xpose.msra.mxu0 0.0
    %1311 = vmatprep.subr.mxu0 0.0
    %1312 = vmatpush1.xpose.msra.mxu0 0.0
    %1313 = vmatprep.subr.mxu0 0.0
    %1314 = vmatpush1.xpose.msra.mxu0 0.0
    %1315 = vmatprep.subr.mxu0 0.0
    %1316 = vmatpush1.xpose.msra.mxu0 0.0
    %1317 = vmatprep.subr.mxu0 0.0
    %1318 = vmatpush1.xpose.msra.mxu0 0.0
    %1319 = vmatprep.subr.mxu0 0.0
    %1320 = vmatpush1.xpose.msra.mxu0 0.0
    %1321 = vmatprep.mubr.f32.mxu0 0.0
    %1322 = vmatmul.mubr.f32.gmra.mrb[0].mxu0 %v1253
    %v1323 = vpop.f32.mrb[0].mxu0
    %v1324 = vadd.f32 0.0, %v1323
    %v1325 = vpop.f32.mrb[0].mxu0
    %1326 = vdwg.mxu0
    %1327 = vrot.lane.b32.xlu0 %v233, 104
    %v1328 = vpop.permute.xlu0 %1327
    %1329 = vrot.lane.b32.xlu0 %v233, 72
    %v1330 = vpop.permute.xlu0 %1329
    %v1331 = vsel %vm239, %v1328, 0
    %v1333 = vsel %vm239, %v1330, 0
    %1335 = vmatprep.subr.mxu0 0.0
    %1336 = vmatpush1.xpose.msra.mxu0 %v1333
    %1337 = vmatprep.subr.mxu0 0.0
    %1338 = vmatpush1.xpose.msra.mxu0 0.0
    %1339 = vmatprep.subr.mxu0 0.0
    %1340 = vmatpush1.xpose.msra.mxu0 0.0
    %1341 = vmatprep.subr.mxu0 0.0
    %1342 = vmatpush1.xpose.msra.mxu0 0.0
    %1343 = vmatprep.subr.mxu0 0.0
    %1344 = vmatpush1.xpose.msra.mxu0 0.0
    %1345 = vmatprep.subr.mxu0 0.0
    %1346 = vmatpush1.xpose.msra.mxu0 0.0
    %1347 = vmatprep.subr.mxu0 0.0
    %1348 = vmatpush1.xpose.msra.mxu0 0.0
    %1349 = vmatprep.subr.mxu0 0.0
    %1350 = vmatpush1.xpose.msra.mxu0 0.0
    %1351 = vmatprep.subr.mxu0 0.0
    %1352 = vmatpush1.xpose.msra.mxu0 0.0
    %1353 = vmatprep.subr.mxu0 0.0
    %1354 = vmatpush1.xpose.msra.mxu0 0.0
    %1355 = vmatprep.subr.mxu0 0.0
    %1356 = vmatpush1.xpose.msra.mxu0 0.0
    %1357 = vmatprep.subr.mxu0 0.0
    %1358 = vmatpush1.xpose.msra.mxu0 0.0
    %1359 = vmatprep.subr.mxu0 0.0
    %1360 = vmatpush1.xpose.msra.mxu0 0.0
    %1361 = vmatprep.subr.mxu0 0.0
    %1362 = vmatpush1.xpose.msra.mxu0 0.0
    %1363 = vmatprep.subr.mxu0 0.0
    %1364 = vmatpush1.xpose.msra.mxu0 0.0
    %1365 = vmatprep.subr.mxu0 0.0
    %1366 = vmatpush1.xpose.msra.mxu0 0.0
    %1367 = vmatprep.subr.mxu0 0.0
    %1368 = vmatpush1.xpose.msra.mxu0 0.0
    %1369 = vmatprep.subr.mxu0 0.0
    %1370 = vmatpush1.xpose.msra.mxu0 0.0
    %1371 = vmatprep.subr.mxu0 0.0
    %1372 = vmatpush1.xpose.msra.mxu0 0.0
    %1373 = vmatprep.subr.mxu0 0.0
    %1374 = vmatpush1.xpose.msra.mxu0 0.0
    %1375 = vmatprep.subr.mxu0 0.0
    %1376 = vmatpush1.xpose.msra.mxu0 0.0
    %1377 = vmatprep.subr.mxu0 0.0
    %1378 = vmatpush1.xpose.msra.mxu0 0.0
    %1379 = vmatprep.subr.mxu0 0.0
    %1380 = vmatpush1.xpose.msra.mxu0 0.0
    %1381 = vmatprep.subr.mxu0 0.0
    %1382 = vmatpush1.xpose.msra.mxu0 0.0
    %1383 = vmatprep.subr.mxu0 0.0
    %1384 = vmatpush1.xpose.msra.mxu0 0.0
    %1385 = vmatprep.subr.mxu0 0.0
    %1386 = vmatpush1.xpose.msra.mxu0 0.0
    %1387 = vmatprep.subr.mxu0 0.0
    %1388 = vmatpush1.xpose.msra.mxu0 0.0
    %1389 = vmatprep.subr.mxu0 0.0
    %1390 = vmatpush1.xpose.msra.mxu0 0.0
    %1391 = vmatprep.subr.mxu0 0.0
    %1392 = vmatpush1.xpose.msra.mxu0 0.0
    %1393 = vmatprep.subr.mxu0 0.0
    %1394 = vmatpush1.xpose.msra.mxu0 0.0
    %1395 = vmatprep.subr.mxu0 0.0
    %1396 = vmatpush1.xpose.msra.mxu0 0.0
    %1397 = vmatprep.subr.mxu0 0.0
    %1398 = vmatpush1.xpose.msra.mxu0 0.0
    %1399 = vmatprep.mubr.f32.mxu0 0.0
    %1400 = vmatmul.mubr.f32.gmra.mrb[0].mxu0 %v1331
    %v1401 = vpop.f32.mrb[0].mxu0
    %v1402 = vadd.f32 0.0, %v1401
    %v1403 = vpop.f32.mrb[0].mxu0
    %1404 = vdwg.mxu0
    %v1405 = vsel %vm239, %v1324, -inf
    %1406 = vmax.xlane.f32.xlu0 %v1405
    %v1407 = vpop.xlane.xlu0 %1406
    %v1408 = vsel %vm239, %v1402, -inf
    %1409 = vmax.xlane.f32.xlu0 %v1408
    %v1410 = vpop.xlane.xlu0 %1409
    %v1411 = vsub.f32 %v1324, %v1407
    %v1412 = vsub.f32 %v1402, %v1410
    %v1413 = vmul.f32 %v1411, 1.442695
    %v1414 = vpow.pop %v1413
    %v1415 = vmul.f32 %v1412, 1.442695
    %v1416 = vpow.pop %v1415
    %v1417 = vsel %vm239, %v1414, 0.0
    %1418 = vadd.xlane.f32.xlu0 %v1417
    %v1419 = vpop.xlane.xlu0 %1418
    %v1420 = vsel %vm239, %v1416, 0.0
    %1421 = vadd.xlane.f32.xlu0 %v1420
    %v1422 = vpop.xlane.xlu0 %1421
    %v1423 = vrcp.pop %v1419
    %v1424 = vrcp.pop %v1422
    %v1425 = vmul.f32 %v1414, %v1423
    %v1426 = vmul.f32 %v1416, %v1424
    %1427 = vrot.lane.b32.xlu0 %v228, 40
    %v1428 = vpop.permute.xlu0 %1427
    %v1431 = vsel %vm239, %v1425, 0
    %1433 = vmatprep.subr.mxu0 0.0
    %1434 = vmatpush1.msra.mxu0 %v1428
    %1435 = vmatprep.subr.mxu0 0.0
    %1436 = vmatpush1.msra.mxu0 0.0
    %1437 = vmatprep.subr.mxu0 0.0
    %1438 = vmatpush1.msra.mxu0 0.0
    %1439 = vmatprep.subr.mxu0 0.0
    %1440 = vmatpush1.msra.mxu0 0.0
    %1441 = vmatprep.subr.mxu0 0.0
    %1442 = vmatpush1.msra.mxu0 0.0
    %1443 = vmatprep.subr.mxu0 0.0
    %1444 = vmatpush1.msra.mxu0 0.0
    %1445 = vmatprep.subr.mxu0 0.0
    %1446 = vmatpush1.msra.mxu0 0.0
    %1447 = vmatprep.subr.mxu0 0.0
    %1448 = vmatpush1.msra.mxu0 0.0
    %1449 = vmatprep.subr.mxu0 0.0
    %1450 = vmatpush1.msra.mxu0 0.0
    %1451 = vmatprep.subr.mxu0 0.0
    %1452 = vmatpush1.msra.mxu0 0.0
    %1453 = vmatprep.subr.mxu0 0.0
    %1454 = vmatpush1.msra.mxu0 0.0
    %1455 = vmatprep.subr.mxu0 0.0
    %1456 = vmatpush1.msra.mxu0 0.0
    %1457 = vmatprep.subr.mxu0 0.0
    %1458 = vmatpush1.msra.mxu0 0.0
    %1459 = vmatprep.subr.mxu0 0.0
    %1460 = vmatpush1.msra.mxu0 0.0
    %1461 = vmatprep.subr.mxu0 0.0
    %1462 = vmatpush1.msra.mxu0 0.0
    %1463 = vmatprep.subr.mxu0 0.0
    %1464 = vmatpush1.msra.mxu0 0.0
    %1465 = vmatprep.subr.mxu0 0.0
    %1466 = vmatpush1.msra.mxu0 0.0
    %1467 = vmatprep.subr.mxu0 0.0
    %1468 = vmatpush1.msra.mxu0 0.0
    %1469 = vmatprep.subr.mxu0 0.0
    %1470 = vmatpush1.msra.mxu0 0.0
    %1471 = vmatprep.subr.mxu0 0.0
    %1472 = vmatpush1.msra.mxu0 0.0
    %1473 = vmatprep.subr.mxu0 0.0
    %1474 = vmatpush1.msra.mxu0 0.0
    %1475 = vmatprep.subr.mxu0 0.0
    %1476 = vmatpush1.msra.mxu0 0.0
    %1477 = vmatprep.subr.mxu0 0.0
    %1478 = vmatpush1.msra.mxu0 0.0
    %1479 = vmatprep.subr.mxu0 0.0
    %1480 = vmatpush1.msra.mxu0 0.0
    %1481 = vmatprep.subr.mxu0 0.0
    %1482 = vmatpush1.msra.mxu0 0.0
    %1483 = vmatprep.subr.mxu0 0.0
    %1484 = vmatpush1.msra.mxu0 0.0
    %1485 = vmatprep.subr.mxu0 0.0
    %1486 = vmatpush1.msra.mxu0 0.0
    %1487 = vmatprep.subr.mxu0 0.0
    %1488 = vmatpush1.msra.mxu0 0.0
    %1489 = vmatprep.subr.mxu0 0.0
    %1490 = vmatpush1.msra.mxu0 0.0
    %1491 = vmatprep.subr.mxu0 0.0
    %1492 = vmatpush1.msra.mxu0 0.0
    %1493 = vmatprep.subr.mxu0 0.0
    %1494 = vmatpush1.msra.mxu0 0.0
    %1495 = vmatprep.subr.mxu0 0.0
    %1496 = vmatpush1.msra.mxu0 0.0
    %1497 = vmatprep.mubr.f32.mxu0 0.0
    %1498 = vmatmul.mubr.f32.gmra.mrb[0].mxu0 %v1431
    %v1499 = vpop.f32.mrb[0].mxu0
    %v1500 = vadd.f32 0.0, %v1499
    %v1501 = vpop.f32.mrb[0].mxu0
    %1502 = vdwg.mxu0
    %1503 = vrot.lane.b32.xlu0 %v233, 40
    %v1504 = vpop.permute.xlu0 %1503
    %v1507 = vsel %vm239, %v1426, 0
    %1509 = vmatprep.subr.mxu0 0.0
    %1510 = vmatpush1.msra.mxu0 %v1504
    %1511 = vmatprep.subr.mxu0 0.0
    %1512 = vmatpush1.msra.mxu0 0.0
    %1513 = vmatprep.subr.mxu0 0.0
    %1514 = vmatpush1.msra.mxu0 0.0
    %1515 = vmatprep.subr.mxu0 0.0
    %1516 = vmatpush1.msra.mxu0 0.0
    %1517 = vmatprep.subr.mxu0 0.0
    %1518 = vmatpush1.msra.mxu0 0.0
    %1519 = vmatprep.subr.mxu0 0.0
    %1520 = vmatpush1.msra.mxu0 0.0
    %1521 = vmatprep.subr.mxu0 0.0
    %1522 = vmatpush1.msra.mxu0 0.0
    %1523 = vmatprep.subr.mxu0 0.0
    %1524 = vmatpush1.msra.mxu0 0.0
    %1525 = vmatprep.subr.mxu0 0.0
    %1526 = vmatpush1.msra.mxu0 0.0
    %1527 = vmatprep.subr.mxu0 0.0
    %1528 = vmatpush1.msra.mxu0 0.0
    %1529 = vmatprep.subr.mxu0 0.0
    %1530 = vmatpush1.msra.mxu0 0.0
    %1531 = vmatprep.subr.mxu0 0.0
    %1532 = vmatpush1.msra.mxu0 0.0
    %1533 = vmatprep.subr.mxu0 0.0
    %1534 = vmatpush1.msra.mxu0 0.0
    %1535 = vmatprep.subr.mxu0 0.0
    %1536 = vmatpush1.msra.mxu0 0.0
    %1537 = vmatprep.subr.mxu0 0.0
    %1538 = vmatpush1.msra.mxu0 0.0
    %1539 = vmatprep.subr.mxu0 0.0
    %1540 = vmatpush1.msra.mxu0 0.0
    %1541 = vmatprep.subr.mxu0 0.0
    %1542 = vmatpush1.msra.mxu0 0.0
    %1543 = vmatprep.subr.mxu0 0.0
    %1544 = vmatpush1.msra.mxu0 0.0
    %1545 = vmatprep.subr.mxu0 0.0
    %1546 = vmatpush1.msra.mxu0 0.0
    %1547 = vmatprep.subr.mxu0 0.0
    %1548 = vmatpush1.msra.mxu0 0.0
    %1549 = vmatprep.subr.mxu0 0.0
    %1550 = vmatpush1.msra.mxu0 0.0
    %1551 = vmatprep.subr.mxu0 0.0
    %1552 = vmatpush1.msra.mxu0 0.0
    %1553 = vmatprep.subr.mxu0 0.0
    %1554 = vmatpush1.msra.mxu0 0.0
    %1555 = vmatprep.subr.mxu0 0.0
    %1556 = vmatpush1.msra.mxu0 0.0
    %1557 = vmatprep.subr.mxu0 0.0
    %1558 = vmatpush1.msra.mxu0 0.0
    %1559 = vmatprep.subr.mxu0 0.0
    %1560 = vmatpush1.msra.mxu0 0.0
    %1561 = vmatprep.subr.mxu0 0.0
    %1562 = vmatpush1.msra.mxu0 0.0
    %1563 = vmatprep.subr.mxu0 0.0
    %1564 = vmatpush1.msra.mxu0 0.0
    %1565 = vmatprep.subr.mxu0 0.0
    %1566 = vmatpush1.msra.mxu0 0.0
    %1567 = vmatprep.subr.mxu0 0.0
    %1568 = vmatpush1.msra.mxu0 0.0
    %1569 = vmatprep.subr.mxu0 0.0
    %1570 = vmatpush1.msra.mxu0 0.0
    %1571 = vmatprep.subr.mxu0 0.0
    %1572 = vmatpush1.msra.mxu0 0.0
    %1573 = vmatprep.mubr.f32.mxu0 0.0
    %1574 = vmatmul.mubr.f32.gmra.mrb[0].mxu0 %v1507
    %v1575 = vpop.f32.mrb[0].mxu0
    %v1576 = vadd.f32 0.0, %v1575
    %v1577 = vpop.f32.mrb[0].mxu0
    %1578 = vdwg.mxu0
    %1581 = vrot.lane.b32.xlu0 %v1500, 24
    %v1582 = vpop.permute.xlu0 %1581
    %1583 = vrot.lane.b32.xlu0 %v1576, 24
    %v1584 = vpop.permute.xlu0 %1583
    %vm1587 = vcmask 261312
    %1588 = vst.msk [vmem:[#allocation2] sm:$0xff] %vm1587, %v1582
    %1589 = vst.msk [vmem:[#allocation2 + $0x8] sm:$0xff] %vm1587, %v1584
    %v1590 = vld [vmem:[#allocation2] sm:$0xff]
    %v1591 = vld [vmem:[#allocation2 + $0x8] sm:$0xff]
    %v1592 = vld [vmem:[#allocation6 + $0x30] sm:$0xff]
    %v1593 = vld [vmem:[#allocation6 + $0x38] sm:$0xff]
    %v1594 = vld [vmem:[#allocation6 + $0x40] sm:$0xff]
    %v1595 = vld [vmem:[#allocation6 + $0x48] sm:$0xff]
    %v1596 = vld [vmem:[#allocation8 + $0x9] sm:$0x1]
    %v1597 = vlaneseq
    %v1598 = vshrl.u32 %v1597, 7
    %v1599 = vsub.s32 0, %v1598
    %v1600 = vrot.slane %v1596, %v1599
    %v1602 = vsel %vm154, %v1590, 0
    %v1605 = vsel %vm154, %v1591, 0
    %1607 = vmatprep.subr.mxu0 0.0
    %1608 = vmatpush1.msra.mxu0 %v1592
    %1609 = vmatprep.subr.mxu0 0.0
    %1610 = vmatpush1.msra.mxu0 %v1593
    %1611 = vmatprep.subr.mxu0 0.0
    %1612 = vmatpush1.msra.mxu0 %v1594
    %1613 = vmatprep.subr.mxu0 0.0
    %1614 = vmatpush1.msra.mxu0 %v1595
    %1615 = vmatprep.subr.mxu0 0.0
    %1616 = vmatpush1.msra.mxu0 0.0
    %1617 = vmatprep.subr.mxu0 0.0
    %1618 = vmatpush1.msra.mxu0 0.0
    %1619 = vmatprep.subr.mxu0 0.0
    %1620 = vmatpush1.msra.mxu0 0.0
    %1621 = vmatprep.subr.mxu0 0.0
    %1622 = vmatpush1.msra.mxu0 0.0
    %1623 = vmatprep.subr.mxu0 0.0
    %1624 = vmatpush1.msra.mxu0 0.0
    %1625 = vmatprep.subr.mxu0 0.0
    %1626 = vmatpush1.msra.mxu0 0.0
    %1627 = vmatprep.subr.mxu0 0.0
    %1628 = vmatpush1.msra.mxu0 0.0
    %1629 = vmatprep.subr.mxu0 0.0
    %1630 = vmatpush1.msra.mxu0 0.0
    %1631 = vmatprep.subr.mxu0 0.0
    %1632 = vmatpush1.msra.mxu0 0.0
    %1633 = vmatprep.subr.mxu0 0.0
    %1634 = vmatpush1.msra.mxu0 0.0
    %1635 = vmatprep.subr.mxu0 0.0
    %1636 = vmatpush1.msra.mxu0 0.0
    %1637 = vmatprep.subr.mxu0 0.0
    %1638 = vmatpush1.msra.mxu0 0.0
    %1639 = vmatprep.subr.mxu0 0.0
    %1640 = vmatpush1.msra.mxu0 0.0
    %1641 = vmatprep.subr.mxu0 0.0
    %1642 = vmatpush1.msra.mxu0 0.0
    %1643 = vmatprep.subr.mxu0 0.0
    %1644 = vmatpush1.msra.mxu0 0.0
    %1645 = vmatprep.subr.mxu0 0.0
    %1646 = vmatpush1.msra.mxu0 0.0
    %1647 = vmatprep.subr.mxu0 0.0
    %1648 = vmatpush1.msra.mxu0 0.0
    %1649 = vmatprep.subr.mxu0 0.0
    %1650 = vmatpush1.msra.mxu0 0.0
    %1651 = vmatprep.subr.mxu0 0.0
    %1652 = vmatpush1.msra.mxu0 0.0
    %1653 = vmatprep.subr.mxu0 0.0
    %1654 = vmatpush1.msra.mxu0 0.0
    %1655 = vmatprep.subr.mxu0 0.0
    %1656 = vmatpush1.msra.mxu0 0.0
    %1657 = vmatprep.subr.mxu0 0.0
    %1658 = vmatpush1.msra.mxu0 0.0
    %1659 = vmatprep.subr.mxu0 0.0
    %1660 = vmatpush1.msra.mxu0 0.0
    %1661 = vmatprep.subr.mxu0 0.0
    %1662 = vmatpush1.msra.mxu0 0.0
    %1663 = vmatprep.subr.mxu0 0.0
    %1664 = vmatpush1.msra.mxu0 0.0
    %1665 = vmatprep.subr.mxu0 0.0
    %1666 = vmatpush1.msra.mxu0 0.0
    %1667 = vmatprep.subr.mxu0 0.0
    %1668 = vmatpush1.msra.mxu0 0.0
    %1669 = vmatprep.subr.mxu0 0.0
    %1670 = vmatpush1.msra.mxu0 0.0
    %1671 = vmatprep.mubr.f32.mxu0 0.0
    %1672 = vmatmul.mubr.f32.gmra.mrb[0].mxu0 %v1602
    %v1673 = vpop.f32.mrb[0].mxu0
    %v1674 = vadd.f32 %v1600, %v1673
    %v1675 = vpop.f32.mrb[0].mxu0
    %1676 = vmatprep.mubr.f32.mxu0 0.0
    %1677 = vmatmul.mubr.f32.gmra.mrb[0].mxu0 %v1605
    %v1678 = vpop.f32.mrb[0].mxu0
    %v1679 = vadd.f32 %v1600, %v1678
    %v1680 = vpop.f32.mrb[0].mxu0
    %1681 = vdwg.mxu0
    %v1682 = vadd.f32 %v143, %v1674
    %v1683 = vadd.f32 %v144, %v1679
    %v1684 = vld [vmem:[#allocation8 + $0xa] sm:$0x1]
    %v1685 = vld [vmem:[#allocation8 + $0xb] sm:$0x1]
    %v1686 = vsel %vm154, %v1682, 0.0
    %1687 = vadd.xlane.f32.xlu0 %v1686
    %v1688 = vpop.xlane.xlu0 %1687
    %v1689 = vsel %vm154, %v1683, 0.0
    %1690 = vadd.xlane.f32.xlu0 %v1689
    %v1691 = vpop.xlane.xlu0 %1690
    %v1692 = vrcp.pop 32.0
    %v1693 = vmul.f32 %v1688, %v1692
    %v1694 = vmul.f32 %v1691, %v1692
    %v1695 = vsub.f32 %v1682, %v1693
    %v1696 = vsub.f32 %v1683, %v1694
    %v1697 = vmul.f32 %v1695, %v1695
    %v1698 = vmul.f32 %v1696, %v1696
    %v1699 = vsel %vm154, %v1697, 0.0
    %1700 = vadd.xlane.f32.xlu0 %v1699
    %v1701 = vpop.xlane.xlu0 %1700
    %v1702 = vsel %vm154, %v1698, 0.0
    %1703 = vadd.xlane.f32.xlu0 %v1702
    %v1704 = vpop.xlane.xlu0 %1703
    %v1705 = vmul.f32 %v1701, %v1692
    %v1706 = vmul.f32 %v1704, %v1692
    %v1707 = vadd.f32 %v1705, 1e-05
    %v1708 = vadd.f32 %v1706, 1e-05
    %v1709 = vrsqrt.pop %v1707
    %v1710 = vrsqrt.pop %v1708
    %v1711 = vmul.f32 %v1695, %v1709
    %v1712 = vmul.f32 %v1696, %v1710
    %v1713 = vlaneseq
    %v1714 = vshrl.u32 %v1713, 7
    %v1715 = vsub.s32 0, %v1714
    %v1716 = vrot.slane %v1684, %v1715
    %v1717 = vmul.f32 %v1711, %v1716
    %v1718 = vmul.f32 %v1712, %v1716
    %v1719 = vlaneseq
    %v1720 = vshrl.u32 %v1719, 7
    %v1721 = vsub.s32 0, %v1720
    %v1722 = vrot.slane %v1685, %v1721
    %v1723 = vadd.f32 %v1717, %v1722
    %v1724 = vadd.f32 %v1718, %v1722
    %v1725 = vld [vmem:[#allocation6 + $0x50] sm:$0xff]
    %v1726 = vld [vmem:[#allocation6 + $0x58] sm:$0xff]
    %v1727 = vld [vmem:[#allocation6 + $0x60] sm:$0xff]
    %v1728 = vld [vmem:[#allocation6 + $0x68] sm:$0xff]
    %v1729 = vld [vmem:[#allocation8 + $0xc] sm:$0x1]
    %v1730 = vlaneseq
    %v1731 = vshrl.u32 %v1730, 7
    %v1732 = vsub.s32 0, %v1731
    %v1733 = vrot.slane %v1729, %v1732
    %v1735 = vsel %vm154, %v1723, 0
    %v1738 = vsel %vm154, %v1724, 0
    %1740 = vmatprep.subr.mxu0 0.0
    %1741 = vmatpush1.msra.mxu0 %v1725
    %1742 = vmatprep.subr.mxu0 0.0
    %1743 = vmatpush1.msra.mxu0 %v1726
    %1744 = vmatprep.subr.mxu0 0.0
    %1745 = vmatpush1.msra.mxu0 %v1727
    %1746 = vmatprep.subr.mxu0 0.0
    %1747 = vmatpush1.msra.mxu0 %v1728
    %1748 = vmatprep.subr.mxu0 0.0
    %1749 = vmatpush1.msra.mxu0 0.0
    %1750 = vmatprep.subr.mxu0 0.0
    %1751 = vmatpush1.msra.mxu0 0.0
    %1752 = vmatprep.subr.mxu0 0.0
    %1753 = vmatpush1.msra.mxu0 0.0
    %1754 = vmatprep.subr.mxu0 0.0
    %1755 = vmatpush1.msra.mxu0 0.0
    %1756 = vmatprep.subr.mxu0 0.0
    %1757 = vmatpush1.msra.mxu0 0.0
    %1758 = vmatprep.subr.mxu0 0.0
    %1759 = vmatpush1.msra.mxu0 0.0
    %1760 = vmatprep.subr.mxu0 0.0
    %1761 = vmatpush1.msra.mxu0 0.0
    %1762 = vmatprep.subr.mxu0 0.0
    %1763 = vmatpush1.msra.mxu0 0.0
    %1764 = vmatprep.subr.mxu0 0.0
    %1765 = vmatpush1.msra.mxu0 0.0
    %1766 = vmatprep.subr.mxu0 0.0
    %1767 = vmatpush1.msra.mxu0 0.0
    %1768 = vmatprep.subr.mxu0 0.0
    %1769 = vmatpush1.msra.mxu0 0.0
    %1770 = vmatprep.subr.mxu0 0.0
    %1771 = vmatpush1.msra.mxu0 0.0
    %1772 = vmatprep.subr.mxu0 0.0
    %1773 = vmatpush1.msra.mxu0 0.0
    %1774 = vmatprep.subr.mxu0 0.0
    %1775 = vmatpush1.msra.mxu0 0.0
    %1776 = vmatprep.subr.mxu0 0.0
    %1777 = vmatpush1.msra.mxu0 0.0
    %1778 = vmatprep.subr.mxu0 0.0
    %1779 = vmatpush1.msra.mxu0 0.0
    %1780 = vmatprep.subr.mxu0 0.0
    %1781 = vmatpush1.msra.mxu0 0.0
    %1782 = vmatprep.subr.mxu0 0.0
    %1783 = vmatpush1.msra.mxu0 0.0
    %1784 = vmatprep.subr.mxu0 0.0
    %1785 = vmatpush1.msra.mxu0 0.0
    %1786 = vmatprep.subr.mxu0 0.0
    %1787 = vmatpush1.msra.mxu0 0.0
    %1788 = vmatprep.subr.mxu0 0.0
    %1789 = vmatpush1.msra.mxu0 0.0
    %1790 = vmatprep.subr.mxu0 0.0
    %1791 = vmatpush1.msra.mxu0 0.0
    %1792 = vmatprep.subr.mxu0 0.0
    %1793 = vmatpush1.msra.mxu0 0.0
    %1794 = vmatprep.subr.mxu0 0.0
    %1795 = vmatpush1.msra.mxu0 0.0
    %1796 = vmatprep.subr.mxu0 0.0
    %1797 = vmatpush1.msra.mxu0 0.0
    %1798 = vmatprep.subr.mxu0 0.0
    %1799 = vmatpush1.msra.mxu0 0.0
    %1800 = vmatprep.subr.mxu0 0.0
    %1801 = vmatpush1.msra.mxu0 0.0
    %1802 = vmatprep.subr.mxu0 0.0
    %1803 = vmatpush1.msra.mxu0 0.0
    %1804 = vmatprep.mubr.f32.mxu0 0.0
    %1805 = vmatmul.mubr.f32.gmra.mrb[0].mxu0 %v1735
    %v1806 = vpop.f32.mrb[0].mxu0
    %v1807 = vadd.f32 %v1733, %v1806
    %v1808 = vpop.f32.mrb[0].mxu0
    %1809 = vmatprep.mubr.f32.mxu0 0.0
    %1810 = vmatmul.mubr.f32.gmra.mrb[0].mxu0 %v1738
    %v1811 = vpop.f32.mrb[0].mxu0
    %v1812 = vadd.f32 %v1733, %v1811
    %v1813 = vpop.f32.mrb[0].mxu0
    %1814 = vdwg.mxu0
    %v1815 = vmax.f32 %v1807, 0.0
    %v1816 = vmax.f32 %v1812, 0.0
    %v1817 = vld [vmem:[#allocation6 + $0x70] sm:$0xff]
    %v1818 = vld [vmem:[#allocation6 + $0x78] sm:$0xff]
    %v1819 = vld [vmem:[#allocation6 + $0x80] sm:$0xff]
    %v1820 = vld [vmem:[#allocation6 + $0x88] sm:$0xff]
    %v1821 = vld [vmem:[#allocation8 + $0xd] sm:$0x1]
    %v1822 = vlaneseq
    %v1823 = vshrl.u32 %v1822, 7
    %v1824 = vsub.s32 0, %v1823
    %v1825 = vrot.slane %v1821, %v1824
    %v1827 = vsel %vm154, %v1815, 0
    %v1830 = vsel %vm154, %v1816, 0
    %1832 = vmatprep.subr.mxu0 0.0
    %1833 = vmatpush1.msra.mxu0 %v1817
    %1834 = vmatprep.subr.mxu0 0.0
    %1835 = vmatpush1.msra.mxu0 %v1818
    %1836 = vmatprep.subr.mxu0 0.0
    %1837 = vmatpush1.msra.mxu0 %v1819
    %1838 = vmatprep.subr.mxu0 0.0
    %1839 = vmatpush1.msra.mxu0 %v1820
    %1840 = vmatprep.subr.mxu0 0.0
    %1841 = vmatpush1.msra.mxu0 0.0
    %1842 = vmatprep.subr.mxu0 0.0
    %1843 = vmatpush1.msra.mxu0 0.0
    %1844 = vmatprep.subr.mxu0 0.0
    %1845 = vmatpush1.msra.mxu0 0.0
    %1846 = vmatprep.subr.mxu0 0.0
    %1847 = vmatpush1.msra.mxu0 0.0
    %1848 = vmatprep.subr.mxu0 0.0
    %1849 = vmatpush1.msra.mxu0 0.0
    %1850 = vmatprep.subr.mxu0 0.0
    %1851 = vmatpush1.msra.mxu0 0.0
    %1852 = vmatprep.subr.mxu0 0.0
    %1853 = vmatpush1.msra.mxu0 0.0
    %1854 = vmatprep.subr.mxu0 0.0
    %1855 = vmatpush1.msra.mxu0 0.0
    %1856 = vmatprep.subr.mxu0 0.0
    %1857 = vmatpush1.msra.mxu0 0.0
    %1858 = vmatprep.subr.mxu0 0.0
    %1859 = vmatpush1.msra.mxu0 0.0
    %1860 = vmatprep.subr.mxu0 0.0
    %1861 = vmatpush1.msra.mxu0 0.0
    %1862 = vmatprep.subr.mxu0 0.0
    %1863 = vmatpush1.msra.mxu0 0.0
    %1864 = vmatprep.subr.mxu0 0.0
    %1865 = vmatpush1.msra.mxu0 0.0
    %1866 = vmatprep.subr.mxu0 0.0
    %1867 = vmatpush1.msra.mxu0 0.0
    %1868 = vmatprep.subr.mxu0 0.0
    %1869 = vmatpush1.msra.mxu0 0.0
    %1870 = vmatprep.subr.mxu0 0.0
    %1871 = vmatpush1.msra.mxu0 0.0
    %1872 = vmatprep.subr.mxu0 0.0
    %1873 = vmatpush1.msra.mxu0 0.0
    %1874 = vmatprep.subr.mxu0 0.0
    %1875 = vmatpush1.msra.mxu0 0.0
    %1876 = vmatprep.subr.mxu0 0.0
    %1877 = vmatpush1.msra.mxu0 0.0
    %1878 = vmatprep.subr.mxu0 0.0
    %1879 = vmatpush1.msra.mxu0 0.0
    %1880 = vmatprep.subr.mxu0 0.0
    %1881 = vmatpush1.msra.mxu0 0.0
    %1882 = vmatprep.subr.mxu0 0.0
    %1883 = vmatpush1.msra.mxu0 0.0
    %1884 = vmatprep.subr.mxu0 0.0
    %1885 = vmatpush1.msra.mxu0 0.0
    %1886 = vmatprep.subr.mxu0 0.0
    %1887 = vmatpush1.msra.mxu0 0.0
    %1888 = vmatprep.subr.mxu0 0.0
    %1889 = vmatpush1.msra.mxu0 0.0
    %1890 = vmatprep.subr.mxu0 0.0
    %1891 = vmatpush1.msra.mxu0 0.0
    %1892 = vmatprep.subr.mxu0 0.0
    %1893 = vmatpush1.msra.mxu0 0.0
    %1894 = vmatprep.subr.mxu0 0.0
    %1895 = vmatpush1.msra.mxu0 0.0
    %1896 = vmatprep.mubr.f32.mxu0 0.0
    %1897 = vmatmul.mubr.f32.gmra.mrb[0].mxu0 %v1827
    %v1898 = vpop.f32.mrb[0].mxu0
    %v1899 = vadd.f32 %v1825, %v1898
    %v1900 = vpop.f32.mrb[0].mxu0
    %1901 = vmatprep.mubr.f32.mxu0 0.0
    %1902 = vmatmul.mubr.f32.gmra.mrb[0].mxu0 %v1830
    %v1903 = vpop.f32.mrb[0].mxu0
    %v1904 = vadd.f32 %v1825, %v1903
    %v1905 = vpop.f32.mrb[0].mxu0
    %1906 = vdwg.mxu0
    %v1907 = vadd.f32 %v1723, %v1899
    %v1908 = vadd.f32 %v1724, %v1904
    %v1909 = vld [vmem:[#allocation8 + $0xe] sm:$0x1]
    %v1910 = vld [vmem:[#allocation8 + $0xf] sm:$0x1]
    %v1911 = vsel %vm154, %v1907, 0.0
    %1912 = vadd.xlane.f32.xlu0 %v1911
    %v1913 = vpop.xlane.xlu0 %1912
    %v1914 = vsel %vm154, %v1908, 0.0
    %1915 = vadd.xlane.f32.xlu0 %v1914
    %v1916 = vpop.xlane.xlu0 %1915
    %v1917 = vmul.f32 %v1913, %v1692
    %v1918 = vmul.f32 %v1916, %v1692
    %v1919 = vsub.f32 %v1907, %v1917
    %v1920 = vsub.f32 %v1908, %v1918
    %v1921 = vmul.f32 %v1919, %v1919
    %v1922 = vmul.f32 %v1920, %v1920
    %v1923 = vsel %vm154, %v1921, 0.0
    %1924 = vadd.xlane.f32.xlu0 %v1923
    %v1925 = vpop.xlane.xlu0 %1924
    %v1926 = vsel %vm154, %v1922, 0.0
    %1927 = vadd.xlane.f32.xlu0 %v1926
    %v1928 = vpop.xlane.xlu0 %1927
    %v1929 = vmul.f32 %v1925, %v1692
    %v1930 = vmul.f32 %v1928, %v1692
    %v1931 = vadd.f32 %v1929, 1e-05
    %v1932 = vadd.f32 %v1930, 1e-05
    %v1933 = vrsqrt.pop %v1931
    %v1934 = vrsqrt.pop %v1932
    %v1935 = vmul.f32 %v1919, %v1933
    %v1936 = vmul.f32 %v1920, %v1934
    %v1937 = vlaneseq
    %v1938 = vshrl.u32 %v1937, 7
    %v1939 = vsub.s32 0, %v1938
    %v1940 = vrot.slane %v1909, %v1939
    %v1941 = vmul.f32 %v1935, %v1940
    %v1942 = vmul.f32 %v1936, %v1940
    %v1943 = vlaneseq
    %v1944 = vshrl.u32 %v1943, 7
    %v1945 = vsub.s32 0, %v1944
    %v1946 = vrot.slane %v1910, %v1945
    %v1947 = vadd.f32 %v1941, %v1946
    %v1948 = vadd.f32 %v1942, %v1946
    %v1949 = vld [vmem:[#allocation6 + $0x90] sm:$0xff]
    %v1950 = vld [vmem:[#allocation6 + $0x98] sm:$0xff]
    %v1951 = vld [vmem:[#allocation6 + $0xa0] sm:$0xff]
    %v1952 = vld [vmem:[#allocation6 + $0xa8] sm:$0xff]
    %v1953 = vld [vmem:[#allocation8 + $0x10] sm:$0x1]
    %v1954 = vlaneseq
    %v1955 = vshrl.u32 %v1954, 7
    %v1956 = vsub.s32 0, %v1955
    %v1957 = vrot.slane %v1953, %v1956
    %v1959 = vsel %vm154, %v1947, 0
    %v1962 = vsel %vm154, %v1948, 0
    %1964 = vmatprep.subr.mxu0 0.0
    %1965 = vmatpush1.msra.mxu0 %v1949
    %1966 = vmatprep.subr.mxu0 0.0
    %1967 = vmatpush1.msra.mxu0 %v1950
    %1968 = vmatprep.subr.mxu0 0.0
    %1969 = vmatpush1.msra.mxu0 %v1951
    %1970 = vmatprep.subr.mxu0 0.0
    %1971 = vmatpush1.msra.mxu0 %v1952
    %1972 = vmatprep.subr.mxu0 0.0
    %1973 = vmatpush1.msra.mxu0 0.0
    %1974 = vmatprep.subr.mxu0 0.0
    %1975 = vmatpush1.msra.mxu0 0.0
    %1976 = vmatprep.subr.mxu0 0.0
    %1977 = vmatpush1.msra.mxu0 0.0
    %1978 = vmatprep.subr.mxu0 0.0
    %1979 = vmatpush1.msra.mxu0 0.0
    %1980 = vmatprep.subr.mxu0 0.0
    %1981 = vmatpush1.msra.mxu0 0.0
    %1982 = vmatprep.subr.mxu0 0.0
    %1983 = vmatpush1.msra.mxu0 0.0
    %1984 = vmatprep.subr.mxu0 0.0
    %1985 = vmatpush1.msra.mxu0 0.0
    %1986 = vmatprep.subr.mxu0 0.0
    %1987 = vmatpush1.msra.mxu0 0.0
    %1988 = vmatprep.subr.mxu0 0.0
    %1989 = vmatpush1.msra.mxu0 0.0
    %1990 = vmatprep.subr.mxu0 0.0
    %1991 = vmatpush1.msra.mxu0 0.0
    %1992 = vmatprep.subr.mxu0 0.0
    %1993 = vmatpush1.msra.mxu0 0.0
    %1994 = vmatprep.subr.mxu0 0.0
    %1995 = vmatpush1.msra.mxu0 0.0
    %1996 = vmatprep.subr.mxu0 0.0
    %1997 = vmatpush1.msra.mxu0 0.0
    %1998 = vmatprep.subr.mxu0 0.0
    %1999 = vmatpush1.msra.mxu0 0.0
    %2000 = vmatprep.subr.mxu0 0.0
    %2001 = vmatpush1.msra.mxu0 0.0
    %2002 = vmatprep.subr.mxu0 0.0
    %2003 = vmatpush1.msra.mxu0 0.0
    %2004 = vmatprep.subr.mxu0 0.0
    %2005 = vmatpush1.msra.mxu0 0.0
    %2006 = vmatprep.subr.mxu0 0.0
    %2007 = vmatpush1.msra.mxu0 0.0
    %2008 = vmatprep.subr.mxu0 0.0
    %2009 = vmatpush1.msra.mxu0 0.0
    %2010 = vmatprep.subr.mxu0 0.0
    %2011 = vmatpush1.msra.mxu0 0.0
    %2012 = vmatprep.subr.mxu0 0.0
    %2013 = vmatpush1.msra.mxu0 0.0
    %2014 = vmatprep.subr.mxu0 0.0
    %2015 = vmatpush1.msra.mxu0 0.0
    %2016 = vmatprep.subr.mxu0 0.0
    %2017 = vmatpush1.msra.mxu0 0.0
    %2018 = vmatprep.subr.mxu0 0.0
    %2019 = vmatpush1.msra.mxu0 0.0
    %2020 = vmatprep.subr.mxu0 0.0
    %2021 = vmatpush1.msra.mxu0 0.0
    %2022 = vmatprep.subr.mxu0 0.0
    %2023 = vmatpush1.msra.mxu0 0.0
    %2024 = vmatprep.subr.mxu0 0.0
    %2025 = vmatpush1.msra.mxu0 0.0
    %2026 = vmatprep.subr.mxu0 0.0
    %2027 = vmatpush1.msra.mxu0 0.0
    %2028 = vmatprep.mubr.f32.mxu0 0.0
    %2029 = vmatmul.mubr.f32.gmra.mrb[0].mxu0 %v1959
    %v2030 = vpop.f32.mrb[0].mxu0
    %v2031 = vadd.f32 %v1957, %v2030
    %v2032 = vpop.f32.mrb[0].mxu0
    %2033 = vmatprep.mubr.f32.mxu0 0.0
    %2034 = vmatmul.mubr.f32.gmra.mrb[0].mxu0 %v1962
    %v2035 = vpop.f32.mrb[0].mxu0
    %v2036 = vadd.f32 %v1957, %v2035
    %v2037 = vpop.f32.mrb[0].mxu0
    %2038 = vdwg.mxu0
    %2040 = vrot.lane.b32.xlu0 %v2031, 96
    %v2041 = vpop.permute.xlu0 %2040
    %v2042 = vsel %vm239, %v2031, 0
    %v2044 = vsel %vm239, %v2041, 0
    %2046 = vmatprep.subr.mxu0 0.0
    %2047 = vmatpush1.xpose.msra.mxu0 %v2044
    %2048 = vmatprep.subr.mxu0 0.0
    %2049 = vmatpush1.xpose.msra.mxu0 0.0
    %2050 = vmatprep.subr.mxu0 0.0
    %2051 = vmatpush1.xpose.msra.mxu0 0.0
    %2052 = vmatprep.subr.mxu0 0.0
    %2053 = vmatpush1.xpose.msra.mxu0 0.0
    %2054 = vmatprep.subr.mxu0 0.0
    %2055 = vmatpush1.xpose.msra.mxu0 0.0
    %2056 = vmatprep.subr.mxu0 0.0
    %2057 = vmatpush1.xpose.msra.mxu0 0.0
    %2058 = vmatprep.subr.mxu0 0.0
    %2059 = vmatpush1.xpose.msra.mxu0 0.0
    %2060 = vmatprep.subr.mxu0 0.0
    %2061 = vmatpush1.xpose.msra.mxu0 0.0
    %2062 = vmatprep.subr.mxu0 0.0
    %2063 = vmatpush1.xpose.msra.mxu0 0.0
    %2064 = vmatprep.subr.mxu0 0.0
    %2065 = vmatpush1.xpose.msra.mxu0 0.0
    %2066 = vmatprep.subr.mxu0 0.0
    %2067 = vmatpush1.xpose.msra.mxu0 0.0
    %2068 = vmatprep.subr.mxu0 0.0
    %2069 = vmatpush1.xpose.msra.mxu0 0.0
    %2070 = vmatprep.subr.mxu0 0.0
    %2071 = vmatpush1.xpose.msra.mxu0 0.0
    %2072 = vmatprep.subr.mxu0 0.0
    %2073 = vmatpush1.xpose.msra.mxu0 0.0
    %2074 = vmatprep.subr.mxu0 0.0
    %2075 = vmatpush1.xpose.msra.mxu0 0.0
    %2076 = vmatprep.subr.mxu0 0.0
    %2077 = vmatpush1.xpose.msra.mxu0 0.0
    %2078 = vmatprep.subr.mxu0 0.0
    %2079 = vmatpush1.xpose.msra.mxu0 0.0
    %2080 = vmatprep.subr.mxu0 0.0
    %2081 = vmatpush1.xpose.msra.mxu0 0.0
    %2082 = vmatprep.subr.mxu0 0.0
    %2083 = vmatpush1.xpose.msra.mxu0 0.0
    %2084 = vmatprep.subr.mxu0 0.0
    %2085 = vmatpush1.xpose.msra.mxu0 0.0
    %2086 = vmatprep.subr.mxu0 0.0
    %2087 = vmatpush1.xpose.msra.mxu0 0.0
    %2088 = vmatprep.subr.mxu0 0.0
    %2089 = vmatpush1.xpose.msra.mxu0 0.0
    %2090 = vmatprep.subr.mxu0 0.0
    %2091 = vmatpush1.xpose.msra.mxu0 0.0
    %2092 = vmatprep.subr.mxu0 0.0
    %2093 = vmatpush1.xpose.msra.mxu0 0.0
    %2094 = vmatprep.subr.mxu0 0.0
    %2095 = vmatpush1.xpose.msra.mxu0 0.0
    %2096 = vmatprep.subr.mxu0 0.0
    %2097 = vmatpush1.xpose.msra.mxu0 0.0
    %2098 = vmatprep.subr.mxu0 0.0
    %2099 = vmatpush1.xpose.msra.mxu0 0.0
    %2100 = vmatprep.subr.mxu0 0.0
    %2101 = vmatpush1.xpose.msra.mxu0 0.0
    %2102 = vmatprep.subr.mxu0 0.0
    %2103 = vmatpush1.xpose.msra.mxu0 0.0
    %2104 = vmatprep.subr.mxu0 0.0
    %2105 = vmatpush1.xpose.msra.mxu0 0.0
    %2106 = vmatprep.subr.mxu0 0.0
    %2107 = vmatpush1.xpose.msra.mxu0 0.0
    %2108 = vmatprep.subr.mxu0 0.0
    %2109 = vmatpush1.xpose.msra.mxu0 0.0
    %2110 = vmatprep.mubr.f32.mxu0 0.0
    %2111 = vmatmul.mubr.f32.gmra.mrb[0].mxu0 %v2042
    %v2112 = vpop.f32.mrb[0].mxu0
    %v2113 = vadd.f32 0.0, %v2112
    %v2114 = vpop.f32.mrb[0].mxu0
    %2115 = vdwg.mxu0
    %2117 = vrot.lane.b32.xlu0 %v2036, 96
    %v2118 = vpop.permute.xlu0 %2117
    %v2119 = vsel %vm239, %v2036, 0
    %v2121 = vsel %vm239, %v2118, 0
    %2123 = vmatprep.subr.mxu0 0.0
    %2124 = vmatpush1.xpose.msra.mxu0 %v2121
    %2125 = vmatprep.subr.mxu0 0.0
    %2126 = vmatpush1.xpose.msra.mxu0 0.0
    %2127 = vmatprep.subr.mxu0 0.0
    %2128 = vmatpush1.xpose.msra.mxu0 0.0
    %2129 = vmatprep.subr.mxu0 0.0
    %2130 = vmatpush1.xpose.msra.mxu0 0.0
    %2131 = vmatprep.subr.mxu0 0.0
    %2132 = vmatpush1.xpose.msra.mxu0 0.0
    %2133 = vmatprep.subr.mxu0 0.0
    %2134 = vmatpush1.xpose.msra.mxu0 0.0
    %2135 = vmatprep.subr.mxu0 0.0
    %2136 = vmatpush1.xpose.msra.mxu0 0.0
    %2137 = vmatprep.subr.mxu0 0.0
    %2138 = vmatpush1.xpose.msra.mxu0 0.0
    %2139 = vmatprep.subr.mxu0 0.0
    %2140 = vmatpush1.xpose.msra.mxu0 0.0
    %2141 = vmatprep.subr.mxu0 0.0
    %2142 = vmatpush1.xpose.msra.mxu0 0.0
    %2143 = vmatprep.subr.mxu0 0.0
    %2144 = vmatpush1.xpose.msra.mxu0 0.0
    %2145 = vmatprep.subr.mxu0 0.0
    %2146 = vmatpush1.xpose.msra.mxu0 0.0
    %2147 = vmatprep.subr.mxu0 0.0
    %2148 = vmatpush1.xpose.msra.mxu0 0.0
    %2149 = vmatprep.subr.mxu0 0.0
    %2150 = vmatpush1.xpose.msra.mxu0 0.0
    %2151 = vmatprep.subr.mxu0 0.0
    %2152 = vmatpush1.xpose.msra.mxu0 0.0
    %2153 = vmatprep.subr.mxu0 0.0
    %2154 = vmatpush1.xpose.msra.mxu0 0.0
    %2155 = vmatprep.subr.mxu0 0.0
    %2156 = vmatpush1.xpose.msra.mxu0 0.0
    %2157 = vmatprep.subr.mxu0 0.0
    %2158 = vmatpush1.xpose.msra.mxu0 0.0
    %2159 = vmatprep.subr.mxu0 0.0
    %2160 = vmatpush1.xpose.msra.mxu0 0.0
    %2161 = vmatprep.subr.mxu0 0.0
    %2162 = vmatpush1.xpose.msra.mxu0 0.0
    %2163 = vmatprep.subr.mxu0 0.0
    %2164 = vmatpush1.xpose.msra.mxu0 0.0
    %2165 = vmatprep.subr.mxu0 0.0
    %2166 = vmatpush1.xpose.msra.mxu0 0.0
    %2167 = vmatprep.subr.mxu0 0.0
    %2168 = vmatpush1.xpose.msra.mxu0 0.0
    %2169 = vmatprep.subr.mxu0 0.0
    %2170 = vmatpush1.xpose.msra.mxu0 0.0
    %2171 = vmatprep.subr.mxu0 0.0
    %2172 = vmatpush1.xpose.msra.mxu0 0.0
    %2173 = vmatprep.subr.mxu0 0.0
    %2174 = vmatpush1.xpose.msra.mxu0 0.0
    %2175 = vmatprep.subr.mxu0 0.0
    %2176 = vmatpush1.xpose.msra.mxu0 0.0
    %2177 = vmatprep.subr.mxu0 0.0
    %2178 = vmatpush1.xpose.msra.mxu0 0.0
    %2179 = vmatprep.subr.mxu0 0.0
    %2180 = vmatpush1.xpose.msra.mxu0 0.0
    %2181 = vmatprep.subr.mxu0 0.0
    %2182 = vmatpush1.xpose.msra.mxu0 0.0
    %2183 = vmatprep.subr.mxu0 0.0
    %2184 = vmatpush1.xpose.msra.mxu0 0.0
    %2185 = vmatprep.subr.mxu0 0.0
    %2186 = vmatpush1.xpose.msra.mxu0 0.0
    %2187 = vmatprep.mubr.f32.mxu0 0.0
    %2188 = vmatmul.mubr.f32.gmra.mrb[0].mxu0 %v2119
    %v2189 = vpop.f32.mrb[0].mxu0
    %v2190 = vadd.f32 0.0, %v2189
    %v2191 = vpop.f32.mrb[0].mxu0
    %2192 = vdwg.mxu0
    %v2193 = vsel %vm239, %v2113, -inf
    %2194 = vmax.xlane.f32.xlu0 %v2193
    %v2195 = vpop.xlane.xlu0 %2194
    %v2196 = vsel %vm239, %v2190, -inf
    %2197 = vmax.xlane.f32.xlu0 %v2196
    %v2198 = vpop.xlane.xlu0 %2197
    %v2199 = vsub.f32 %v2113, %v2195
    %v2200 = vsub.f32 %v2190, %v2198
    %v2201 = vmul.f32 %v2199, 1.442695
    %v2202 = vpow.pop %v2201
    %v2203 = vmul.f32 %v2200, 1.442695
    %v2204 = vpow.pop %v2203
    %v2205 = vsel %vm239, %v2202, 0.0
    %2206 = vadd.xlane.f32.xlu0 %v2205
    %v2207 = vpop.xlane.xlu0 %2206
    %v2208 = vsel %vm239, %v2204, 0.0
    %2209 = vadd.xlane.f32.xlu0 %v2208
    %v2210 = vpop.xlane.xlu0 %2209
    %v2211 = vrcp.pop %v2207
    %v2212 = vrcp.pop %v2210
    %v2213 = vmul.f32 %v2202, %v2211
    %v2214 = vmul.f32 %v2204, %v2212
    %2215 = vrot.lane.b32.xlu0 %v2031, 64
    %v2216 = vpop.permute.xlu0 %2215
    %v2219 = vsel %vm239, %v2213, 0
    %2221 = vmatprep.subr.mxu0 0.0
    %2222 = vmatpush1.msra.mxu0 %v2216
    %2223 = vmatprep.subr.mxu0 0.0
    %2224 = vmatpush1.msra.mxu0 0.0
    %2225 = vmatprep.subr.mxu0 0.0
    %2226 = vmatpush1.msra.mxu0 0.0
    %2227 = vmatprep.subr.mxu0 0.0
    %2228 = vmatpush1.msra.mxu0 0.0
    %2229 = vmatprep.subr.mxu0 0.0
    %2230 = vmatpush1.msra.mxu0 0.0
    %2231 = vmatprep.subr.mxu0 0.0
    %2232 = vmatpush1.msra.mxu0 0.0
    %2233 = vmatprep.subr.mxu0 0.0
    %2234 = vmatpush1.msra.mxu0 0.0
    %2235 = vmatprep.subr.mxu0 0.0
    %2236 = vmatpush1.msra.mxu0 0.0
    %2237 = vmatprep.subr.mxu0 0.0
    %2238 = vmatpush1.msra.mxu0 0.0
    %2239 = vmatprep.subr.mxu0 0.0
    %2240 = vmatpush1.msra.mxu0 0.0
    %2241 = vmatprep.subr.mxu0 0.0
    %2242 = vmatpush1.msra.mxu0 0.0
    %2243 = vmatprep.subr.mxu0 0.0
    %2244 = vmatpush1.msra.mxu0 0.0
    %2245 = vmatprep.subr.mxu0 0.0
    %2246 = vmatpush1.msra.mxu0 0.0
    %2247 = vmatprep.subr.mxu0 0.0
    %2248 = vmatpush1.msra.mxu0 0.0
    %2249 = vmatprep.subr.mxu0 0.0
    %2250 = vmatpush1.msra.mxu0 0.0
    %2251 = vmatprep.subr.mxu0 0.0
    %2252 = vmatpush1.msra.mxu0 0.0
    %2253 = vmatprep.subr.mxu0 0.0
    %2254 = vmatpush1.msra.mxu0 0.0
    %2255 = vmatprep.subr.mxu0 0.0
    %2256 = vmatpush1.msra.mxu0 0.0
    %2257 = vmatprep.subr.mxu0 0.0
    %2258 = vmatpush1.msra.mxu0 0.0
    %2259 = vmatprep.subr.mxu0 0.0
    %2260 = vmatpush1.msra.mxu0 0.0
    %2261 = vmatprep.subr.mxu0 0.0
    %2262 = vmatpush1.msra.mxu0 0.0
    %2263 = vmatprep.subr.mxu0 0.0
    %2264 = vmatpush1.msra.mxu0 0.0
    %2265 = vmatprep.subr.mxu0 0.0
    %2266 = vmatpush1.msra.mxu0 0.0
    %2267 = vmatprep.subr.mxu0 0.0
    %2268 = vmatpush1.msra.mxu0 0.0
    %2269 = vmatprep.subr.mxu0 0.0
    %2270 = vmatpush1.msra.mxu0 0.0
    %2271 = vmatprep.subr.mxu0 0.0
    %2272 = vmatpush1.msra.mxu0 0.0
    %2273 = vmatprep.subr.mxu0 0.0
    %2274 = vmatpush1.msra.mxu0 0.0
    %2275 = vmatprep.subr.mxu0 0.0
    %2276 = vmatpush1.msra.mxu0 0.0
    %2277 = vmatprep.subr.mxu0 0.0
    %2278 = vmatpush1.msra.mxu0 0.0
    %2279 = vmatprep.subr.mxu0 0.0
    %2280 = vmatpush1.msra.mxu0 0.0
    %2281 = vmatprep.subr.mxu0 0.0
    %2282 = vmatpush1.msra.mxu0 0.0
    %2283 = vmatprep.subr.mxu0 0.0
    %2284 = vmatpush1.msra.mxu0 0.0
    %2285 = vmatprep.mubr.f32.mxu0 0.0
    %2286 = vmatmul.mubr.f32.gmra.mrb[0].mxu0 %v2219
    %v2287 = vpop.f32.mrb[0].mxu0
    %v2288 = vadd.f32 0.0, %v2287
    %v2289 = vpop.f32.mrb[0].mxu0
    %2290 = vdwg.mxu0
    %2291 = vrot.lane.b32.xlu0 %v2036, 64
    %v2292 = vpop.permute.xlu0 %2291
    %v2295 = vsel %vm239, %v2214, 0
    %2297 = vmatprep.subr.mxu0 0.0
    %2298 = vmatpush1.msra.mxu0 %v2292
    %2299 = vmatprep.subr.mxu0 0.0
    %2300 = vmatpush1.msra.mxu0 0.0
    %2301 = vmatprep.subr.mxu0 0.0
    %2302 = vmatpush1.msra.mxu0 0.0
    %2303 = vmatprep.subr.mxu0 0.0
    %2304 = vmatpush1.msra.mxu0 0.0
    %2305 = vmatprep.subr.mxu0 0.0
    %2306 = vmatpush1.msra.mxu0 0.0
    %2307 = vmatprep.subr.mxu0 0.0
    %2308 = vmatpush1.msra.mxu0 0.0
    %2309 = vmatprep.subr.mxu0 0.0
    %2310 = vmatpush1.msra.mxu0 0.0
    %2311 = vmatprep.subr.mxu0 0.0
    %2312 = vmatpush1.msra.mxu0 0.0
    %2313 = vmatprep.subr.mxu0 0.0
    %2314 = vmatpush1.msra.mxu0 0.0
    %2315 = vmatprep.subr.mxu0 0.0
    %2316 = vmatpush1.msra.mxu0 0.0
    %2317 = vmatprep.subr.mxu0 0.0
    %2318 = vmatpush1.msra.mxu0 0.0
    %2319 = vmatprep.subr.mxu0 0.0
    %2320 = vmatpush1.msra.mxu0 0.0
    %2321 = vmatprep.subr.mxu0 0.0
    %2322 = vmatpush1.msra.mxu0 0.0
    %2323 = vmatprep.subr.mxu0 0.0
    %2324 = vmatpush1.msra.mxu0 0.0
    %2325 = vmatprep.subr.mxu0 0.0
    %2326 = vmatpush1.msra.mxu0 0.0
    %2327 = vmatprep.subr.mxu0 0.0
    %2328 = vmatpush1.msra.mxu0 0.0
    %2329 = vmatprep.subr.mxu0 0.0
    %2330 = vmatpush1.msra.mxu0 0.0
    %2331 = vmatprep.subr.mxu0 0.0
    %2332 = vmatpush1.msra.mxu0 0.0
    %2333 = vmatprep.subr.mxu0 0.0
    %2334 = vmatpush1.msra.mxu0 0.0
    %2335 = vmatprep.subr.mxu0 0.0
    %2336 = vmatpush1.msra.mxu0 0.0
    %2337 = vmatprep.subr.mxu0 0.0
    %2338 = vmatpush1.msra.mxu0 0.0
    %2339 = vmatprep.subr.mxu0 0.0
    %2340 = vmatpush1.msra.mxu0 0.0
    %2341 = vmatprep.subr.mxu0 0.0
    %2342 = vmatpush1.msra.mxu0 0.0
    %2343 = vmatprep.subr.mxu0 0.0
    %2344 = vmatpush1.msra.mxu0 0.0
    %2345 = vmatprep.subr.mxu0 0.0
    %2346 = vmatpush1.msra.mxu0 0.0
    %2347 = vmatprep.subr.mxu0 0.0
    %2348 = vmatpush1.msra.mxu0 0.0
    %2349 = vmatprep.subr.mxu0 0.0
    %2350 = vmatpush1.msra.mxu0 0.0
    %2351 = vmatprep.subr.mxu0 0.0
    %2352 = vmatpush1.msra.mxu0 0.0
    %2353 = vmatprep.subr.mxu0 0.0
    %2354 = vmatpush1.msra.mxu0 0.0
    %2355 = vmatprep.subr.mxu0 0.0
    %2356 = vmatpush1.msra.mxu0 0.0
    %2357 = vmatprep.subr.mxu0 0.0
    %2358 = vmatpush1.msra.mxu0 0.0
    %2359 = vmatprep.subr.mxu0 0.0
    %2360 = vmatpush1.msra.mxu0 0.0
    %2361 = vmatprep.mubr.f32.mxu0 0.0
    %2362 = vmatmul.mubr.f32.gmra.mrb[0].mxu0 %v2295
    %v2363 = vpop.f32.mrb[0].mxu0
    %v2364 = vadd.f32 0.0, %v2363
    %v2365 = vpop.f32.mrb[0].mxu0
    %2366 = vdwg.mxu0
    %2367 = vst.msk [vmem:[#allocation2] sm:$0xff] %vm239, %v2288
    %2368 = vst.msk [vmem:[#allocation2 + $0x8] sm:$0xff] %vm239, %v2364
    %2369 = vrot.lane.b32.xlu0 %v2031, 120
    %v2370 = vpop.permute.xlu0 %2369
    %2371 = vrot.lane.b32.xlu0 %v2031, 88
    %v2372 = vpop.permute.xlu0 %2371
    %v2373 = vsel %vm239, %v2370, 0
    %v2375 = vsel %vm239, %v2372, 0
    %2377 = vmatprep.subr.mxu0 0.0
    %2378 = vmatpush1.xpose.msra.mxu0 %v2375
    %2379 = vmatprep.subr.mxu0 0.0
    %2380 = vmatpush1.xpose.msra.mxu0 0.0
    %2381 = vmatprep.subr.mxu0 0.0
    %2382 = vmatpush1.xpose.msra.mxu0 0.0
    %2383 = vmatprep.subr.mxu0 0.0
    %2384 = vmatpush1.xpose.msra.mxu0 0.0
    %2385 = vmatprep.subr.mxu0 0.0
    %2386 = vmatpush1.xpose.msra.mxu0 0.0
    %2387 = vmatprep.subr.mxu0 0.0
    %2388 = vmatpush1.xpose.msra.mxu0 0.0
    %2389 = vmatprep.subr.mxu0 0.0
    %2390 = vmatpush1.xpose.msra.mxu0 0.0
    %2391 = vmatprep.subr.mxu0 0.0
    %2392 = vmatpush1.xpose.msra.mxu0 0.0
    %2393 = vmatprep.subr.mxu0 0.0
    %2394 = vmatpush1.xpose.msra.mxu0 0.0
    %2395 = vmatprep.subr.mxu0 0.0
    %2396 = vmatpush1.xpose.msra.mxu0 0.0
    %2397 = vmatprep.subr.mxu0 0.0
    %2398 = vmatpush1.xpose.msra.mxu0 0.0
    %2399 = vmatprep.subr.mxu0 0.0
    %2400 = vmatpush1.xpose.msra.mxu0 0.0
    %2401 = vmatprep.subr.mxu0 0.0
    %2402 = vmatpush1.xpose.msra.mxu0 0.0
    %2403 = vmatprep.subr.mxu0 0.0
    %2404 = vmatpush1.xpose.msra.mxu0 0.0
    %2405 = vmatprep.subr.mxu0 0.0
    %2406 = vmatpush1.xpose.msra.mxu0 0.0
    %2407 = vmatprep.subr.mxu0 0.0
    %2408 = vmatpush1.xpose.msra.mxu0 0.0
    %2409 = vmatprep.subr.mxu0 0.0
    %2410 = vmatpush1.xpose.msra.mxu0 0.0
    %2411 = vmatprep.subr.mxu0 0.0
    %2412 = vmatpush1.xpose.msra.mxu0 0.0
    %2413 = vmatprep.subr.mxu0 0.0
    %2414 = vmatpush1.xpose.msra.mxu0 0.0
    %2415 = vmatprep.subr.mxu0 0.0
    %2416 = vmatpush1.xpose.msra.mxu0 0.0
    %2417 = vmatprep.subr.mxu0 0.0
    %2418 = vmatpush1.xpose.msra.mxu0 0.0
    %2419 = vmatprep.subr.mxu0 0.0
    %2420 = vmatpush1.xpose.msra.mxu0 0.0
    %2421 = vmatprep.subr.mxu0 0.0
    %2422 = vmatpush1.xpose.msra.mxu0 0.0
    %2423 = vmatprep.subr.mxu0 0.0
    %2424 = vmatpush1.xpose.msra.mxu0 0.0
    %2425 = vmatprep.subr.mxu0 0.0
    %2426 = vmatpush1.xpose.msra.mxu0 0.0
    %2427 = vmatprep.subr.mxu0 0.0
    %2428 = vmatpush1.xpose.msra.mxu0 0.0
    %2429 = vmatprep.subr.mxu0 0.0
    %2430 = vmatpush1.xpose.msra.mxu0 0.0
    %2431 = vmatprep.subr.mxu0 0.0
    %2432 = vmatpush1.xpose.msra.mxu0 0.0
    %2433 = vmatprep.subr.mxu0 0.0
    %2434 = vmatpush1.xpose.msra.mxu0 0.0
    %2435 = vmatprep.subr.mxu0 0.0
    %2436 = vmatpush1.xpose.msra.mxu0 0.0
    %2437 = vmatprep.subr.mxu0 0.0
    %2438 = vmatpush1.xpose.msra.mxu0 0.0
    %2439 = vmatprep.subr.mxu0 0.0
    %2440 = vmatpush1.xpose.msra.mxu0 0.0
    %2441 = vmatprep.mubr.f32.mxu0 0.0
    %2442 = vmatmul.mubr.f32.gmra.mrb[0].mxu0 %v2373
    %v2443 = vpop.f32.mrb[0].mxu0
    %v2444 = vadd.f32 0.0, %v2443
    %v2445 = vpop.f32.mrb[0].mxu0
    %2446 = vdwg.mxu0
    %2447 = vrot.lane.b32.xlu0 %v2036, 120
    %v2448 = vpop.permute.xlu0 %2447
    %2449 = vrot.lane.b32.xlu0 %v2036, 88
    %v2450 = vpop.permute.xlu0 %2449
    %v2451 = vsel %vm239, %v2448, 0
    %v2453 = vsel %vm239, %v2450, 0
    %2455 = vmatprep.subr.mxu0 0.0
    %2456 = vmatpush1.xpose.msra.mxu0 %v2453
    %2457 = vmatprep.subr.mxu0 0.0
    %2458 = vmatpush1.xpose.msra.mxu0 0.0
    %2459 = vmatprep.subr.mxu0 0.0
    %2460 = vmatpush1.xpose.msra.mxu0 0.0
    %2461 = vmatprep.subr.mxu0 0.0
    %2462 = vmatpush1.xpose.msra.mxu0 0.0
    %2463 = vmatprep.subr.mxu0 0.0
    %2464 = vmatpush1.xpose.msra.mxu0 0.0
    %2465 = vmatprep.subr.mxu0 0.0
    %2466 = vmatpush1.xpose.msra.mxu0 0.0
    %2467 = vmatprep.subr.mxu0 0.0
    %2468 = vmatpush1.xpose.msra.mxu0 0.0
    %2469 = vmatprep.subr.mxu0 0.0
    %2470 = vmatpush1.xpose.msra.mxu0 0.0
    %2471 = vmatprep.subr.mxu0 0.0
    %2472 = vmatpush1.xpose.msra.mxu0 0.0
    %2473 = vmatprep.subr.mxu0 0.0
    %2474 = vmatpush1.xpose.msra.mxu0 0.0
    %2475 = vmatprep.subr.mxu0 0.0
    %2476 = vmatpush1.xpose.msra.mxu0 0.0
    %2477 = vmatprep.subr.mxu0 0.0
    %2478 = vmatpush1.xpose.msra.mxu0 0.0
    %2479 = vmatprep.subr.mxu0 0.0
    %2480 = vmatpush1.xpose.msra.mxu0 0.0
    %2481 = vmatprep.subr.mxu0 0.0
    %2482 = vmatpush1.xpose.msra.mxu0 0.0
    %2483 = vmatprep.subr.mxu0 0.0
    %2484 = vmatpush1.xpose.msra.mxu0 0.0
    %2485 = vmatprep.subr.mxu0 0.0
    %2486 = vmatpush1.xpose.msra.mxu0 0.0
    %2487 = vmatprep.subr.mxu0 0.0
    %2488 = vmatpush1.xpose.msra.mxu0 0.0
    %2489 = vmatprep.subr.mxu0 0.0
    %2490 = vmatpush1.xpose.msra.mxu0 0.0
    %2491 = vmatprep.subr.mxu0 0.0
    %2492 = vmatpush1.xpose.msra.mxu0 0.0
    %2493 = vmatprep.subr.mxu0 0.0
    %2494 = vmatpush1.xpose.msra.mxu0 0.0
    %2495 = vmatprep.subr.mxu0 0.0
    %2496 = vmatpush1.xpose.msra.mxu0 0.0
    %2497 = vmatprep.subr.mxu0 0.0
    %2498 = vmatpush1.xpose.msra.mxu0 0.0
    %2499 = vmatprep.subr.mxu0 0.0
    %2500 = vmatpush1.xpose.msra.mxu0 0.0
    %2501 = vmatprep.subr.mxu0 0.0
    %2502 = vmatpush1.xpose.msra.mxu0 0.0
    %2503 = vmatprep.subr.mxu0 0.0
    %2504 = vmatpush1.xpose.msra.mxu0 0.0
    %2505 = vmatprep.subr.mxu0 0.0
    %2506 = vmatpush1.xpose.msra.mxu0 0.0
    %2507 = vmatprep.subr.mxu0 0.0
    %2508 = vmatpush1.xpose.msra.mxu0 0.0
    %2509 = vmatprep.subr.mxu0 0.0
    %2510 = vmatpush1.xpose.msra.mxu0 0.0
    %2511 = vmatprep.subr.mxu0 0.0
    %2512 = vmatpush1.xpose.msra.mxu0 0.0
    %2513 = vmatprep.subr.mxu0 0.0
    %2514 = vmatpush1.xpose.msra.mxu0 0.0
    %2515 = vmatprep.subr.mxu0 0.0
    %2516 = vmatpush1.xpose.msra.mxu0 0.0
    %2517 = vmatprep.subr.mxu0 0.0
    %2518 = vmatpush1.xpose.msra.mxu0 0.0
    %2519 = vmatprep.mubr.f32.mxu0 0.0
    %2520 = vmatmul.mubr.f32.gmra.mrb[0].mxu0 %v2451
    %v2521 = vpop.f32.mrb[0].mxu0
    %v2522 = vadd.f32 0.0, %v2521
    %v2523 = vpop.f32.mrb[0].mxu0
    %2524 = vdwg.mxu0
    %v2525 = vsel %vm239, %v2444, -inf
    %2526 = vmax.xlane.f32.xlu0 %v2525
    %v2527 = vpop.xlane.xlu0 %2526
    %v2528 = vsel %vm239, %v2522, -inf
    %2529 = vmax.xlane.f32.xlu0 %v2528
    %v2530 = vpop.xlane.xlu0 %2529
    %v2531 = vsub.f32 %v2444, %v2527
    %v2532 = vsub.f32 %v2522, %v2530
    %v2533 = vmul.f32 %v2531, 1.442695
    %v2534 = vpow.pop %v2533
    %v2535 = vmul.f32 %v2532, 1.442695
    %v2536 = vpow.pop %v2535
    %v2537 = vsel %vm239, %v2534, 0.0
    %2538 = vadd.xlane.f32.xlu0 %v2537
    %v2539 = vpop.xlane.xlu0 %2538
    %v2540 = vsel %vm239, %v2536, 0.0
    %2541 = vadd.xlane.f32.xlu0 %v2540
    %v2542 = vpop.xlane.xlu0 %2541
    %v2543 = vrcp.pop %v2539
    %v2544 = vrcp.pop %v2542
    %v2545 = vmul.f32 %v2534, %v2543
    %v2546 = vmul.f32 %v2536, %v2544
    %2547 = vrot.lane.b32.xlu0 %v2031, 56
    %v2548 = vpop.permute.xlu0 %2547
    %v2551 = vsel %vm239, %v2545, 0
    %2553 = vmatprep.subr.mxu0 0.0
    %2554 = vmatpush1.msra.mxu0 %v2548
    %2555 = vmatprep.subr.mxu0 0.0
    %2556 = vmatpush1.msra.mxu0 0.0
    %2557 = vmatprep.subr.mxu0 0.0
    %2558 = vmatpush1.msra.mxu0 0.0
    %2559 = vmatprep.subr.mxu0 0.0
    %2560 = vmatpush1.msra.mxu0 0.0
    %2561 = vmatprep.subr.mxu0 0.0
    %2562 = vmatpush1.msra.mxu0 0.0
    %2563 = vmatprep.subr.mxu0 0.0
    %2564 = vmatpush1.msra.mxu0 0.0
    %2565 = vmatprep.subr.mxu0 0.0
    %2566 = vmatpush1.msra.mxu0 0.0
    %2567 = vmatprep.subr.mxu0 0.0
    %2568 = vmatpush1.msra.mxu0 0.0
    %2569 = vmatprep.subr.mxu0 0.0
    %2570 = vmatpush1.msra.mxu0 0.0
    %2571 = vmatprep.subr.mxu0 0.0
    %2572 = vmatpush1.msra.mxu0 0.0
    %2573 = vmatprep.subr.mxu0 0.0
    %2574 = vmatpush1.msra.mxu0 0.0
    %2575 = vmatprep.subr.mxu0 0.0
    %2576 = vmatpush1.msra.mxu0 0.0
    %2577 = vmatprep.subr.mxu0 0.0
    %2578 = vmatpush1.msra.mxu0 0.0
    %2579 = vmatprep.subr.mxu0 0.0
    %2580 = vmatpush1.msra.mxu0 0.0
    %2581 = vmatprep.subr.mxu0 0.0
    %2582 = vmatpush1.msra.mxu0 0.0
    %2583 = vmatprep.subr.mxu0 0.0
    %2584 = vmatpush1.msra.mxu0 0.0
    %2585 = vmatprep.subr.mxu0 0.0
    %2586 = vmatpush1.msra.mxu0 0.0
    %2587 = vmatprep.subr.mxu0 0.0
    %2588 = vmatpush1.msra.mxu0 0.0
    %2589 = vmatprep.subr.mxu0 0.0
    %2590 = vmatpush1.msra.mxu0 0.0
    %2591 = vmatprep.subr.mxu0 0.0
    %2592 = vmatpush1.msra.mxu0 0.0
    %2593 = vmatprep.subr.mxu0 0.0
    %2594 = vmatpush1.msra.mxu0 0.0
    %2595 = vmatprep.subr.mxu0 0.0
    %2596 = vmatpush1.msra.mxu0 0.0
    %2597 = vmatprep.subr.mxu0 0.0
    %2598 = vmatpush1.msra.mxu0 0.0
    %2599 = vmatprep.subr.mxu0 0.0
    %2600 = vmatpush1.msra.mxu0 0.0
    %2601 = vmatprep.subr.mxu0 0.0
    %2602 = vmatpush1.msra.mxu0 0.0
    %2603 = vmatprep.subr.mxu0 0.0
    %2604 = vmatpush1.msra.mxu0 0.0
    %2605 = vmatprep.subr.mxu0 0.0
    %2606 = vmatpush1.msra.mxu0 0.0
    %2607 = vmatprep.subr.mxu0 0.0
    %2608 = vmatpush1.msra.mxu0 0.0
    %2609 = vmatprep.subr.mxu0 0.0
    %2610 = vmatpush1.msra.mxu0 0.0
    %2611 = vmatprep.subr.mxu0 0.0
    %2612 = vmatpush1.msra.mxu0 0.0
    %2613 = vmatprep.subr.mxu0 0.0
    %2614 = vmatpush1.msra.mxu0 0.0
    %2615 = vmatprep.subr.mxu0 0.0
    %2616 = vmatpush1.msra.mxu0 0.0
    %2617 = vmatprep.mubr.f32.mxu0 0.0
    %2618 = vmatmul.mubr.f32.gmra.mrb[0].mxu0 %v2551
    %v2619 = vpop.f32.mrb[0].mxu0
    %v2620 = vadd.f32 0.0, %v2619
    %v2621 = vpop.f32.mrb[0].mxu0
    %2622 = vdwg.mxu0
    %2623 = vrot.lane.b32.xlu0 %v2036, 56
    %v2624 = vpop.permute.xlu0 %2623
    %v2627 = vsel %vm239, %v2546, 0
    %2629 = vmatprep.subr.mxu0 0.0
    %2630 = vmatpush1.msra.mxu0 %v2624
    %2631 = vmatprep.subr.mxu0 0.0
    %2632 = vmatpush1.msra.mxu0 0.0
    %2633 = vmatprep.subr.mxu0 0.0
    %2634 = vmatpush1.msra.mxu0 0.0
    %2635 = vmatprep.subr.mxu0 0.0
    %2636 = vmatpush1.msra.mxu0 0.0
    %2637 = vmatprep.subr.mxu0 0.0
    %2638 = vmatpush1.msra.mxu0 0.0
    %2639 = vmatprep.subr.mxu0 0.0
    %2640 = vmatpush1.msra.mxu0 0.0
    %2641 = vmatprep.subr.mxu0 0.0
    %2642 = vmatpush1.msra.mxu0 0.0
    %2643 = vmatprep.subr.mxu0 0.0
    %2644 = vmatpush1.msra.mxu0 0.0
    %2645 = vmatprep.subr.mxu0 0.0
    %2646 = vmatpush1.msra.mxu0 0.0
    %2647 = vmatprep.subr.mxu0 0.0
    %2648 = vmatpush1.msra.mxu0 0.0
    %2649 = vmatprep.subr.mxu0 0.0
    %2650 = vmatpush1.msra.mxu0 0.0
    %2651 = vmatprep.subr.mxu0 0.0
    %2652 = vmatpush1.msra.mxu0 0.0
    %2653 = vmatprep.subr.mxu0 0.0
    %2654 = vmatpush1.msra.mxu0 0.0
    %2655 = vmatprep.subr.mxu0 0.0
    %2656 = vmatpush1.msra.mxu0 0.0
    %2657 = vmatprep.subr.mxu0 0.0
    %2658 = vmatpush1.msra.mxu0 0.0
    %2659 = vmatprep.subr.mxu0 0.0
    %2660 = vmatpush1.msra.mxu0 0.0
    %2661 = vmatprep.subr.mxu0 0.0
    %2662 = vmatpush1.msra.mxu0 0.0
    %2663 = vmatprep.subr.mxu0 0.0
    %2664 = vmatpush1.msra.mxu0 0.0
    %2665 = vmatprep.subr.mxu0 0.0
    %2666 = vmatpush1.msra.mxu0 0.0
    %2667 = vmatprep.subr.mxu0 0.0
    %2668 = vmatpush1.msra.mxu0 0.0
    %2669 = vmatprep.subr.mxu0 0.0
    %2670 = vmatpush1.msra.mxu0 0.0
    %2671 = vmatprep.subr.mxu0 0.0
    %2672 = vmatpush1.msra.mxu0 0.0
    %2673 = vmatprep.subr.mxu0 0.0
    %2674 = vmatpush1.msra.mxu0 0.0
    %2675 = vmatprep.subr.mxu0 0.0
    %2676 = vmatpush1.msra.mxu0 0.0
    %2677 = vmatprep.subr.mxu0 0.0
    %2678 = vmatpush1.msra.mxu0 0.0
    %2679 = vmatprep.subr.mxu0 0.0
    %2680 = vmatpush1.msra.mxu0 0.0
    %2681 = vmatprep.subr.mxu0 0.0
    %2682 = vmatpush1.msra.mxu0 0.0
    %2683 = vmatprep.subr.mxu0 0.0
    %2684 = vmatpush1.msra.mxu0 0.0
    %2685 = vmatprep.subr.mxu0 0.0
    %2686 = vmatpush1.msra.mxu0 0.0
    %2687 = vmatprep.subr.mxu0 0.0
    %2688 = vmatpush1.msra.mxu0 0.0
    %2689 = vmatprep.subr.mxu0 0.0
    %2690 = vmatpush1.msra.mxu0 0.0
    %2691 = vmatprep.subr.mxu0 0.0
    %2692 = vmatpush1.msra.mxu0 0.0
    %2693 = vmatprep.mubr.f32.mxu0 0.0
    %2694 = vmatmul.mubr.f32.gmra.mrb[0].mxu0 %v2627
    %v2695 = vpop.f32.mrb[0].mxu0
    %v2696 = vadd.f32 0.0, %v2695
    %v2697 = vpop.f32.mrb[0].mxu0
    %2698 = vdwg.mxu0
    %2701 = vrot.lane.b32.xlu0 %v2620, 8
    %v2702 = vpop.permute.xlu0 %2701
    %2703 = vrot.lane.b32.xlu0 %v2696, 8
    %v2704 = vpop.permute.xlu0 %2703
    %2707 = vst.msk [vmem:[#allocation2] sm:$0xff] %vm905, %v2702
    %2708 = vst.msk [vmem:[#allocation2 + $0x8] sm:$0xff] %vm905, %v2704
    %2709 = vrot.lane.b32.xlu0 %v2031, 112
    %v2710 = vpop.permute.xlu0 %2709
    %2711 = vrot.lane.b32.xlu0 %v2031, 80
    %v2712 = vpop.permute.xlu0 %2711
    %v2713 = vsel %vm239, %v2710, 0
    %v2715 = vsel %vm239, %v2712, 0
    %2717 = vmatprep.subr.mxu0 0.0
    %2718 = vmatpush1.xpose.msra.mxu0 %v2715
    %2719 = vmatprep.subr.mxu0 0.0
    %2720 = vmatpush1.xpose.msra.mxu0 0.0
    %2721 = vmatprep.subr.mxu0 0.0
    %2722 = vmatpush1.xpose.msra.mxu0 0.0
    %2723 = vmatprep.subr.mxu0 0.0
    %2724 = vmatpush1.xpose.msra.mxu0 0.0
    %2725 = vmatprep.subr.mxu0 0.0
    %2726 = vmatpush1.xpose.msra.mxu0 0.0
    %2727 = vmatprep.subr.mxu0 0.0
    %2728 = vmatpush1.xpose.msra.mxu0 0.0
    %2729 = vmatprep.subr.mxu0 0.0
    %2730 = vmatpush1.xpose.msra.mxu0 0.0
    %2731 = vmatprep.subr.mxu0 0.0
    %2732 = vmatpush1.xpose.msra.mxu0 0.0
    %2733 = vmatprep.subr.mxu0 0.0
    %2734 = vmatpush1.xpose.msra.mxu0 0.0
    %2735 = vmatprep.subr.mxu0 0.0
    %2736 = vmatpush1.xpose.msra.mxu0 0.0
    %2737 = vmatprep.subr.mxu0 0.0
    %2738 = vmatpush1.xpose.msra.mxu0 0.0
    %2739 = vmatprep.subr.mxu0 0.0
    %2740 = vmatpush1.xpose.msra.mxu0 0.0
    %2741 = vmatprep.subr.mxu0 0.0
    %2742 = vmatpush1.xpose.msra.mxu0 0.0
    %2743 = vmatprep.subr.mxu0 0.0
    %2744 = vmatpush1.xpose.msra.mxu0 0.0
    %2745 = vmatprep.subr.mxu0 0.0
    %2746 = vmatpush1.xpose.msra.mxu0 0.0
    %2747 = vmatprep.subr.mxu0 0.0
    %2748 = vmatpush1.xpose.msra.mxu0 0.0
    %2749 = vmatprep.subr.mxu0 0.0
    %2750 = vmatpush1.xpose.msra.mxu0 0.0
    %2751 = vmatprep.subr.mxu0 0.0
    %2752 = vmatpush1.xpose.msra.mxu0 0.0
    %2753 = vmatprep.subr.mxu0 0.0
    %2754 = vmatpush1.xpose.msra.mxu0 0.0
    %2755 = vmatprep.subr.mxu0 0.0
    %2756 = vmatpush1.xpose.msra.mxu0 0.0
    %2757 = vmatprep.subr.mxu0 0.0
    %2758 = vmatpush1.xpose.msra.mxu0 0.0
    %2759 = vmatprep.subr.mxu0 0.0
    %2760 = vmatpush1.xpose.msra.mxu0 0.0
    %2761 = vmatprep.subr.mxu0 0.0
    %2762 = vmatpush1.xpose.msra.mxu0 0.0
    %2763 = vmatprep.subr.mxu0 0.0
    %2764 = vmatpush1.xpose.msra.mxu0 0.0
    %2765 = vmatprep.subr.mxu0 0.0
    %2766 = vmatpush1.xpose.msra.mxu0 0.0
    %2767 = vmatprep.subr.mxu0 0.0
    %2768 = vmatpush1.xpose.msra.mxu0 0.0
    %2769 = vmatprep.subr.mxu0 0.0
    %2770 = vmatpush1.xpose.msra.mxu0 0.0
    %2771 = vmatprep.subr.mxu0 0.0
    %2772 = vmatpush1.xpose.msra.mxu0 0.0
    %2773 = vmatprep.subr.mxu0 0.0
    %2774 = vmatpush1.xpose.msra.mxu0 0.0
    %2775 = vmatprep.subr.mxu0 0.0
    %2776 = vmatpush1.xpose.msra.mxu0 0.0
    %2777 = vmatprep.subr.mxu0 0.0
    %2778 = vmatpush1.xpose.msra.mxu0 0.0
    %2779 = vmatprep.subr.mxu0 0.0
    %2780 = vmatpush1.xpose.msra.mxu0 0.0
    %2781 = vmatprep.mubr.f32.mxu0 0.0
    %2782 = vmatmul.mubr.f32.gmra.mrb[0].mxu0 %v2713
    %v2783 = vpop.f32.mrb[0].mxu0
    %v2784 = vadd.f32 0.0, %v2783
    %v2785 = vpop.f32.mrb[0].mxu0
    %2786 = vdwg.mxu0
    %2787 = vrot.lane.b32.xlu0 %v2036, 112
    %v2788 = vpop.permute.xlu0 %2787
    %2789 = vrot.lane.b32.xlu0 %v2036, 80
    %v2790 = vpop.permute.xlu0 %2789
    %v2791 = vsel %vm239, %v2788, 0
    %v2793 = vsel %vm239, %v2790, 0
    %2795 = vmatprep.subr.mxu0 0.0
    %2796 = vmatpush1.xpose.msra.mxu0 %v2793
    %2797 = vmatprep.subr.mxu0 0.0
    %2798 = vmatpush1.xpose.msra.mxu0 0.0
    %2799 = vmatprep.subr.mxu0 0.0
    %2800 = vmatpush1.xpose.msra.mxu0 0.0
    %2801 = vmatprep.subr.mxu0 0.0
    %2802 = vmatpush1.xpose.msra.mxu0 0.0
    %2803 = vmatprep.subr.mxu0 0.0
    %2804 = vmatpush1.xpose.msra.mxu0 0.0
    %2805 = vmatprep.subr.mxu0 0.0
    %2806 = vmatpush1.xpose.msra.mxu0 0.0
    %2807 = vmatprep.subr.mxu0 0.0
    %2808 = vmatpush1.xpose.msra.mxu0 0.0
    %2809 = vmatprep.subr.mxu0 0.0
    %2810 = vmatpush1.xpose.msra.mxu0 0.0
    %2811 = vmatprep.subr.mxu0 0.0
    %2812 = vmatpush1.xpose.msra.mxu0 0.0
    %2813 = vmatprep.subr.mxu0 0.0
    %2814 = vmatpush1.xpose.msra.mxu0 0.0
    %2815 = vmatprep.subr.mxu0 0.0
    %2816 = vmatpush1.xpose.msra.mxu0 0.0
    %2817 = vmatprep.subr.mxu0 0.0
    %2818 = vmatpush1.xpose.msra.mxu0 0.0
    %2819 = vmatprep.subr.mxu0 0.0
    %2820 = vmatpush1.xpose.msra.mxu0 0.0
    %2821 = vmatprep.subr.mxu0 0.0
    %2822 = vmatpush1.xpose.msra.mxu0 0.0
    %2823 = vmatprep.subr.mxu0 0.0
    %2824 = vmatpush1.xpose.msra.mxu0 0.0
    %2825 = vmatprep.subr.mxu0 0.0
    %2826 = vmatpush1.xpose.msra.mxu0 0.0
    %2827 = vmatprep.subr.mxu0 0.0
    %2828 = vmatpush1.xpose.msra.mxu0 0.0
    %2829 = vmatprep.subr.mxu0 0.0
    %2830 = vmatpush1.xpose.msra.mxu0 0.0
    %2831 = vmatprep.subr.mxu0 0.0
    %2832 = vmatpush1.xpose.msra.mxu0 0.0
    %2833 = vmatprep.subr.mxu0 0.0
    %2834 = vmatpush1.xpose.msra.mxu0 0.0
    %2835 = vmatprep.subr.mxu0 0.0
    %2836 = vmatpush1.xpose.msra.mxu0 0.0
    %2837 = vmatprep.subr.mxu0 0.0
    %2838 = vmatpush1.xpose.msra.mxu0 0.0
    %2839 = vmatprep.subr.mxu0 0.0
    %2840 = vmatpush1.xpose.msra.mxu0 0.0
    %2841 = vmatprep.subr.mxu0 0.0
    %2842 = vmatpush1.xpose.msra.mxu0 0.0
    %2843 = vmatprep.subr.mxu0 0.0
    %2844 = vmatpush1.xpose.msra.mxu0 0.0
    %2845 = vmatprep.subr.mxu0 0.0
    %2846 = vmatpush1.xpose.msra.mxu0 0.0
    %2847 = vmatprep.subr.mxu0 0.0
    %2848 = vmatpush1.xpose.msra.mxu0 0.0
    %2849 = vmatprep.subr.mxu0 0.0
    %2850 = vmatpush1.xpose.msra.mxu0 0.0
    %2851 = vmatprep.subr.mxu0 0.0
    %2852 = vmatpush1.xpose.msra.mxu0 0.0
    %2853 = vmatprep.subr.mxu0 0.0
    %2854 = vmatpush1.xpose.msra.mxu0 0.0
    %2855 = vmatprep.subr.mxu0 0.0
    %2856 = vmatpush1.xpose.msra.mxu0 0.0
    %2857 = vmatprep.subr.mxu0 0.0
    %2858 = vmatpush1.xpose.msra.mxu0 0.0
    %2859 = vmatprep.mubr.f32.mxu0 0.0
    %2860 = vmatmul.mubr.f32.gmra.mrb[0].mxu0 %v2791
    %v2861 = vpop.f32.mrb[0].mxu0
    %v2862 = vadd.f32 0.0, %v2861
    %v2863 = vpop.f32.mrb[0].mxu0
    %2864 = vdwg.mxu0
    %v2865 = vsel %vm239, %v2784, -inf
    %2866 = vmax.xlane.f32.xlu0 %v2865
    %v2867 = vpop.xlane.xlu0 %2866
    %v2868 = vsel %vm239, %v2862, -inf
    %2869 = vmax.xlane.f32.xlu0 %v2868
    %v2870 = vpop.xlane.xlu0 %2869
    %v2871 = vsub.f32 %v2784, %v2867
    %v2872 = vsub.f32 %v2862, %v2870
    %v2873 = vmul.f32 %v2871, 1.442695
    %v2874 = vpow.pop %v2873
    %v2875 = vmul.f32 %v2872, 1.442695
    %v2876 = vpow.pop %v2875
    %v2877 = vsel %vm239, %v2874, 0.0
    %2878 = vadd.xlane.f32.xlu0 %v2877
    %v2879 = vpop.xlane.xlu0 %2878
    %v2880 = vsel %vm239, %v2876, 0.0
    %2881 = vadd.xlane.f32.xlu0 %v2880
    %v2882 = vpop.xlane.xlu0 %2881
    %v2883 = vrcp.pop %v2879
    %v2884 = vrcp.pop %v2882
    %v2885 = vmul.f32 %v2874, %v2883
    %v2886 = vmul.f32 %v2876, %v2884
    %2887 = vrot.lane.b32.xlu0 %v2031, 48
    %v2888 = vpop.permute.xlu0 %2887
    %v2891 = vsel %vm239, %v2885, 0
    %2893 = vmatprep.subr.mxu0 0.0
    %2894 = vmatpush1.msra.mxu0 %v2888
    %2895 = vmatprep.subr.mxu0 0.0
    %2896 = vmatpush1.msra.mxu0 0.0
    %2897 = vmatprep.subr.mxu0 0.0
    %2898 = vmatpush1.msra.mxu0 0.0
    %2899 = vmatprep.subr.mxu0 0.0
    %2900 = vmatpush1.msra.mxu0 0.0
    %2901 = vmatprep.subr.mxu0 0.0
    %2902 = vmatpush1.msra.mxu0 0.0
    %2903 = vmatprep.subr.mxu0 0.0
    %2904 = vmatpush1.msra.mxu0 0.0
    %2905 = vmatprep.subr.mxu0 0.0
    %2906 = vmatpush1.msra.mxu0 0.0
    %2907 = vmatprep.subr.mxu0 0.0
    %2908 = vmatpush1.msra.mxu0 0.0
    %2909 = vmatprep.subr.mxu0 0.0
    %2910 = vmatpush1.msra.mxu0 0.0
    %2911 = vmatprep.subr.mxu0 0.0
    %2912 = vmatpush1.msra.mxu0 0.0
    %2913 = vmatprep.subr.mxu0 0.0
    %2914 = vmatpush1.msra.mxu0 0.0
    %2915 = vmatprep.subr.mxu0 0.0
    %2916 = vmatpush1.msra.mxu0 0.0
    %2917 = vmatprep.subr.mxu0 0.0
    %2918 = vmatpush1.msra.mxu0 0.0
    %2919 = vmatprep.subr.mxu0 0.0
    %2920 = vmatpush1.msra.mxu0 0.0
    %2921 = vmatprep.subr.mxu0 0.0
    %2922 = vmatpush1.msra.mxu0 0.0
    %2923 = vmatprep.subr.mxu0 0.0
    %2924 = vmatpush1.msra.mxu0 0.0
    %2925 = vmatprep.subr.mxu0 0.0
    %2926 = vmatpush1.msra.mxu0 0.0
    %2927 = vmatprep.subr.mxu0 0.0
    %2928 = vmatpush1.msra.mxu0 0.0
    %2929 = vmatprep.subr.mxu0 0.0
    %2930 = vmatpush1.msra.mxu0 0.0
    %2931 = vmatprep.subr.mxu0 0.0
    %2932 = vmatpush1.msra.mxu0 0.0
    %2933 = vmatprep.subr.mxu0 0.0
    %2934 = vmatpush1.msra.mxu0 0.0
    %2935 = vmatprep.subr.mxu0 0.0
    %2936 = vmatpush1.msra.mxu0 0.0
    %2937 = vmatprep.subr.mxu0 0.0
    %2938 = vmatpush1.msra.mxu0 0.0
    %2939 = vmatprep.subr.mxu0 0.0
    %2940 = vmatpush1.msra.mxu0 0.0
    %2941 = vmatprep.subr.mxu0 0.0
    %2942 = vmatpush1.msra.mxu0 0.0
    %2943 = vmatprep.subr.mxu0 0.0
    %2944 = vmatpush1.msra.mxu0 0.0
    %2945 = vmatprep.subr.mxu0 0.0
    %2946 = vmatpush1.msra.mxu0 0.0
    %2947 = vmatprep.subr.mxu0 0.0
    %2948 = vmatpush1.msra.mxu0 0.0
    %2949 = vmatprep.subr.mxu0 0.0
    %2950 = vmatpush1.msra.mxu0 0.0
    %2951 = vmatprep.subr.mxu0 0.0
    %2952 = vmatpush1.msra.mxu0 0.0
    %2953 = vmatprep.subr.mxu0 0.0
    %2954 = vmatpush1.msra.mxu0 0.0
    %2955 = vmatprep.subr.mxu0 0.0
    %2956 = vmatpush1.msra.mxu0 0.0
    %2957 = vmatprep.mubr.f32.mxu0 0.0
    %2958 = vmatmul.mubr.f32.gmra.mrb[0].mxu0 %v2891
    %v2959 = vpop.f32.mrb[0].mxu0
    %v2960 = vadd.f32 0.0, %v2959
    %v2961 = vpop.f32.mrb[0].mxu0
    %2962 = vdwg.mxu0
    %2963 = vrot.lane.b32.xlu0 %v2036, 48
    %v2964 = vpop.permute.xlu0 %2963
    %v2967 = vsel %vm239, %v2886, 0
    %2969 = vmatprep.subr.mxu0 0.0
    %2970 = vmatpush1.msra.mxu0 %v2964
    %2971 = vmatprep.subr.mxu0 0.0
    %2972 = vmatpush1.msra.mxu0 0.0
    %2973 = vmatprep.subr.mxu0 0.0
    %2974 = vmatpush1.msra.mxu0 0.0
    %2975 = vmatprep.subr.mxu0 0.0
    %2976 = vmatpush1.msra.mxu0 0.0
    %2977 = vmatprep.subr.mxu0 0.0
    %2978 = vmatpush1.msra.mxu0 0.0
    %2979 = vmatprep.subr.mxu0 0.0
    %2980 = vmatpush1.msra.mxu0 0.0
    %2981 = vmatprep.subr.mxu0 0.0
    %2982 = vmatpush1.msra.mxu0 0.0
    %2983 = vmatprep.subr.mxu0 0.0
    %2984 = vmatpush1.msra.mxu0 0.0
    %2985 = vmatprep.subr.mxu0 0.0
    %2986 = vmatpush1.msra.mxu0 0.0
    %2987 = vmatprep.subr.mxu0 0.0
    %2988 = vmatpush1.msra.mxu0 0.0
    %2989 = vmatprep.subr.mxu0 0.0
    %2990 = vmatpush1.msra.mxu0 0.0
    %2991 = vmatprep.subr.mxu0 0.0
    %2992 = vmatpush1.msra.mxu0 0.0
    %2993 = vmatprep.subr.mxu0 0.0
    %2994 = vmatpush1.msra.mxu0 0.0
    %2995 = vmatprep.subr.mxu0 0.0
    %2996 = vmatpush1.msra.mxu0 0.0
    %2997 = vmatprep.subr.mxu0 0.0
    %2998 = vmatpush1.msra.mxu0 0.0
    %2999 = vmatprep.subr.mxu0 0.0
    %3000 = vmatpush1.msra.mxu0 0.0
    %3001 = vmatprep.subr.mxu0 0.0
    %3002 = vmatpush1.msra.mxu0 0.0
    %3003 = vmatprep.subr.mxu0 0.0
    %3004 = vmatpush1.msra.mxu0 0.0
    %3005 = vmatprep.subr.mxu0 0.0
    %3006 = vmatpush1.msra.mxu0 0.0
    %3007 = vmatprep.subr.mxu0 0.0
    %3008 = vmatpush1.msra.mxu0 0.0
    %3009 = vmatprep.subr.mxu0 0.0
    %3010 = vmatpush1.msra.mxu0 0.0
    %3011 = vmatprep.subr.mxu0 0.0
    %3012 = vmatpush1.msra.mxu0 0.0
    %3013 = vmatprep.subr.mxu0 0.0
    %3014 = vmatpush1.msra.mxu0 0.0
    %3015 = vmatprep.subr.mxu0 0.0
    %3016 = vmatpush1.msra.mxu0 0.0
    %3017 = vmatprep.subr.mxu0 0.0
    %3018 = vmatpush1.msra.mxu0 0.0
    %3019 = vmatprep.subr.mxu0 0.0
    %3020 = vmatpush1.msra.mxu0 0.0
    %3021 = vmatprep.subr.mxu0 0.0
    %3022 = vmatpush1.msra.mxu0 0.0
    %3023 = vmatprep.subr.mxu0 0.0
    %3024 = vmatpush1.msra.mxu0 0.0
    %3025 = vmatprep.subr.mxu0 0.0
    %3026 = vmatpush1.msra.mxu0 0.0
    %3027 = vmatprep.subr.mxu0 0.0
    %3028 = vmatpush1.msra.mxu0 0.0
    %3029 = vmatprep.subr.mxu0 0.0
    %3030 = vmatpush1.msra.mxu0 0.0
    %3031 = vmatprep.subr.mxu0 0.0
    %3032 = vmatpush1.msra.mxu0 0.0
    %3033 = vmatprep.mubr.f32.mxu0 0.0
    %3034 = vmatmul.mubr.f32.gmra.mrb[0].mxu0 %v2967
    %v3035 = vpop.f32.mrb[0].mxu0
    %v3036 = vadd.f32 0.0, %v3035
    %v3037 = vpop.f32.mrb[0].mxu0
    %3038 = vdwg.mxu0
    %3041 = vrot.lane.b32.xlu0 %v2960, 16
    %v3042 = vpop.permute.xlu0 %3041
    %3043 = vrot.lane.b32.xlu0 %v3036, 16
    %v3044 = vpop.permute.xlu0 %3043
    %3047 = vst.msk [vmem:[#allocation2] sm:$0xff] %vm1246, %v3042
    %3048 = vst.msk [vmem:[#allocation2 + $0x8] sm:$0xff] %vm1246, %v3044
    %3049 = vrot.lane.b32.xlu0 %v2031, 104
    %v3050 = vpop.permute.xlu0 %3049
    %3051 = vrot.lane.b32.xlu0 %v2031, 72
    %v3052 = vpop.permute.xlu0 %3051
    %v3053 = vsel %vm239, %v3050, 0
    %v3055 = vsel %vm239, %v3052, 0
    %3057 = vmatprep.subr.mxu0 0.0
    %3058 = vmatpush1.xpose.msra.mxu0 %v3055
    %3059 = vmatprep.subr.mxu0 0.0
    %3060 = vmatpush1.xpose.msra.mxu0 0.0
    %3061 = vmatprep.subr.mxu0 0.0
    %3062 = vmatpush1.xpose.msra.mxu0 0.0
    %3063 = vmatprep.subr.mxu0 0.0
    %3064 = vmatpush1.xpose.msra.mxu0 0.0
    %3065 = vmatprep.subr.mxu0 0.0
    %3066 = vmatpush1.xpose.msra.mxu0 0.0
    %3067 = vmatprep.subr.mxu0 0.0
    %3068 = vmatpush1.xpose.msra.mxu0 0.0
    %3069 = vmatprep.subr.mxu0 0.0
    %3070 = vmatpush1.xpose.msra.mxu0 0.0
    %3071 = vmatprep.subr.mxu0 0.0
    %3072 = vmatpush1.xpose.msra.mxu0 0.0
    %3073 = vmatprep.subr.mxu0 0.0
    %3074 = vmatpush1.xpose.msra.mxu0 0.0
    %3075 = vmatprep.subr.mxu0 0.0
    %3076 = vmatpush1.xpose.msra.mxu0 0.0
    %3077 = vmatprep.subr.mxu0 0.0
    %3078 = vmatpush1.xpose.msra.mxu0 0.0
    %3079 = vmatprep.subr.mxu0 0.0
    %3080 = vmatpush1.xpose.msra.mxu0 0.0
    %3081 = vmatprep.subr.mxu0 0.0
    %3082 = vmatpush1.xpose.msra.mxu0 0.0
    %3083 = vmatprep.subr.mxu0 0.0
    %3084 = vmatpush1.xpose.msra.mxu0 0.0
    %3085 = vmatprep.subr.mxu0 0.0
    %3086 = vmatpush1.xpose.msra.mxu0 0.0
    %3087 = vmatprep.subr.mxu0 0.0
    %3088 = vmatpush1.xpose.msra.mxu0 0.0
    %3089 = vmatprep.subr.mxu0 0.0
    %3090 = vmatpush1.xpose.msra.mxu0 0.0
    %3091 = vmatprep.subr.mxu0 0.0
    %3092 = vmatpush1.xpose.msra.mxu0 0.0
    %3093 = vmatprep.subr.mxu0 0.0
    %3094 = vmatpush1.xpose.msra.mxu0 0.0
    %3095 = vmatprep.subr.mxu0 0.0
    %3096 = vmatpush1.xpose.msra.mxu0 0.0
    %3097 = vmatprep.subr.mxu0 0.0
    %3098 = vmatpush1.xpose.msra.mxu0 0.0
    %3099 = vmatprep.subr.mxu0 0.0
    %3100 = vmatpush1.xpose.msra.mxu0 0.0
    %3101 = vmatprep.subr.mxu0 0.0
    %3102 = vmatpush1.xpose.msra.mxu0 0.0
    %3103 = vmatprep.subr.mxu0 0.0
    %3104 = vmatpush1.xpose.msra.mxu0 0.0
    %3105 = vmatprep.subr.mxu0 0.0
    %3106 = vmatpush1.xpose.msra.mxu0 0.0
    %3107 = vmatprep.subr.mxu0 0.0
    %3108 = vmatpush1.xpose.msra.mxu0 0.0
    %3109 = vmatprep.subr.mxu0 0.0
    %3110 = vmatpush1.xpose.msra.mxu0 0.0
    %3111 = vmatprep.subr.mxu0 0.0
    %3112 = vmatpush1.xpose.msra.mxu0 0.0
    %3113 = vmatprep.subr.mxu0 0.0
    %3114 = vmatpush1.xpose.msra.mxu0 0.0
    %3115 = vmatprep.subr.mxu0 0.0
    %3116 = vmatpush1.xpose.msra.mxu0 0.0
    %3117 = vmatprep.subr.mxu0 0.0
    %3118 = vmatpush1.xpose.msra.mxu0 0.0
    %3119 = vmatprep.subr.mxu0 0.0
    %3120 = vmatpush1.xpose.msra.mxu0 0.0
    %3121 = vmatprep.mubr.f32.mxu0 0.0
    %3122 = vmatmul.mubr.f32.gmra.mrb[0].mxu0 %v3053
    %v3123 = vpop.f32.mrb[0].mxu0
    %v3124 = vadd.f32 0.0, %v3123
    %v3125 = vpop.f32.mrb[0].mxu0
    %3126 = vdwg.mxu0
    %3127 = vrot.lane.b32.xlu0 %v2036, 104
    %v3128 = vpop.permute.xlu0 %3127
    %3129 = vrot.lane.b32.xlu0 %v2036, 72
    %v3130 = vpop.permute.xlu0 %3129
    %v3131 = vsel %vm239, %v3128, 0
    %v3133 = vsel %vm239, %v3130, 0
    %3135 = vmatprep.subr.mxu0 0.0
    %3136 = vmatpush1.xpose.msra.mxu0 %v3133
    %3137 = vmatprep.subr.mxu0 0.0
    %3138 = vmatpush1.xpose.msra.mxu0 0.0
    %3139 = vmatprep.subr.mxu0 0.0
    %3140 = vmatpush1.xpose.msra.mxu0 0.0
    %3141 = vmatprep.subr.mxu0 0.0
    %3142 = vmatpush1.xpose.msra.mxu0 0.0
    %3143 = vmatprep.subr.mxu0 0.0
    %3144 = vmatpush1.xpose.msra.mxu0 0.0
    %3145 = vmatprep.subr.mxu0 0.0
    %3146 = vmatpush1.xpose.msra.mxu0 0.0
    %3147 = vmatprep.subr.mxu0 0.0
    %3148 = vmatpush1.xpose.msra.mxu0 0.0
    %3149 = vmatprep.subr.mxu0 0.0
    %3150 = vmatpush1.xpose.msra.mxu0 0.0
    %3151 = vmatprep.subr.mxu0 0.0
    %3152 = vmatpush1.xpose.msra.mxu0 0.0
    %3153 = vmatprep.subr.mxu0 0.0
    %3154 = vmatpush1.xpose.msra.mxu0 0.0
    %3155 = vmatprep.subr.mxu0 0.0
    %3156 = vmatpush1.xpose.msra.mxu0 0.0
    %3157 = vmatprep.subr.mxu0 0.0
    %3158 = vmatpush1.xpose.msra.mxu0 0.0
    %3159 = vmatprep.subr.mxu0 0.0
    %3160 = vmatpush1.xpose.msra.mxu0 0.0
    %3161 = vmatprep.subr.mxu0 0.0
    %3162 = vmatpush1.xpose.msra.mxu0 0.0
    %3163 = vmatprep.subr.mxu0 0.0
    %3164 = vmatpush1.xpose.msra.mxu0 0.0
    %3165 = vmatprep.subr.mxu0 0.0
    %3166 = vmatpush1.xpose.msra.mxu0 0.0
    %3167 = vmatprep.subr.mxu0 0.0
    %3168 = vmatpush1.xpose.msra.mxu0 0.0
    %3169 = vmatprep.subr.mxu0 0.0
    %3170 = vmatpush1.xpose.msra.mxu0 0.0
    %3171 = vmatprep.subr.mxu0 0.0
    %3172 = vmatpush1.xpose.msra.mxu0 0.0
    %3173 = vmatprep.subr.mxu0 0.0
    %3174 = vmatpush1.xpose.msra.mxu0 0.0
    %3175 = vmatprep.subr.mxu0 0.0
    %3176 = vmatpush1.xpose.msra.mxu0 0.0
    %3177 = vmatprep.subr.mxu0 0.0
    %3178 = vmatpush1.xpose.msra.mxu0 0.0
    %3179 = vmatprep.subr.mxu0 0.0
    %3180 = vmatpush1.xpose.msra.mxu0 0.0
    %3181 = vmatprep.subr.mxu0 0.0
    %3182 = vmatpush1.xpose.msra.mxu0 0.0
    %3183 = vmatprep.subr.mxu0 0.0
    %3184 = vmatpush1.xpose.msra.mxu0 0.0
    %3185 = vmatprep.subr.mxu0 0.0
    %3186 = vmatpush1.xpose.msra.mxu0 0.0
    %3187 = vmatprep.subr.mxu0 0.0
    %3188 = vmatpush1.xpose.msra.mxu0 0.0
    %3189 = vmatprep.subr.mxu0 0.0
    %3190 = vmatpush1.xpose.msra.mxu0 0.0
    %3191 = vmatprep.subr.mxu0 0.0
    %3192 = vmatpush1.xpose.msra.mxu0 0.0
    %3193 = vmatprep.subr.mxu0 0.0
    %3194 = vmatpush1.xpose.msra.mxu0 0.0
    %3195 = vmatprep.subr.mxu0 0.0
    %3196 = vmatpush1.xpose.msra.mxu0 0.0
    %3197 = vmatprep.subr.mxu0 0.0
    %3198 = vmatpush1.xpose.msra.mxu0 0.0
    %3199 = vmatprep.mubr.f32.mxu0 0.0
    %3200 = vmatmul.mubr.f32.gmra.mrb[0].mxu0 %v3131
    %v3201 = vpop.f32.mrb[0].mxu0
    %v3202 = vadd.f32 0.0, %v3201
    %v3203 = vpop.f32.mrb[0].mxu0
    %3204 = vdwg.mxu0
    %v3205 = vsel %vm239, %v3124, -inf
    %3206 = vmax.xlane.f32.xlu0 %v3205
    %v3207 = vpop.xlane.xlu0 %3206
    %v3208 = vsel %vm239, %v3202, -inf
    %3209 = vmax.xlane.f32.xlu0 %v3208
    %v3210 = vpop.xlane.xlu0 %3209
    %v3211 = vsub.f32 %v3124, %v3207
    %v3212 = vsub.f32 %v3202, %v3210
    %v3213 = vmul.f32 %v3211, 1.442695
    %v3214 = vpow.pop %v3213
    %v3215 = vmul.f32 %v3212, 1.442695
    %v3216 = vpow.pop %v3215
    %v3217 = vsel %vm239, %v3214, 0.0
    %3218 = vadd.xlane.f32.xlu0 %v3217
    %v3219 = vpop.xlane.xlu0 %3218
    %v3220 = vsel %vm239, %v3216, 0.0
    %3221 = vadd.xlane.f32.xlu0 %v3220
    %v3222 = vpop.xlane.xlu0 %3221
    %v3223 = vrcp.pop %v3219
    %v3224 = vrcp.pop %v3222
    %v3225 = vmul.f32 %v3214, %v3223
    %v3226 = vmul.f32 %v3216, %v3224
    %3227 = vrot.lane.b32.xlu0 %v2031, 40
    %v3228 = vpop.permute.xlu0 %3227
    %v3231 = vsel %vm239, %v3225, 0
    %3233 = vmatprep.subr.mxu0 0.0
    %3234 = vmatpush1.msra.mxu0 %v3228
    %3235 = vmatprep.subr.mxu0 0.0
    %3236 = vmatpush1.msra.mxu0 0.0
    %3237 = vmatprep.subr.mxu0 0.0
    %3238 = vmatpush1.msra.mxu0 0.0
    %3239 = vmatprep.subr.mxu0 0.0
    %3240 = vmatpush1.msra.mxu0 0.0
    %3241 = vmatprep.subr.mxu0 0.0
    %3242 = vmatpush1.msra.mxu0 0.0
    %3243 = vmatprep.subr.mxu0 0.0
    %3244 = vmatpush1.msra.mxu0 0.0
    %3245 = vmatprep.subr.mxu0 0.0
    %3246 = vmatpush1.msra.mxu0 0.0
    %3247 = vmatprep.subr.mxu0 0.0
    %3248 = vmatpush1.msra.mxu0 0.0
    %3249 = vmatprep.subr.mxu0 0.0
    %3250 = vmatpush1.msra.mxu0 0.0
    %3251 = vmatprep.subr.mxu0 0.0
    %3252 = vmatpush1.msra.mxu0 0.0
    %3253 = vmatprep.subr.mxu0 0.0
    %3254 = vmatpush1.msra.mxu0 0.0
    %3255 = vmatprep.subr.mxu0 0.0
    %3256 = vmatpush1.msra.mxu0 0.0
    %3257 = vmatprep.subr.mxu0 0.0
    %3258 = vmatpush1.msra.mxu0 0.0
    %3259 = vmatprep.subr.mxu0 0.0
    %3260 = vmatpush1.msra.mxu0 0.0
    %3261 = vmatprep.subr.mxu0 0.0
    %3262 = vmatpush1.msra.mxu0 0.0
    %3263 = vmatprep.subr.mxu0 0.0
    %3264 = vmatpush1.msra.mxu0 0.0
    %3265 = vmatprep.subr.mxu0 0.0
    %3266 = vmatpush1.msra.mxu0 0.0
    %3267 = vmatprep.subr.mxu0 0.0
    %3268 = vmatpush1.msra.mxu0 0.0
    %3269 = vmatprep.subr.mxu0 0.0
    %3270 = vmatpush1.msra.mxu0 0.0
    %3271 = vmatprep.subr.mxu0 0.0
    %3272 = vmatpush1.msra.mxu0 0.0
    %3273 = vmatprep.subr.mxu0 0.0
    %3274 = vmatpush1.msra.mxu0 0.0
    %3275 = vmatprep.subr.mxu0 0.0
    %3276 = vmatpush1.msra.mxu0 0.0
    %3277 = vmatprep.subr.mxu0 0.0
    %3278 = vmatpush1.msra.mxu0 0.0
    %3279 = vmatprep.subr.mxu0 0.0
    %3280 = vmatpush1.msra.mxu0 0.0
    %3281 = vmatprep.subr.mxu0 0.0
    %3282 = vmatpush1.msra.mxu0 0.0
    %3283 = vmatprep.subr.mxu0 0.0
    %3284 = vmatpush1.msra.mxu0 0.0
    %3285 = vmatprep.subr.mxu0 0.0
    %3286 = vmatpush1.msra.mxu0 0.0
    %3287 = vmatprep.subr.mxu0 0.0
    %3288 = vmatpush1.msra.mxu0 0.0
    %3289 = vmatprep.subr.mxu0 0.0
    %3290 = vmatpush1.msra.mxu0 0.0
    %3291 = vmatprep.subr.mxu0 0.0
    %3292 = vmatpush1.msra.mxu0 0.0
    %3293 = vmatprep.subr.mxu0 0.0
    %3294 = vmatpush1.msra.mxu0 0.0
    %3295 = vmatprep.subr.mxu0 0.0
    %3296 = vmatpush1.msra.mxu0 0.0
    %3297 = vmatprep.mubr.f32.mxu0 0.0
    %3298 = vmatmul.mubr.f32.gmra.mrb[0].mxu0 %v3231
    %v3299 = vpop.f32.mrb[0].mxu0
    %v3300 = vadd.f32 0.0, %v3299
    %v3301 = vpop.f32.mrb[0].mxu0
    %3302 = vdwg.mxu0
    %3303 = vrot.lane.b32.xlu0 %v2036, 40
    %v3304 = vpop.permute.xlu0 %3303
    %v3307 = vsel %vm239, %v3226, 0
    %3309 = vmatprep.subr.mxu0 0.0
    %3310 = vmatpush1.msra.mxu0 %v3304
    %3311 = vmatprep.subr.mxu0 0.0
    %3312 = vmatpush1.msra.mxu0 0.0
    %3313 = vmatprep.subr.mxu0 0.0
    %3314 = vmatpush1.msra.mxu0 0.0
    %3315 = vmatprep.subr.mxu0 0.0
    %3316 = vmatpush1.msra.mxu0 0.0
    %3317 = vmatprep.subr.mxu0 0.0
    %3318 = vmatpush1.msra.mxu0 0.0
    %3319 = vmatprep.subr.mxu0 0.0
    %3320 = vmatpush1.msra.mxu0 0.0
    %3321 = vmatprep.subr.mxu0 0.0
    %3322 = vmatpush1.msra.mxu0 0.0
    %3323 = vmatprep.subr.mxu0 0.0
    %3324 = vmatpush1.msra.mxu0 0.0
    %3325 = vmatprep.subr.mxu0 0.0
    %3326 = vmatpush1.msra.mxu0 0.0
    %3327 = vmatprep.subr.mxu0 0.0
    %3328 = vmatpush1.msra.mxu0 0.0
    %3329 = vmatprep.subr.mxu0 0.0
    %3330 = vmatpush1.msra.mxu0 0.0
    %3331 = vmatprep.subr.mxu0 0.0
    %3332 = vmatpush1.msra.mxu0 0.0
    %3333 = vmatprep.subr.mxu0 0.0
    %3334 = vmatpush1.msra.mxu0 0.0
    %3335 = vmatprep.subr.mxu0 0.0
    %3336 = vmatpush1.msra.mxu0 0.0
    %3337 = vmatprep.subr.mxu0 0.0
    %3338 = vmatpush1.msra.mxu0 0.0
    %3339 = vmatprep.subr.mxu0 0.0
    %3340 = vmatpush1.msra.mxu0 0.0
    %3341 = vmatprep.subr.mxu0 0.0
    %3342 = vmatpush1.msra.mxu0 0.0
    %3343 = vmatprep.subr.mxu0 0.0
    %3344 = vmatpush1.msra.mxu0 0.0
    %3345 = vmatprep.subr.mxu0 0.0
    %3346 = vmatpush1.msra.mxu0 0.0
    %3347 = vmatprep.subr.mxu0 0.0
    %3348 = vmatpush1.msra.mxu0 0.0
    %3349 = vmatprep.subr.mxu0 0.0
    %3350 = vmatpush1.msra.mxu0 0.0
    %3351 = vmatprep.subr.mxu0 0.0
    %3352 = vmatpush1.msra.mxu0 0.0
    %3353 = vmatprep.subr.mxu0 0.0
    %3354 = vmatpush1.msra.mxu0 0.0
    %3355 = vmatprep.subr.mxu0 0.0
    %3356 = vmatpush1.msra.mxu0 0.0
    %3357 = vmatprep.subr.mxu0 0.0
    %3358 = vmatpush1.msra.mxu0 0.0
    %3359 = vmatprep.subr.mxu0 0.0
    %3360 = vmatpush1.msra.mxu0 0.0
    %3361 = vmatprep.subr.mxu0 0.0
    %3362 = vmatpush1.msra.mxu0 0.0
    %3363 = vmatprep.subr.mxu0 0.0
    %3364 = vmatpush1.msra.mxu0 0.0
    %3365 = vmatprep.subr.mxu0 0.0
    %3366 = vmatpush1.msra.mxu0 0.0
    %3367 = vmatprep.subr.mxu0 0.0
    %3368 = vmatpush1.msra.mxu0 0.0
    %3369 = vmatprep.subr.mxu0 0.0
    %3370 = vmatpush1.msra.mxu0 0.0
    %3371 = vmatprep.subr.mxu0 0.0
    %3372 = vmatpush1.msra.mxu0 0.0
    %3373 = vmatprep.mubr.f32.mxu0 0.0
    %3374 = vmatmul.mubr.f32.gmra.mrb[0].mxu0 %v3307
    %v3375 = vpop.f32.mrb[0].mxu0
    %v3376 = vadd.f32 0.0, %v3375
    %v3377 = vpop.f32.mrb[0].mxu0
    %3378 = vdwg.mxu0
    %3381 = vrot.lane.b32.xlu0 %v3300, 24
    %v3382 = vpop.permute.xlu0 %3381
    %3383 = vrot.lane.b32.xlu0 %v3376, 24
    %v3384 = vpop.permute.xlu0 %3383
    %3387 = vst.msk [vmem:[#allocation2] sm:$0xff] %vm1587, %v3382
    %3388 = vst.msk [vmem:[#allocation2 + $0x8] sm:$0xff] %vm1587, %v3384
    %v3389 = vld [vmem:[#allocation2] sm:$0xff]
    %v3390 = vld [vmem:[#allocation2 + $0x8] sm:$0xff]
    %v3391 = vld [vmem:[#allocation6 + $0xb0] sm:$0xff]
    %v3392 = vld [vmem:[#allocation6 + $0xb8] sm:$0xff]
    %v3393 = vld [vmem:[#allocation6 + $0xc0] sm:$0xff]
    %v3394 = vld [vmem:[#allocation6 + $0xc8] sm:$0xff]
    %v3395 = vld [vmem:[#allocation8 + $0x11] sm:$0x1]
    %v3396 = vlaneseq
    %v3397 = vshrl.u32 %v3396, 7
    %v3398 = vsub.s32 0, %v3397
    %v3399 = vrot.slane %v3395, %v3398
    %v3401 = vsel %vm154, %v3389, 0
    %v3404 = vsel %vm154, %v3390, 0
    %3406 = vmatprep.subr.mxu0 0.0
    %3407 = vmatpush1.msra.mxu0 %v3391
    %3408 = vmatprep.subr.mxu0 0.0
    %3409 = vmatpush1.msra.mxu0 %v3392
    %3410 = vmatprep.subr.mxu0 0.0
    %3411 = vmatpush1.msra.mxu0 %v3393
    %3412 = vmatprep.subr.mxu0 0.0
    %3413 = vmatpush1.msra.mxu0 %v3394
    %3414 = vmatprep.subr.mxu0 0.0
    %3415 = vmatpush1.msra.mxu0 0.0
    %3416 = vmatprep.subr.mxu0 0.0
    %3417 = vmatpush1.msra.mxu0 0.0
    %3418 = vmatprep.subr.mxu0 0.0
    %3419 = vmatpush1.msra.mxu0 0.0
    %3420 = vmatprep.subr.mxu0 0.0
    %3421 = vmatpush1.msra.mxu0 0.0
    %3422 = vmatprep.subr.mxu0 0.0
    %3423 = vmatpush1.msra.mxu0 0.0
    %3424 = vmatprep.subr.mxu0 0.0
    %3425 = vmatpush1.msra.mxu0 0.0
    %3426 = vmatprep.subr.mxu0 0.0
    %3427 = vmatpush1.msra.mxu0 0.0
    %3428 = vmatprep.subr.mxu0 0.0
    %3429 = vmatpush1.msra.mxu0 0.0
    %3430 = vmatprep.subr.mxu0 0.0
    %3431 = vmatpush1.msra.mxu0 0.0
    %3432 = vmatprep.subr.mxu0 0.0
    %3433 = vmatpush1.msra.mxu0 0.0
    %3434 = vmatprep.subr.mxu0 0.0
    %3435 = vmatpush1.msra.mxu0 0.0
    %3436 = vmatprep.subr.mxu0 0.0
    %3437 = vmatpush1.msra.mxu0 0.0
    %3438 = vmatprep.subr.mxu0 0.0
    %3439 = vmatpush1.msra.mxu0 0.0
    %3440 = vmatprep.subr.mxu0 0.0
    %3441 = vmatpush1.msra.mxu0 0.0
    %3442 = vmatprep.subr.mxu0 0.0
    %3443 = vmatpush1.msra.mxu0 0.0
    %3444 = vmatprep.subr.mxu0 0.0
    %3445 = vmatpush1.msra.mxu0 0.0
    %3446 = vmatprep.subr.mxu0 0.0
    %3447 = vmatpush1.msra.mxu0 0.0
    %3448 = vmatprep.subr.mxu0 0.0
    %3449 = vmatpush1.msra.mxu0 0.0
    %3450 = vmatprep.subr.mxu0 0.0
    %3451 = vmatpush1.msra.mxu0 0.0
    %3452 = vmatprep.subr.mxu0 0.0
    %3453 = vmatpush1.msra.mxu0 0.0
    %3454 = vmatprep.subr.mxu0 0.0
    %3455 = vmatpush1.msra.mxu0 0.0
    %3456 = vmatprep.subr.mxu0 0.0
    %3457 = vmatpush1.msra.mxu0 0.0
    %3458 = vmatprep.subr.mxu0 0.0
    %3459 = vmatpush1.msra.mxu0 0.0
    %3460 = vmatprep.subr.mxu0 0.0
    %3461 = vmatpush1.msra.mxu0 0.0
    %3462 = vmatprep.subr.mxu0 0.0
    %3463 = vmatpush1.msra.mxu0 0.0
    %3464 = vmatprep.subr.mxu0 0.0
    %3465 = vmatpush1.msra.mxu0 0.0
    %3466 = vmatprep.subr.mxu0 0.0
    %3467 = vmatpush1.msra.mxu0 0.0
    %3468 = vmatprep.subr.mxu0 0.0
    %3469 = vmatpush1.msra.mxu0 0.0
    %3470 = vmatprep.mubr.f32.mxu0 0.0
    %3471 = vmatmul.mubr.f32.gmra.mrb[0].mxu0 %v3401
    %v3472 = vpop.f32.mrb[0].mxu0
    %v3473 = vadd.f32 %v3399, %v3472
    %v3474 = vpop.f32.mrb[0].mxu0
    %3475 = vmatprep.mubr.f32.mxu0 0.0
    %3476 = vmatmul.mubr.f32.gmra.mrb[0].mxu0 %v3404
    %v3477 = vpop.f32.mrb[0].mxu0
    %v3478 = vadd.f32 %v3399, %v3477
    %v3479 = vpop.f32.mrb[0].mxu0
    %3480 = vdwg.mxu0
    %v3481 = vadd.f32 %v1947, %v3473
    %v3482 = vadd.f32 %v1948, %v3478
    %v3483 = vld [vmem:[#allocation8 + $0x12] sm:$0x1]
    %v3484 = vld [vmem:[#allocation8 + $0x13] sm:$0x1]
    %v3485 = vsel %vm154, %v3481, 0.0
    %3486 = vadd.xlane.f32.xlu0 %v3485
    %v3487 = vpop.xlane.xlu0 %3486
    %v3488 = vsel %vm154, %v3482, 0.0
    %3489 = vadd.xlane.f32.xlu0 %v3488
    %v3490 = vpop.xlane.xlu0 %3489
    %v3491 = vmul.f32 %v3487, %v1692
    %v3492 = vmul.f32 %v3490, %v1692
    %v3493 = vsub.f32 %v3481, %v3491
    %v3494 = vsub.f32 %v3482, %v3492
    %v3495 = vmul.f32 %v3493, %v3493
    %v3496 = vmul.f32 %v3494, %v3494
    %v3497 = vsel %vm154, %v3495, 0.0
    %3498 = vadd.xlane.f32.xlu0 %v3497
    %v3499 = vpop.xlane.xlu0 %3498
    %v3500 = vsel %vm154, %v3496, 0.0
    %3501 = vadd.xlane.f32.xlu0 %v3500
    %v3502 = vpop.xlane.xlu0 %3501
    %v3503 = vmul.f32 %v3499, %v1692
    %v3504 = vmul.f32 %v3502, %v1692
    %v3505 = vadd.f32 %v3503, 1e-05
    %v3506 = vadd.f32 %v3504, 1e-05
    %v3507 = vrsqrt.pop %v3505
    %v3508 = vrsqrt.pop %v3506
    %v3509 = vmul.f32 %v3493, %v3507
    %v3510 = vmul.f32 %v3494, %v3508
    %v3511 = vlaneseq
    %v3512 = vshrl.u32 %v3511, 7
    %v3513 = vsub.s32 0, %v3512
    %v3514 = vrot.slane %v3483, %v3513
    %v3515 = vmul.f32 %v3509, %v3514
    %v3516 = vmul.f32 %v3510, %v3514
    %v3517 = vlaneseq
    %v3518 = vshrl.u32 %v3517, 7
    %v3519 = vsub.s32 0, %v3518
    %v3520 = vrot.slane %v3484, %v3519
    %v3521 = vadd.f32 %v3515, %v3520
    %v3522 = vadd.f32 %v3516, %v3520
    %v3523 = vld [vmem:[#allocation6 + $0xd0] sm:$0xff]
    %v3524 = vld [vmem:[#allocation6 + $0xd8] sm:$0xff]
    %v3525 = vld [vmem:[#allocation6 + $0xe0] sm:$0xff]
    %v3526 = vld [vmem:[#allocation6 + $0xe8] sm:$0xff]
    %v3527 = vld [vmem:[#allocation8 + $0x14] sm:$0x1]
    %v3528 = vlaneseq
    %v3529 = vshrl.u32 %v3528, 7
    %v3530 = vsub.s32 0, %v3529
    %v3531 = vrot.slane %v3527, %v3530
    %v3533 = vsel %vm154, %v3521, 0
    %v3536 = vsel %vm154, %v3522, 0
    %3538 = vmatprep.subr.mxu0 0.0
    %3539 = vmatpush1.msra.mxu0 %v3523
    %3540 = vmatprep.subr.mxu0 0.0
    %3541 = vmatpush1.msra.mxu0 %v3524
    %3542 = vmatprep.subr.mxu0 0.0
    %3543 = vmatpush1.msra.mxu0 %v3525
    %3544 = vmatprep.subr.mxu0 0.0
    %3545 = vmatpush1.msra.mxu0 %v3526
    %3546 = vmatprep.subr.mxu0 0.0
    %3547 = vmatpush1.msra.mxu0 0.0
    %3548 = vmatprep.subr.mxu0 0.0
    %3549 = vmatpush1.msra.mxu0 0.0
    %3550 = vmatprep.subr.mxu0 0.0
    %3551 = vmatpush1.msra.mxu0 0.0
    %3552 = vmatprep.subr.mxu0 0.0
    %3553 = vmatpush1.msra.mxu0 0.0
    %3554 = vmatprep.subr.mxu0 0.0
    %3555 = vmatpush1.msra.mxu0 0.0
    %3556 = vmatprep.subr.mxu0 0.0
    %3557 = vmatpush1.msra.mxu0 0.0
    %3558 = vmatprep.subr.mxu0 0.0
    %3559 = vmatpush1.msra.mxu0 0.0
    %3560 = vmatprep.subr.mxu0 0.0
    %3561 = vmatpush1.msra.mxu0 0.0
    %3562 = vmatprep.subr.mxu0 0.0
    %3563 = vmatpush1.msra.mxu0 0.0
    %3564 = vmatprep.subr.mxu0 0.0
    %3565 = vmatpush1.msra.mxu0 0.0
    %3566 = vmatprep.subr.mxu0 0.0
    %3567 = vmatpush1.msra.mxu0 0.0
    %3568 = vmatprep.subr.mxu0 0.0
    %3569 = vmatpush1.msra.mxu0 0.0
    %3570 = vmatprep.subr.mxu0 0.0
    %3571 = vmatpush1.msra.mxu0 0.0
    %3572 = vmatprep.subr.mxu0 0.0
    %3573 = vmatpush1.msra.mxu0 0.0
    %3574 = vmatprep.subr.mxu0 0.0
    %3575 = vmatpush1.msra.mxu0 0.0
    %3576 = vmatprep.subr.mxu0 0.0
    %3577 = vmatpush1.msra.mxu0 0.0
    %3578 = vmatprep.subr.mxu0 0.0
    %3579 = vmatpush1.msra.mxu0 0.0
    %3580 = vmatprep.subr.mxu0 0.0
    %3581 = vmatpush1.msra.mxu0 0.0
    %3582 = vmatprep.subr.mxu0 0.0
    %3583 = vmatpush1.msra.mxu0 0.0
    %3584 = vmatprep.subr.mxu0 0.0
    %3585 = vmatpush1.msra.mxu0 0.0
    %3586 = vmatprep.subr.mxu0 0.0
    %3587 = vmatpush1.msra.mxu0 0.0
    %3588 = vmatprep.subr.mxu0 0.0
    %3589 = vmatpush1.msra.mxu0 0.0
    %3590 = vmatprep.subr.mxu0 0.0
    %3591 = vmatpush1.msra.mxu0 0.0
    %3592 = vmatprep.subr.mxu0 0.0
    %3593 = vmatpush1.msra.mxu0 0.0
    %3594 = vmatprep.subr.mxu0 0.0
    %3595 = vmatpush1.msra.mxu0 0.0
    %3596 = vmatprep.subr.mxu0 0.0
    %3597 = vmatpush1.msra.mxu0 0.0
    %3598 = vmatprep.subr.mxu0 0.0
    %3599 = vmatpush1.msra.mxu0 0.0
    %3600 = vmatprep.subr.mxu0 0.0
    %3601 = vmatpush1.msra.mxu0 0.0
    %3602 = vmatprep.mubr.f32.mxu0 0.0
    %3603 = vmatmul.mubr.f32.gmra.mrb[0].mxu0 %v3533
    %v3604 = vpop.f32.mrb[0].mxu0
    %v3605 = vadd.f32 %v3531, %v3604
    %v3606 = vpop.f32.mrb[0].mxu0
    %3607 = vmatprep.mubr.f32.mxu0 0.0
    %3608 = vmatmul.mubr.f32.gmra.mrb[0].mxu0 %v3536
    %v3609 = vpop.f32.mrb[0].mxu0
    %v3610 = vadd.f32 %v3531, %v3609
    %v3611 = vpop.f32.mrb[0].mxu0
    %3612 = vdwg.mxu0
    %v3613 = vmax.f32 %v3605, 0.0
    %v3614 = vmax.f32 %v3610, 0.0
    %v3615 = vld [vmem:[#allocation6 + $0xf0] sm:$0xff]
    %v3616 = vld [vmem:[#allocation6 + $0xf8] sm:$0xff]
    %v3617 = vld [vmem:[#allocation6 + $0x100] sm:$0xff]
    %v3618 = vld [vmem:[#allocation6 + $0x108] sm:$0xff]
    %v3619 = vld [vmem:[#allocation8 + $0x15] sm:$0x1]
    %v3620 = vlaneseq
    %v3621 = vshrl.u32 %v3620, 7
    %v3622 = vsub.s32 0, %v3621
    %v3623 = vrot.slane %v3619, %v3622
    %v3625 = vsel %vm154, %v3613, 0
    %v3628 = vsel %vm154, %v3614, 0
    %3630 = vmatprep.subr.mxu0 0.0
    %3631 = vmatpush1.msra.mxu0 %v3615
    %3632 = vmatprep.subr.mxu0 0.0
    %3633 = vmatpush1.msra.mxu0 %v3616
    %3634 = vmatprep.subr.mxu0 0.0
    %3635 = vmatpush1.msra.mxu0 %v3617
    %3636 = vmatprep.subr.mxu0 0.0
    %3637 = vmatpush1.msra.mxu0 %v3618
    %3638 = vmatprep.subr.mxu0 0.0
    %3639 = vmatpush1.msra.mxu0 0.0
    %3640 = vmatprep.subr.mxu0 0.0
    %3641 = vmatpush1.msra.mxu0 0.0
    %3642 = vmatprep.subr.mxu0 0.0
    %3643 = vmatpush1.msra.mxu0 0.0
    %3644 = vmatprep.subr.mxu0 0.0
    %3645 = vmatpush1.msra.mxu0 0.0
    %3646 = vmatprep.subr.mxu0 0.0
    %3647 = vmatpush1.msra.mxu0 0.0
    %3648 = vmatprep.subr.mxu0 0.0
    %3649 = vmatpush1.msra.mxu0 0.0
    %3650 = vmatprep.subr.mxu0 0.0
    %3651 = vmatpush1.msra.mxu0 0.0
    %3652 = vmatprep.subr.mxu0 0.0
    %3653 = vmatpush1.msra.mxu0 0.0
    %3654 = vmatprep.subr.mxu0 0.0
    %3655 = vmatpush1.msra.mxu0 0.0
    %3656 = vmatprep.subr.mxu0 0.0
    %3657 = vmatpush1.msra.mxu0 0.0
    %3658 = vmatprep.subr.mxu0 0.0
    %3659 = vmatpush1.msra.mxu0 0.0
    %3660 = vmatprep.subr.mxu0 0.0
    %3661 = vmatpush1.msra.mxu0 0.0
    %3662 = vmatprep.subr.mxu0 0.0
    %3663 = vmatpush1.msra.mxu0 0.0
    %3664 = vmatprep.subr.mxu0 0.0
    %3665 = vmatpush1.msra.mxu0 0.0
    %3666 = vmatprep.subr.mxu0 0.0
    %3667 = vmatpush1.msra.mxu0 0.0
    %3668 = vmatprep.subr.mxu0 0.0
    %3669 = vmatpush1.msra.mxu0 0.0
    %3670 = vmatprep.subr.mxu0 0.0
    %3671 = vmatpush1.msra.mxu0 0.0
    %3672 = vmatprep.subr.mxu0 0.0
    %3673 = vmatpush1.msra.mxu0 0.0
    %3674 = vmatprep.subr.mxu0 0.0
    %3675 = vmatpush1.msra.mxu0 0.0
    %3676 = vmatprep.subr.mxu0 0.0
    %3677 = vmatpush1.msra.mxu0 0.0
    %3678 = vmatprep.subr.mxu0 0.0
    %3679 = vmatpush1.msra.mxu0 0.0
    %3680 = vmatprep.subr.mxu0 0.0
    %3681 = vmatpush1.msra.mxu0 0.0
    %3682 = vmatprep.subr.mxu0 0.0
    %3683 = vmatpush1.msra.mxu0 0.0
    %3684 = vmatprep.subr.mxu0 0.0
    %3685 = vmatpush1.msra.mxu0 0.0
    %3686 = vmatprep.subr.mxu0 0.0
    %3687 = vmatpush1.msra.mxu0 0.0
    %3688 = vmatprep.subr.mxu0 0.0
    %3689 = vmatpush1.msra.mxu0 0.0
    %3690 = vmatprep.subr.mxu0 0.0
    %3691 = vmatpush1.msra.mxu0 0.0
    %3692 = vmatprep.subr.mxu0 0.0
    %3693 = vmatpush1.msra.mxu0 0.0
    %3694 = vmatprep.mubr.f32.mxu0 0.0
    %3695 = vmatmul.mubr.f32.gmra.mrb[0].mxu0 %v3625
    %v3696 = vpop.f32.mrb[0].mxu0
    %v3697 = vadd.f32 %v3623, %v3696
    %v3698 = vpop.f32.mrb[0].mxu0
    %3699 = vmatprep.mubr.f32.mxu0 0.0
    %3700 = vmatmul.mubr.f32.gmra.mrb[0].mxu0 %v3628
    %v3701 = vpop.f32.mrb[0].mxu0
    %v3702 = vadd.f32 %v3623, %v3701
    %v3703 = vpop.f32.mrb[0].mxu0
    %3704 = vdwg.mxu0
    %v3705 = vadd.f32 %v3521, %v3697
    %v3706 = vadd.f32 %v3522, %v3702
    %v3707 = vld [vmem:[#allocation8 + $0x16] sm:$0x1]
    %v3708 = vld [vmem:[#allocation8 + $0x17] sm:$0x1]
    %v3709 = vsel %vm154, %v3705, 0.0
    %3710 = vadd.xlane.f32.xlu0 %v3709
    %v3711 = vpop.xlane.xlu0 %3710
    %v3712 = vsel %vm154, %v3706, 0.0
    %3713 = vadd.xlane.f32.xlu0 %v3712
    %v3714 = vpop.xlane.xlu0 %3713
    %v3715 = vmul.f32 %v3711, %v1692
    %v3716 = vmul.f32 %v3714, %v1692
    %v3717 = vsub.f32 %v3705, %v3715
    %v3718 = vsub.f32 %v3706, %v3716
    %v3719 = vmul.f32 %v3717, %v3717
    %v3720 = vmul.f32 %v3718, %v3718
    %v3721 = vsel %vm154, %v3719, 0.0
    %3722 = vadd.xlane.f32.xlu0 %v3721
    %v3723 = vpop.xlane.xlu0 %3722
    %v3724 = vsel %vm154, %v3720, 0.0
    %3725 = vadd.xlane.f32.xlu0 %v3724
    %v3726 = vpop.xlane.xlu0 %3725
    %v3727 = vmul.f32 %v3723, %v1692
    %v3728 = vmul.f32 %v3726, %v1692
    %v3729 = vadd.f32 %v3727, 1e-05
    %v3730 = vadd.f32 %v3728, 1e-05
    %v3731 = vrsqrt.pop %v3729
    %v3732 = vrsqrt.pop %v3730
    %v3733 = vmul.f32 %v3717, %v3731
    %v3734 = vmul.f32 %v3718, %v3732
    %v3735 = vlaneseq
    %v3736 = vshrl.u32 %v3735, 7
    %v3737 = vsub.s32 0, %v3736
    %v3738 = vrot.slane %v3707, %v3737
    %v3739 = vmul.f32 %v3733, %v3738
    %v3740 = vmul.f32 %v3734, %v3738
    %v3741 = vlaneseq
    %v3742 = vshrl.u32 %v3741, 7
    %v3743 = vsub.s32 0, %v3742
    %v3744 = vrot.slane %v3708, %v3743
    %v3745 = vadd.f32 %v3739, %v3744
    %v3746 = vadd.f32 %v3740, %v3744
    %vm3747 = vcmask 261127
    %3748 = vst.msk [vmem:[#allocation9 - $0x7] sm:$0x80] %vm3747, %v3745
    %3749 = vst.msk [vmem:[#allocation9 - $0x6] sm:$0x80] %vm3747, %v3746
    // Predicated region
    $region26: #{tpu_custom_call.1} parent=1 // pred_check
      _
    $region27: #{tpu_custom_call.1} parent=1 // pred_check_branch
      %3751 = sbr.rel (0) target = $region29
    $region28: #{tpu_custom_call.1} parent=1 // pred_region
      %s3753 = ssub.s32 32, 32
      %3754 = vsyncadd [#allocation5], %s3753
      %s3756 = sshll.u32 [#allocation9], 4
      %s3757 = int_to_ptr.vmem [resolvable:$true] %s3756
      %3759 = dma.vmem_to_hbm [thread:$0]  %s3757, 32, %s3, [#allocation5]
    $region29: #{tpu_custom_call.1} parent=1 // pred_fallthru
      _
    // Predicated region
    $region30: #{tpu_custom_call.1} parent=1 // pred_check
      _
    $region31: #{tpu_custom_call.1} parent=1 // pred_check_branch
      %3761 = sbr.rel (0) target = $region33
    $region32: #{tpu_custom_call.1} parent=1 // pred_region
      %3762 = dma.done [#allocation5], 32
    $region33: #{tpu_custom_call.1} parent=1 // pred_fallthru
      _
    %3763 = vsyncpa [#allocation4], 1
    %3764 = vsyncpa [#allocation7], 1
    %3765 = vsyncpa [#allocation5], 1

</llo_original>
